<compile_context>
chip_gen: v6e
topology: v6e:2x2x1
jax: 0.10.0
libtpu: 0.0.40
codegen_flags: <defaults>
</compile_context>

<pallas_src>
import functools

import jax
import jax.numpy as jnp
from jax.experimental import pallas as pl
from jax.experimental.pallas import tpu as pltpu


def _lstm_kernel(x_ref, wih_ref, whh_ref, b_ref, wout_ref, bout_ref,
                 out_ref, proj_ref, *, seq_len, hidden_pad, batch_tile):
    T, Hp, Bt = seq_len, hidden_pad, batch_tile

    # ---- hoisted input projection for ALL timesteps:
    # one (Bt*T, I) @ (I, 4Hp) matmul, streamed straight into VMEM scratch so
    # only ~10 vregs stay live across the serial recurrence.
    proj_ref[...] = (
        jnp.dot(x_ref[...], wih_ref[...], preferred_element_type=jnp.float32)
        + b_ref[...]
    ).reshape(Bt, T, 4 * Hp)

    # ---- sequential LSTM recurrence; h/c carried as values (vregs).
    h = jnp.zeros((Bt, Hp), jnp.float32)
    c = jnp.zeros((Bt, Hp), jnp.float32)
    for t in range(T):                       # static unroll (T is compile-time)
        gates = proj_ref[:, t, :] + jnp.dot(
            h, whh_ref[...], preferred_element_type=jnp.float32)
        # Gate blocks are pre-permuted to [i, f, o, g]; all slices are
        # 128-lane aligned thanks to the per-gate Hp padding.
        sig = jax.nn.sigmoid(gates[:, :3 * Hp])   # i | f | o in one EUP slab
        i_g = sig[:, 0 * Hp:1 * Hp]
        f_g = sig[:, 1 * Hp:2 * Hp]
        o_g = sig[:, 2 * Hp:3 * Hp]
        g_g = jnp.tanh(gates[:, 3 * Hp:4 * Hp])
        c = f_g * c + i_g * g_g
        h = o_g * jnp.tanh(c)

    # ---- lane-dense output head + sigmoid on the last hidden state.
    logits = jnp.dot(h, wout_ref[...],
                     preferred_element_type=jnp.float32) + bout_ref[...]
    out_ref[...] = jax.nn.sigmoid(logits).astype(out_ref.dtype)


# Destination gate order [i, f, o, g]; source (PyTorch) order is [i, f, g, o].
_GATE_SRC_FOR_DST = (0, 1, 3, 2)


def _pad_gate_cols(w, H, Hp):
    """(rows, 4H) with gate cols [i|f|g|o] -> (rows, 4Hp) with [i|f|o|g],
    each gate block zero-padded to Hp lanes."""
    rows = w.shape[0]
    out = jnp.zeros((rows, 4 * Hp), w.dtype)
    for dst, src in enumerate(_GATE_SRC_FOR_DST):
        out = out.at[:, dst * Hp:dst * Hp + H].set(w[:, src * H:(src + 1) * H])
    return out


def technical_indicator_lstm(x, params, *, batch_tile=None):
    """x: (B, T, I) batch_first, float32. Returns (B, O) signals in (0, 1).

    batch_tile: leave None (grid=(1,)) on v5e/v6e — the grid is a serial loop
    on one TensorCore, so splitting the batch only doubles the serial
    recurrence.  On v7x, pass e.g. batch_tile=B//2 to give the second
    TensorCore an independent chain (verify sharding in xprof; switch the
    dimension_semantics below to pltpu.CORE_PARALLEL if plain "parallel"
    does not land on both cores).
    """
    B, T, I = x.shape
    H = params["w_hh"].shape[1]
    O = params["w_out"].shape[0]
    Hp = ((H + 127) // 128) * 128          # lane-align every gate block
    Op = ((O + 127) // 128) * 128          # lane-dense output head

    # --- weight prep (weight-sized, one-shot; zero padding is exact) ---
    wih_p = _pad_gate_cols(params["w_ih"].T, H, Hp)                       # (I, 4Hp)
    whh_p = jnp.zeros((Hp, 4 * Hp), jnp.float32).at[:H].set(
        _pad_gate_cols(params["w_hh"].T, H, Hp))                          # (Hp, 4Hp)
    bias_p = _pad_gate_cols(
        (params["b_ih"] + params["b_hh"]).reshape(1, -1), H, Hp)          # (1, 4Hp)
    wout_p = jnp.zeros((Hp, Op), jnp.float32).at[:H, :O].set(
        params["w_out"].T)                                                # (Hp, Op)
    bout_p = jnp.zeros((1, Op), jnp.float32).at[:, :O].set(
        params["b_out"].reshape(1, O))                                    # (1, Op)

    # --- batch tiling (off by default; v7x-only knob) ---
    if batch_tile is None:
        batch_tile = B
    assert B % batch_tile == 0, "batch_tile must divide B"
    assert batch_tile % 8 == 0 or batch_tile == B, \
        "batch_tile must be a multiple of 8 (or equal B) for (8,128) tiling"
    grid = (B // batch_tile,)

    # Free metadata reshape in HBM; kernel consumes a clean 2-D (Bt*T, I) tile.
    x2d = x.reshape(B * T, I)

    kernel = functools.partial(
        _lstm_kernel, seq_len=T, hidden_pad=Hp, batch_tile=batch_tile)

    out = pl.pallas_call(
        kernel,
        out_shape=jax.ShapeDtypeStruct((B, Op), jnp.float32),
        grid_spec=pltpu.PrefetchScalarGridSpec(
            num_scalar_prefetch=0,
            grid=grid,
            in_specs=[
                # batch-major x rows: one (batch_tile*T, I) block per grid step.
                pl.BlockSpec((batch_tile * T, I), lambda b: (b, 0)),
                # time-invariant weights / biases: constant index maps.
                pl.BlockSpec((I, 4 * Hp), lambda b: (0, 0)),
                pl.BlockSpec((Hp, 4 * Hp), lambda b: (0, 0)),
                pl.BlockSpec((1, 4 * Hp), lambda b: (0, 0)),
                pl.BlockSpec((Hp, Op), lambda b: (0, 0)),
                pl.BlockSpec((1, Op), lambda b: (0, 0)),
            ],
            out_specs=pl.BlockSpec((batch_tile, Op), lambda b: (b, 0)),
            # Staged all-timestep projection (keeps vreg pressure low).
            scratch_shapes=[pltpu.VMEM((batch_tile, T, 4 * Hp), jnp.float32)],
        ),
        compiler_params=pltpu.CompilerParams(
            # Only meaningful when the batch is actually split (v7x); a single
            # grid step needs no semantics hint.
            dimension_semantics=(("parallel",) if grid[0] > 1
                                 else ("arbitrary",)),
        ),
    )(x2d, wih_p, whh_p, bias_p, wout_p, bout_p)

    return out[:, :O]


def init_params(key, input_size, hidden_size, output_size):
    """Deterministic init mirroring PyTorch shapes (uniform +-1/sqrt(H))."""
    k1, k2, k3, k4, k5, k6 = jax.random.split(key, 6)
    bound = 1.0 / jnp.sqrt(hidden_size)
    u = lambda k, shape: jax.random.uniform(
        k, shape, jnp.float32, minval=-bound, maxval=bound)
    return {
        "w_ih": u(k1, (4 * hidden_size, input_size)),
        "w_hh": u(k2, (4 * hidden_size, hidden_size)),
        "b_ih": u(k3, (4 * hidden_size,)),
        "b_hh": u(k4, (4 * hidden_size,)),
        "w_out": u(k5, (output_size, hidden_size)),
        "b_out": u(k6, (output_size,)),
    }


def reference_forward(x, params):
    """Pure-JAX reference of the PyTorch forward (original i,f,g,o order)."""
    B, T, I = x.shape
    H = params["w_hh"].shape[1]
    h = jnp.zeros((B, H), jnp.float32)
    c = jnp.zeros((B, H), jnp.float32)
    wih_t = params["w_ih"].T
    whh_t = params["w_hh"].T
    bias = params["b_ih"] + params["b_hh"]
    for t in range(T):
        gates = x[:, t, :] @ wih_t + h @ whh_t + bias
        i_g = jax.nn.sigmoid(gates[:, 0 * H:1 * H])
        f_g = jax.nn.sigmoid(gates[:, 1 * H:2 * H])
        g_g = jnp.tanh(gates[:, 2 * H:3 * H])
        o_g = jax.nn.sigmoid(gates[:, 3 * H:4 * H])
        c = f_g * c + i_g * g_g
        h = o_g * jnp.tanh(c)
    return jax.nn.sigmoid(h @ params["w_out"].T + params["b_out"])


if __name__ == "__main__":
    # Module defaults: input_size=20, hidden_size=64, output_size=5.
    B, T, I, H, O = 16, 8, 20, 64, 5

    key = jax.random.PRNGKey(0)
    kx, kp = jax.random.split(key)
    x = jax.random.normal(kx, (B, T, I), jnp.float32)
    params = init_params(kp, I, H, O)
    ref = reference_forward(x, params)

    # Default (single grid step) — the right configuration for v5e/v6e.
    fwd = jax.jit(technical_indicator_lstm)
    out = jax.block_until_ready(fwd(x, params))
    assert out.shape == (B, O)
    assert jnp.allclose(out, ref, atol=1e-5, rtol=1e-5), "mismatch (grid=1)"

    # Batch-tiled path (v7x 2-TC knob) — exercised for correctness here.
    fwd2 = jax.jit(functools.partial(technical_indicator_lstm, batch_tile=8))
    out2 = jax.block_until_ready(fwd2(x, params))
    assert jnp.allclose(out2, ref, atol=1e-5, rtol=1e-5), "mismatch (grid=2)"

    print("KERNEL_OK")
</pallas_src>

<mosaic_0001>
module attributes {stable_mosaic.version = 11 : i64} {
  func.func @_lstm_kernel(%arg0: i32, %arg1: memref<128x20xf32, #tpu.memory_space<vmem>>, %arg2: memref<20x512xf32, #tpu.memory_space<vmem>>, %arg3: memref<128x512xf32, #tpu.memory_space<vmem>>, %arg4: memref<1x512xf32, #tpu.memory_space<vmem>>, %arg5: memref<128x128xf32, #tpu.memory_space<vmem>>, %arg6: memref<1x128xf32, #tpu.memory_space<vmem>>, %arg7: memref<16x128xf32, #tpu.memory_space<vmem>>, %arg8: memref<16x8x512xf32, #tpu.memory_space<vmem>>) attributes {dimension_semantics = [#tpu.dimension_semantics<arbitrary>], iteration_bounds = array<i64: 1>, scalar_prefetch = 0 : i64, scratch_operands = 1 : i64, tpu.core_type = #tpu.core_type<tc>, window_params = [{transform_indices = @transform_0, window_bounds = array<i64: 128, 20>}, {pipeline_mode = #tpu.pipeline_mode<synchronous>, transform_indices = @transform_1, window_bounds = array<i64: 20, 512>}, {pipeline_mode = #tpu.pipeline_mode<synchronous>, transform_indices = @transform_2, window_bounds = array<i64: 128, 512>}, {pipeline_mode = #tpu.pipeline_mode<synchronous>, transform_indices = @transform_3, window_bounds = array<i64: 1, 512>}, {pipeline_mode = #tpu.pipeline_mode<synchronous>, transform_indices = @transform_4, window_bounds = array<i64: 128, 128>}, {pipeline_mode = #tpu.pipeline_mode<synchronous>, transform_indices = @transform_5, window_bounds = array<i64: 1, 128>}, {transform_indices = @transform_6, window_bounds = array<i64: 16, 128>}]} {
    %c0 = arith.constant 0 : index
    %c0_0 = arith.constant 0 : index
    %0 = vector.load %arg1[%c0, %c0_0] : memref<128x20xf32, #tpu.memory_space<vmem>>, vector<128x20xf32>
    %c0_1 = arith.constant 0 : index
    %c0_2 = arith.constant 0 : index
    %1 = vector.load %arg2[%c0_1, %c0_2] : memref<20x512xf32, #tpu.memory_space<vmem>>, vector<20x512xf32>
    %cst = arith.constant dense<0.000000e+00> : vector<128x512xf32>
    %2 = tpu.matmul %0, %1, %cst {dimension_numbers = #tpu.dot_dimension_numbers<[1], [0], [0], [1], [0, 0, 1, 1], [], []>} : vector<128x20xf32>, vector<20x512xf32>, vector<128x512xf32> -> vector<128x512xf32>
    %c0_3 = arith.constant 0 : index
    %c0_4 = arith.constant 0 : index
    %3 = vector.load %arg4[%c0_3, %c0_4] : memref<1x512xf32, #tpu.memory_space<vmem>>, vector<1x512xf32>
    %4 = vector.broadcast %3 : vector<1x512xf32> to vector<128x512xf32>
    %5 = arith.addf %2, %4 : vector<128x512xf32>
    %6 = vector.shape_cast %5 : vector<128x512xf32> to vector<16x8x512xf32>
    %c0_5 = arith.constant 0 : index
    %c0_6 = arith.constant 0 : index
    %c0_7 = arith.constant 0 : index
    %7 = vector.load %arg8[%c0_5, %c0_6, %c0_7] : memref<16x8x512xf32, #tpu.memory_space<vmem>>, vector<16x8x512xf32>
    tpu.vector_store %arg8[%c0_5, %c0_6, %c0_7], %6 {strides = array<i32>} : memref<16x8x512xf32, #tpu.memory_space<vmem>>, vector<16x8x512xf32>,
    %cst_8 = arith.constant 0.000000e+00 : f32
    %8 = vector.broadcast %cst_8 : f32 to vector<16x128xf32>
    %cst_9 = arith.constant 0.000000e+00 : f32
    %9 = vector.broadcast %cst_9 : f32 to vector<16x128xf32>
    %c0_10 = arith.constant 0 : index
    %c0_11 = arith.constant 0 : index
    %c0_12 = arith.constant 0 : index
    %10 = vector.load %arg8[%c0_10, %c0_11, %c0_12] : memref<16x8x512xf32, #tpu.memory_space<vmem>>, vector<16x1x512xf32>
    %11 = vector.shape_cast %10 : vector<16x1x512xf32> to vector<16x512xf32>
    %c0_13 = arith.constant 0 : index
    %c0_14 = arith.constant 0 : index
    %12 = vector.load %arg3[%c0_13, %c0_14] : memref<128x512xf32, #tpu.memory_space<vmem>>, vector<128x512xf32>
    %cst_15 = arith.constant dense<0.000000e+00> : vector<16x512xf32>
    %13 = tpu.matmul %8, %12, %cst_15 {dimension_numbers = #tpu.dot_dimension_numbers<[1], [0], [0], [1], [0, 0, 1, 1], [], []>} : vector<16x128xf32>, vector<128x512xf32>, vector<16x512xf32> -> vector<16x512xf32>
    %14 = arith.addf %11, %13 : vector<16x512xf32>
    %15 = vector.extract_strided_slice %14 {offsets = [0, 0], sizes = [16, 384], strides = [1, 1]} : vector<16x512xf32> to vector<16x384xf32>
    %16 = arith.negf %15 : vector<16x384xf32>
    %17 = math.exp %16 : vector<16x384xf32>
    %cst_16 = arith.constant 1.000000e+00 : f32
    %18 = vector.broadcast %cst_16 : f32 to vector<16x384xf32>
    %19 = arith.addf %18, %17 : vector<16x384xf32>
    %20 = arith.divf %18, %19 : vector<16x384xf32>
    %21 = vector.extract_strided_slice %20 {offsets = [0, 0], sizes = [16, 128], strides = [1, 1]} : vector<16x384xf32> to vector<16x128xf32>
    %22 = vector.extract_strided_slice %20 {offsets = [0, 128], sizes = [16, 128], strides = [1, 1]} : vector<16x384xf32> to vector<16x128xf32>
    %23 = vector.extract_strided_slice %20 {offsets = [0, 256], sizes = [16, 128], strides = [1, 1]} : vector<16x384xf32> to vector<16x128xf32>
    %24 = vector.extract_strided_slice %14 {offsets = [0, 384], sizes = [16, 128], strides = [1, 1]} : vector<16x512xf32> to vector<16x128xf32>
    %25 = math.tanh %24 : vector<16x128xf32>
    %26 = arith.mulf %22, %9 : vector<16x128xf32>
    %27 = arith.mulf %21, %25 : vector<16x128xf32>
    %28 = arith.addf %26, %27 : vector<16x128xf32>
    %29 = math.tanh %28 : vector<16x128xf32>
    %30 = arith.mulf %23, %29 : vector<16x128xf32>
    %c0_17 = arith.constant 0 : index
    %c1 = arith.constant 1 : index
    %c0_18 = arith.constant 0 : index
    %31 = vector.load %arg8[%c0_17, %c1, %c0_18] : memref<16x8x512xf32, #tpu.memory_space<vmem>>, vector<16x1x512xf32>
    %32 = vector.shape_cast %31 : vector<16x1x512xf32> to vector<16x512xf32>
    %c0_19 = arith.constant 0 : index
    %c0_20 = arith.constant 0 : index
    %33 = vector.load %arg3[%c0_19, %c0_20] : memref<128x512xf32, #tpu.memory_space<vmem>>, vector<128x512xf32>
    %cst_21 = arith.constant dense<0.000000e+00> : vector<16x512xf32>
    %34 = tpu.matmul %30, %33, %cst_21 {dimension_numbers = #tpu.dot_dimension_numbers<[1], [0], [0], [1], [0, 0, 1, 1], [], []>} : vector<16x128xf32>, vector<128x512xf32>, vector<16x512xf32> -> vector<16x512xf32>
    %35 = arith.addf %32, %34 : vector<16x512xf32>
    %36 = vector.extract_strided_slice %35 {offsets = [0, 0], sizes = [16, 384], strides = [1, 1]} : vector<16x512xf32> to vector<16x384xf32>
    %37 = arith.negf %36 : vector<16x384xf32>
    %38 = math.exp %37 : vector<16x384xf32>
    %cst_22 = arith.constant 1.000000e+00 : f32
    %39 = vector.broadcast %cst_22 : f32 to vector<16x384xf32>
    %40 = arith.addf %39, %38 : vector<16x384xf32>
    %41 = arith.divf %39, %40 : vector<16x384xf32>
    %42 = vector.extract_strided_slice %41 {offsets = [0, 0], sizes = [16, 128], strides = [1, 1]} : vector<16x384xf32> to vector<16x128xf32>
    %43 = vector.extract_strided_slice %41 {offsets = [0, 128], sizes = [16, 128], strides = [1, 1]} : vector<16x384xf32> to vector<16x128xf32>
    %44 = vector.extract_strided_slice %41 {offsets = [0, 256], sizes = [16, 128], strides = [1, 1]} : vector<16x384xf32> to vector<16x128xf32>
    %45 = vector.extract_strided_slice %35 {offsets = [0, 384], sizes = [16, 128], strides = [1, 1]} : vector<16x512xf32> to vector<16x128xf32>
    %46 = math.tanh %45 : vector<16x128xf32>
    %47 = arith.mulf %43, %28 : vector<16x128xf32>
    %48 = arith.mulf %42, %46 : vector<16x128xf32>
    %49 = arith.addf %47, %48 : vector<16x128xf32>
    %50 = math.tanh %49 : vector<16x128xf32>
    %51 = arith.mulf %44, %50 : vector<16x128xf32>
    %c0_23 = arith.constant 0 : index
    %c2 = arith.constant 2 : index
    %c0_24 = arith.constant 0 : index
    %52 = vector.load %arg8[%c0_23, %c2, %c0_24] : memref<16x8x512xf32, #tpu.memory_space<vmem>>, vector<16x1x512xf32>
    %53 = vector.shape_cast %52 : vector<16x1x512xf32> to vector<16x512xf32>
    %c0_25 = arith.constant 0 : index
    %c0_26 = arith.constant 0 : index
    %54 = vector.load %arg3[%c0_25, %c0_26] : memref<128x512xf32, #tpu.memory_space<vmem>>, vector<128x512xf32>
    %cst_27 = arith.constant dense<0.000000e+00> : vector<16x512xf32>
    %55 = tpu.matmul %51, %54, %cst_27 {dimension_numbers = #tpu.dot_dimension_numbers<[1], [0], [0], [1], [0, 0, 1, 1], [], []>} : vector<16x128xf32>, vector<128x512xf32>, vector<16x512xf32> -> vector<16x512xf32>
    %56 = arith.addf %53, %55 : vector<16x512xf32>
    %57 = vector.extract_strided_slice %56 {offsets = [0, 0], sizes = [16, 384], strides = [1, 1]} : vector<16x512xf32> to vector<16x384xf32>
    %58 = arith.negf %57 : vector<16x384xf32>
    %59 = math.exp %58 : vector<16x384xf32>
    %cst_28 = arith.constant 1.000000e+00 : f32
    %60 = vector.broadcast %cst_28 : f32 to vector<16x384xf32>
    %61 = arith.addf %60, %59 : vector<16x384xf32>
    %62 = arith.divf %60, %61 : vector<16x384xf32>
    %63 = vector.extract_strided_slice %62 {offsets = [0, 0], sizes = [16, 128], strides = [1, 1]} : vector<16x384xf32> to vector<16x128xf32>
    %64 = vector.extract_strided_slice %62 {offsets = [0, 128], sizes = [16, 128], strides = [1, 1]} : vector<16x384xf32> to vector<16x128xf32>
    %65 = vector.extract_strided_slice %62 {offsets = [0, 256], sizes = [16, 128], strides = [1, 1]} : vector<16x384xf32> to vector<16x128xf32>
    %66 = vector.extract_strided_slice %56 {offsets = [0, 384], sizes = [16, 128], strides = [1, 1]} : vector<16x512xf32> to vector<16x128xf32>
    %67 = math.tanh %66 : vector<16x128xf32>
    %68 = arith.mulf %64, %49 : vector<16x128xf32>
    %69 = arith.mulf %63, %67 : vector<16x128xf32>
    %70 = arith.addf %68, %69 : vector<16x128xf32>
    %71 = math.tanh %70 : vector<16x128xf32>
    %72 = arith.mulf %65, %71 : vector<16x128xf32>
    %c0_29 = arith.constant 0 : index
    %c3 = arith.constant 3 : index
    %c0_30 = arith.constant 0 : index
    %73 = vector.load %arg8[%c0_29, %c3, %c0_30] : memref<16x8x512xf32, #tpu.memory_space<vmem>>, vector<16x1x512xf32>
    %74 = vector.shape_cast %73 : vector<16x1x512xf32> to vector<16x512xf32>
    %c0_31 = arith.constant 0 : index
    %c0_32 = arith.constant 0 : index
    %75 = vector.load %arg3[%c0_31, %c0_32] : memref<128x512xf32, #tpu.memory_space<vmem>>, vector<128x512xf32>
    %cst_33 = arith.constant dense<0.000000e+00> : vector<16x512xf32>
    %76 = tpu.matmul %72, %75, %cst_33 {dimension_numbers = #tpu.dot_dimension_numbers<[1], [0], [0], [1], [0, 0, 1, 1], [], []>} : vector<16x128xf32>, vector<128x512xf32>, vector<16x512xf32> -> vector<16x512xf32>
    %77 = arith.addf %74, %76 : vector<16x512xf32>
    %78 = vector.extract_strided_slice %77 {offsets = [0, 0], sizes = [16, 384], strides = [1, 1]} : vector<16x512xf32> to vector<16x384xf32>
    %79 = arith.negf %78 : vector<16x384xf32>
    %80 = math.exp %79 : vector<16x384xf32>
    %cst_34 = arith.constant 1.000000e+00 : f32
    %81 = vector.broadcast %cst_34 : f32 to vector<16x384xf32>
    %82 = arith.addf %81, %80 : vector<16x384xf32>
    %83 = arith.divf %81, %82 : vector<16x384xf32>
    %84 = vector.extract_strided_slice %83 {offsets = [0, 0], sizes = [16, 128], strides = [1, 1]} : vector<16x384xf32> to vector<16x128xf32>
    %85 = vector.extract_strided_slice %83 {offsets = [0, 128], sizes = [16, 128], strides = [1, 1]} : vector<16x384xf32> to vector<16x128xf32>
    %86 = vector.extract_strided_slice %83 {offsets = [0, 256], sizes = [16, 128], strides = [1, 1]} : vector<16x384xf32> to vector<16x128xf32>
    %87 = vector.extract_strided_slice %77 {offsets = [0, 384], sizes = [16, 128], strides = [1, 1]} : vector<16x512xf32> to vector<16x128xf32>
    %88 = math.tanh %87 : vector<16x128xf32>
    %89 = arith.mulf %85, %70 : vector<16x128xf32>
    %90 = arith.mulf %84, %88 : vector<16x128xf32>
    %91 = arith.addf %89, %90 : vector<16x128xf32>
    %92 = math.tanh %91 : vector<16x128xf32>
    %93 = arith.mulf %86, %92 : vector<16x128xf32>
    %c0_35 = arith.constant 0 : index
    %c4 = arith.constant 4 : index
    %c0_36 = arith.constant 0 : index
    %94 = vector.load %arg8[%c0_35, %c4, %c0_36] : memref<16x8x512xf32, #tpu.memory_space<vmem>>, vector<16x1x512xf32>
    %95 = vector.shape_cast %94 : vector<16x1x512xf32> to vector<16x512xf32>
    %c0_37 = arith.constant 0 : index
    %c0_38 = arith.constant 0 : index
    %96 = vector.load %arg3[%c0_37, %c0_38] : memref<128x512xf32, #tpu.memory_space<vmem>>, vector<128x512xf32>
    %cst_39 = arith.constant dense<0.000000e+00> : vector<16x512xf32>
    %97 = tpu.matmul %93, %96, %cst_39 {dimension_numbers = #tpu.dot_dimension_numbers<[1], [0], [0], [1], [0, 0, 1, 1], [], []>} : vector<16x128xf32>, vector<128x512xf32>, vector<16x512xf32> -> vector<16x512xf32>
    %98 = arith.addf %95, %97 : vector<16x512xf32>
    %99 = vector.extract_strided_slice %98 {offsets = [0, 0], sizes = [16, 384], strides = [1, 1]} : vector<16x512xf32> to vector<16x384xf32>
    %100 = arith.negf %99 : vector<16x384xf32>
    %101 = math.exp %100 : vector<16x384xf32>
    %cst_40 = arith.constant 1.000000e+00 : f32
    %102 = vector.broadcast %cst_40 : f32 to vector<16x384xf32>
    %103 = arith.addf %102, %101 : vector<16x384xf32>
    %104 = arith.divf %102, %103 : vector<16x384xf32>
    %105 = vector.extract_strided_slice %104 {offsets = [0, 0], sizes = [16, 128], strides = [1, 1]} : vector<16x384xf32> to vector<16x128xf32>
    %106 = vector.extract_strided_slice %104 {offsets = [0, 128], sizes = [16, 128], strides = [1, 1]} : vector<16x384xf32> to vector<16x128xf32>
    %107 = vector.extract_strided_slice %104 {offsets = [0, 256], sizes = [16, 128], strides = [1, 1]} : vector<16x384xf32> to vector<16x128xf32>
    %108 = vector.extract_strided_slice %98 {offsets = [0, 384], sizes = [16, 128], strides = [1, 1]} : vector<16x512xf32> to vector<16x128xf32>
    %109 = math.tanh %108 : vector<16x128xf32>
    %110 = arith.mulf %106, %91 : vector<16x128xf32>
    %111 = arith.mulf %105, %109 : vector<16x128xf32>
    %112 = arith.addf %110, %111 : vector<16x128xf32>
    %113 = math.tanh %112 : vector<16x128xf32>
    %114 = arith.mulf %107, %113 : vector<16x128xf32>
    %c0_41 = arith.constant 0 : index
    %c5 = arith.constant 5 : index
    %c0_42 = arith.constant 0 : index
    %115 = vector.load %arg8[%c0_41, %c5, %c0_42] : memref<16x8x512xf32, #tpu.memory_space<vmem>>, vector<16x1x512xf32>
    %116 = vector.shape_cast %115 : vector<16x1x512xf32> to vector<16x512xf32>
    %c0_43 = arith.constant 0 : index
    %c0_44 = arith.constant 0 : index
    %117 = vector.load %arg3[%c0_43, %c0_44] : memref<128x512xf32, #tpu.memory_space<vmem>>, vector<128x512xf32>
    %cst_45 = arith.constant dense<0.000000e+00> : vector<16x512xf32>
    %118 = tpu.matmul %114, %117, %cst_45 {dimension_numbers = #tpu.dot_dimension_numbers<[1], [0], [0], [1], [0, 0, 1, 1], [], []>} : vector<16x128xf32>, vector<128x512xf32>, vector<16x512xf32> -> vector<16x512xf32>
    %119 = arith.addf %116, %118 : vector<16x512xf32>
    %120 = vector.extract_strided_slice %119 {offsets = [0, 0], sizes = [16, 384], strides = [1, 1]} : vector<16x512xf32> to vector<16x384xf32>
    %121 = arith.negf %120 : vector<16x384xf32>
    %122 = math.exp %121 : vector<16x384xf32>
    %cst_46 = arith.constant 1.000000e+00 : f32
    %123 = vector.broadcast %cst_46 : f32 to vector<16x384xf32>
    %124 = arith.addf %123, %122 : vector<16x384xf32>
    %125 = arith.divf %123, %124 : vector<16x384xf32>
    %126 = vector.extract_strided_slice %125 {offsets = [0, 0], sizes = [16, 128], strides = [1, 1]} : vector<16x384xf32> to vector<16x128xf32>
    %127 = vector.extract_strided_slice %125 {offsets = [0, 128], sizes = [16, 128], strides = [1, 1]} : vector<16x384xf32> to vector<16x128xf32>
    %128 = vector.extract_strided_slice %125 {offsets = [0, 256], sizes = [16, 128], strides = [1, 1]} : vector<16x384xf32> to vector<16x128xf32>
    %129 = vector.extract_strided_slice %119 {offsets = [0, 384], sizes = [16, 128], strides = [1, 1]} : vector<16x512xf32> to vector<16x128xf32>
    %130 = math.tanh %129 : vector<16x128xf32>
    %131 = arith.mulf %127, %112 : vector<16x128xf32>
    %132 = arith.mulf %126, %130 : vector<16x128xf32>
    %133 = arith.addf %131, %132 : vector<16x128xf32>
    %134 = math.tanh %133 : vector<16x128xf32>
    %135 = arith.mulf %128, %134 : vector<16x128xf32>
    %c0_47 = arith.constant 0 : index
    %c6 = arith.constant 6 : index
    %c0_48 = arith.constant 0 : index
    %136 = vector.load %arg8[%c0_47, %c6, %c0_48] : memref<16x8x512xf32, #tpu.memory_space<vmem>>, vector<16x1x512xf32>
    %137 = vector.shape_cast %136 : vector<16x1x512xf32> to vector<16x512xf32>
    %c0_49 = arith.constant 0 : index
    %c0_50 = arith.constant 0 : index
    %138 = vector.load %arg3[%c0_49, %c0_50] : memref<128x512xf32, #tpu.memory_space<vmem>>, vector<128x512xf32>
    %cst_51 = arith.constant dense<0.000000e+00> : vector<16x512xf32>
    %139 = tpu.matmul %135, %138, %cst_51 {dimension_numbers = #tpu.dot_dimension_numbers<[1], [0], [0], [1], [0, 0, 1, 1], [], []>} : vector<16x128xf32>, vector<128x512xf32>, vector<16x512xf32> -> vector<16x512xf32>
    %140 = arith.addf %137, %139 : vector<16x512xf32>
    %141 = vector.extract_strided_slice %140 {offsets = [0, 0], sizes = [16, 384], strides = [1, 1]} : vector<16x512xf32> to vector<16x384xf32>
    %142 = arith.negf %141 : vector<16x384xf32>
    %143 = math.exp %142 : vector<16x384xf32>
    %cst_52 = arith.constant 1.000000e+00 : f32
    %144 = vector.broadcast %cst_52 : f32 to vector<16x384xf32>
    %145 = arith.addf %144, %143 : vector<16x384xf32>
    %146 = arith.divf %144, %145 : vector<16x384xf32>
    %147 = vector.extract_strided_slice %146 {offsets = [0, 0], sizes = [16, 128], strides = [1, 1]} : vector<16x384xf32> to vector<16x128xf32>
    %148 = vector.extract_strided_slice %146 {offsets = [0, 128], sizes = [16, 128], strides = [1, 1]} : vector<16x384xf32> to vector<16x128xf32>
    %149 = vector.extract_strided_slice %146 {offsets = [0, 256], sizes = [16, 128], strides = [1, 1]} : vector<16x384xf32> to vector<16x128xf32>
    %150 = vector.extract_strided_slice %140 {offsets = [0, 384], sizes = [16, 128], strides = [1, 1]} : vector<16x512xf32> to vector<16x128xf32>
    %151 = math.tanh %150 : vector<16x128xf32>
    %152 = arith.mulf %148, %133 : vector<16x128xf32>
    %153 = arith.mulf %147, %151 : vector<16x128xf32>
    %154 = arith.addf %152, %153 : vector<16x128xf32>
    %155 = math.tanh %154 : vector<16x128xf32>
    %156 = arith.mulf %149, %155 : vector<16x128xf32>
    %c0_53 = arith.constant 0 : index
    %c7 = arith.constant 7 : index
    %c0_54 = arith.constant 0 : index
    %157 = vector.load %arg8[%c0_53, %c7, %c0_54] : memref<16x8x512xf32, #tpu.memory_space<vmem>>, vector<16x1x512xf32>
    %158 = vector.shape_cast %157 : vector<16x1x512xf32> to vector<16x512xf32>
    %c0_55 = arith.constant 0 : index
    %c0_56 = arith.constant 0 : index
    %159 = vector.load %arg3[%c0_55, %c0_56] : memref<128x512xf32, #tpu.memory_space<vmem>>, vector<128x512xf32>
    %cst_57 = arith.constant dense<0.000000e+00> : vector<16x512xf32>
    %160 = tpu.matmul %156, %159, %cst_57 {dimension_numbers = #tpu.dot_dimension_numbers<[1], [0], [0], [1], [0, 0, 1, 1], [], []>} : vector<16x128xf32>, vector<128x512xf32>, vector<16x512xf32> -> vector<16x512xf32>
    %161 = arith.addf %158, %160 : vector<16x512xf32>
    %162 = vector.extract_strided_slice %161 {offsets = [0, 0], sizes = [16, 384], strides = [1, 1]} : vector<16x512xf32> to vector<16x384xf32>
    %163 = arith.negf %162 : vector<16x384xf32>
    %164 = math.exp %163 : vector<16x384xf32>
    %cst_58 = arith.constant 1.000000e+00 : f32
    %165 = vector.broadcast %cst_58 : f32 to vector<16x384xf32>
    %166 = arith.addf %165, %164 : vector<16x384xf32>
    %167 = arith.divf %165, %166 : vector<16x384xf32>
    %168 = vector.extract_strided_slice %167 {offsets = [0, 0], sizes = [16, 128], strides = [1, 1]} : vector<16x384xf32> to vector<16x128xf32>
    %169 = vector.extract_strided_slice %167 {offsets = [0, 128], sizes = [16, 128], strides = [1, 1]} : vector<16x384xf32> to vector<16x128xf32>
    %170 = vector.extract_strided_slice %167 {offsets = [0, 256], sizes = [16, 128], strides = [1, 1]} : vector<16x384xf32> to vector<16x128xf32>
    %171 = vector.extract_strided_slice %161 {offsets = [0, 384], sizes = [16, 128], strides = [1, 1]} : vector<16x512xf32> to vector<16x128xf32>
    %172 = math.tanh %171 : vector<16x128xf32>
    %173 = arith.mulf %169, %154 : vector<16x128xf32>
    %174 = arith.mulf %168, %172 : vector<16x128xf32>
    %175 = arith.addf %173, %174 : vector<16x128xf32>
    %176 = math.tanh %175 : vector<16x128xf32>
    %177 = arith.mulf %170, %176 : vector<16x128xf32>
    %c0_59 = arith.constant 0 : index
    %c0_60 = arith.constant 0 : index
    %178 = vector.load %arg5[%c0_59, %c0_60] : memref<128x128xf32, #tpu.memory_space<vmem>>, vector<128x128xf32>
    %cst_61 = arith.constant dense<0.000000e+00> : vector<16x128xf32>
    %179 = tpu.matmul %177, %178, %cst_61 {dimension_numbers = #tpu.dot_dimension_numbers<[1], [0], [0], [1], [0, 0, 1, 1], [], []>} : vector<16x128xf32>, vector<128x128xf32>, vector<16x128xf32> -> vector<16x128xf32>
    %c0_62 = arith.constant 0 : index
    %c0_63 = arith.constant 0 : index
    %180 = vector.load %arg6[%c0_62, %c0_63] : memref<1x128xf32, #tpu.memory_space<vmem>>, vector<1x128xf32>
    %181 = vector.broadcast %180 : vector<1x128xf32> to vector<16x128xf32>
    %182 = arith.addf %179, %181 : vector<16x128xf32>
    %183 = arith.negf %182 : vector<16x128xf32>
    %184 = math.exp %183 : vector<16x128xf32>
    %cst_64 = arith.constant 1.000000e+00 : f32
    %185 = vector.broadcast %cst_64 : f32 to vector<16x128xf32>
    %186 = arith.addf %185, %184 : vector<16x128xf32>
    %187 = arith.divf %185, %186 : vector<16x128xf32>
    %c0_65 = arith.constant 0 : index
    %c0_66 = arith.constant 0 : index
    %188 = vector.load %arg7[%c0_65, %c0_66] : memref<16x128xf32, #tpu.memory_space<vmem>>, vector<16x128xf32>
    tpu.vector_store %arg7[%c0_65, %c0_66], %187 {strides = array<i32>} : memref<16x128xf32, #tpu.memory_space<vmem>>, vector<16x128xf32>,
    return
  }
  func.func @transform_0(%arg0: i32) -> (i32, i32) {
    %c0_i32 = arith.constant 0 : i32
    %c0_i32_0 = arith.constant 0 : i32
    return %arg0, %c0_i32 : i32, i32
  }
  func.func @transform_1(%arg0: i32) -> (i32, i32) {
    %c0_i32 = arith.constant 0 : i32
    %c0_i32_0 = arith.constant 0 : i32
    %c0_i32_1 = arith.constant 0 : i32
    return %c0_i32, %c0_i32_0 : i32, i32
  }
  func.func @transform_2(%arg0: i32) -> (i32, i32) {
    %c0_i32 = arith.constant 0 : i32
    %c0_i32_0 = arith.constant 0 : i32
    %c0_i32_1 = arith.constant 0 : i32
    return %c0_i32, %c0_i32_0 : i32, i32
  }
  func.func @transform_3(%arg0: i32) -> (i32, i32) {
    %c0_i32 = arith.constant 0 : i32
    %c0_i32_0 = arith.constant 0 : i32
    %c0_i32_1 = arith.constant 0 : i32
    return %c0_i32, %c0_i32_0 : i32, i32
  }
  func.func @transform_4(%arg0: i32) -> (i32, i32) {
    %c0_i32 = arith.constant 0 : i32
    %c0_i32_0 = arith.constant 0 : i32
    %c0_i32_1 = arith.constant 0 : i32
    return %c0_i32, %c0_i32_0 : i32, i32
  }
  func.func @transform_5(%arg0: i32) -> (i32, i32) {
    %c0_i32 = arith.constant 0 : i32
    %c0_i32_0 = arith.constant 0 : i32
    %c0_i32_1 = arith.constant 0 : i32
    return %c0_i32, %c0_i32_0 : i32, i32
  }
  func.func @transform_6(%arg0: i32) -> (i32, i32) {
    %c0_i32 = arith.constant 0 : i32
    %c0_i32_0 = arith.constant 0 : i32
    return %arg0, %c0_i32 : i32, i32
  }
}

</mosaic_0001>

<llo_original>
// kernel: technical_indicator_lstm.1
$region0: #{technical_indicator_lstm.1}
  #allocation0 [shape = 'u32[]', space=smem, size = 0x4, offset = 0x4, fixed_abs, tag = 'smem constant byte address 0x4 - core index']
  #allocation1 [shape = 'u32[144,128]{1,0:T(1,128)}', space=vmem, size = 0x12000, scoped, tag = 'internal scratch']
  #allocation2 [shape = 'f32[16,8,512]{2,1,0:T(8,128)}', space=vmem, size = 0x40000, scoped, tag = 'scratch operand']
  %s0 = inlined_call_operand.vmem [shape: f32[128,20], index: 0, kind: input, shape index: {}]
  %s1 = inlined_call_operand.vmem [shape: f32[20,512], index: 1, kind: input, shape index: {}]
  %s2 = inlined_call_operand.vmem [shape: f32[128,512], index: 2, kind: input, shape index: {}]
  %s3 = inlined_call_operand.vmem [shape: f32[1,512], index: 3, kind: input, shape index: {}]
  %s4 = inlined_call_operand.vmem [shape: f32[128,128], index: 4, kind: input, shape index: {}]
  %s5 = inlined_call_operand.vmem [shape: f32[1,128], index: 5, kind: input, shape index: {}]
  %s6 = inlined_call_operand.vmem [shape: f32[16,128], index: 6, kind: output, shape index: {}]
  %s7 = sld [smem:[#allocation0]]
  $region34: #{technical_indicator_lstm.1} parent=0
    _
  %s9 = ssub.s32 1, %s7
  %s10 = scalar_select 0, %s9, %s7
  // Predicated region
  $region2: #{technical_indicator_lstm.1} parent=0 // pred_check
    _
  $region3: #{technical_indicator_lstm.1} parent=0 // pred_check_branch
    %12 = sbr.rel (0) target = $region5
  $region4: #{technical_indicator_lstm.1} parent=0 // pred_region
    _
  $region5: #{technical_indicator_lstm.1} parent=0 // pred_fallthru
    _
  // Predicated region
  $region6: #{technical_indicator_lstm.1} parent=0 // pred_check
    _
  $region7: #{technical_indicator_lstm.1} parent=0 // pred_check_branch
    %14 = sbr.rel (0) target = $region9
  $region8: #{technical_indicator_lstm.1} parent=0 // pred_region
    _
  $region9: #{technical_indicator_lstm.1} parent=0 // pred_fallthru
    _
  // Predicated region
  $region10: #{technical_indicator_lstm.1} parent=0 // pred_check
    _
  $region11: #{technical_indicator_lstm.1} parent=0 // pred_check_branch
    %16 = sbr.rel (0) target = $region13
  $region12: #{technical_indicator_lstm.1} parent=0 // pred_region
    _
  $region13: #{technical_indicator_lstm.1} parent=0 // pred_fallthru
    _
  // Predicated region
  $region14: #{technical_indicator_lstm.1} parent=0 // pred_check
    _
  $region15: #{technical_indicator_lstm.1} parent=0 // pred_check_branch
    %18 = sbr.rel (0) target = $region17
  $region16: #{technical_indicator_lstm.1} parent=0 // pred_region
    _
  $region17: #{technical_indicator_lstm.1} parent=0 // pred_fallthru
    _
  // Predicated region
  $region18: #{technical_indicator_lstm.1} parent=0 // pred_check
    _
  $region19: #{technical_indicator_lstm.1} parent=0 // pred_check_branch
    %20 = sbr.rel (0) target = $region21
  $region20: #{technical_indicator_lstm.1} parent=0 // pred_region
    _
  $region21: #{technical_indicator_lstm.1} parent=0 // pred_fallthru
    _
  // Predicated region
  $region22: #{technical_indicator_lstm.1} parent=0 // pred_check
    _
  $region23: #{technical_indicator_lstm.1} parent=0 // pred_check_branch
    %22 = sbr.rel (0) target = $region25
  $region24: #{technical_indicator_lstm.1} parent=0 // pred_region
    _
  $region25: #{technical_indicator_lstm.1} parent=0 // pred_fallthru
    _
  %v23 = vld [vmem:[%s0] sm:$0xff]
  %v24 = vld [vmem:[%s0 + $0x8] sm:$0xff]
  %v25 = vld [vmem:[%s0 + $0x10] sm:$0xff]
  %v26 = vld [vmem:[%s0 + $0x18] sm:$0xff]
  %v27 = vld [vmem:[%s0 + $0x20] sm:$0xff]
  %v28 = vld [vmem:[%s0 + $0x28] sm:$0xff]
  %v29 = vld [vmem:[%s0 + $0x30] sm:$0xff]
  %v30 = vld [vmem:[%s0 + $0x38] sm:$0xff]
  %v31 = vld [vmem:[%s0 + $0x40] sm:$0xff]
  %v32 = vld [vmem:[%s0 + $0x48] sm:$0xff]
  %v33 = vld [vmem:[%s0 + $0x50] sm:$0xff]
  %v34 = vld [vmem:[%s0 + $0x58] sm:$0xff]
  %v35 = vld [vmem:[%s0 + $0x60] sm:$0xff]
  %v36 = vld [vmem:[%s0 + $0x68] sm:$0xff]
  %v37 = vld [vmem:[%s0 + $0x70] sm:$0xff]
  %v38 = vld [vmem:[%s0 + $0x78] sm:$0xff]
  %v39 = vld [vmem:[%s1] sm:$0xff]
  %v40 = vld [vmem:[%s1 + $0x8] sm:$0xff]
  %v41 = vld [vmem:[%s1 + $0x10] sm:$0xff]
  %v42 = vld [vmem:[%s1 + $0x18] sm:$0xff]
  %v43 = vld [vmem:[%s1 + $0x20] sm:$0xff]
  %v44 = vld [vmem:[%s1 + $0x28] sm:$0xff]
  %v45 = vld [vmem:[%s1 + $0x30] sm:$0xff]
  %v46 = vld [vmem:[%s1 + $0x38] sm:$0xff]
  %v47 = vld [vmem:[%s1 + $0x40] sm:$0xf]
  %v48 = vld [vmem:[%s1 + $0x48] sm:$0xf]
  %v49 = vld [vmem:[%s1 + $0x50] sm:$0xf]
  %v50 = vld [vmem:[%s1 + $0x58] sm:$0xf]
  %v51 = vld [vmem:[%s3] sm:$0xf]
  %v53 = vlaneseq
  %v54 = vshrl.u32 %v53, 7
  %v55 = vsub.s32 0, %v54
  %v56 = vrot.slane %v51, %v55
  %v57 = vlaneseq
  %v58 = vshrl.u32 %v57, 7
  %v59 = vsub.s32 1, %v58
  %v60 = vrot.slane %v51, %v59
  %v61 = vlaneseq
  %v62 = vshrl.u32 %v61, 7
  %v63 = vsub.s32 2, %v62
  %v64 = vrot.slane %v51, %v63
  %v65 = vlaneseq
  %v66 = vshrl.u32 %v65, 7
  %v67 = vsub.s32 3, %v66
  %v68 = vrot.slane %v51, %v67
  %vm73 = vcmask 162816
  %v75 = vsel %vm73, %v23, 0
  %v78 = vsel %vm73, %v24, 0
  %v81 = vsel %vm73, %v25, 0
  %v84 = vsel %vm73, %v26, 0
  %v87 = vsel %vm73, %v27, 0
  %v90 = vsel %vm73, %v28, 0
  %v93 = vsel %vm73, %v29, 0
  %v96 = vsel %vm73, %v30, 0
  %v99 = vsel %vm73, %v31, 0
  %v102 = vsel %vm73, %v32, 0
  %v105 = vsel %vm73, %v33, 0
  %v108 = vsel %vm73, %v34, 0
  %v111 = vsel %vm73, %v35, 0
  %v114 = vsel %vm73, %v36, 0
  %v117 = vsel %vm73, %v37, 0
  %v120 = vsel %vm73, %v38, 0
  %vm122 = vcmask 1043456
  %v124 = vsel %vm122, %v47, 0
  %v127 = vsel %vm122, %v48, 0
  %v130 = vsel %vm122, %v49, 0
  %v133 = vsel %vm122, %v50, 0
  %135 = vmatprep.subr.mxu0 0.0
  %136 = vmatpush1.msra.mxu0 0.0
  %137 = vmatprep.subr.mxu0 0.0
  %138 = vmatpush1.msra.mxu0 0.0
  %139 = vmatprep.subr.mxu0 0.0
  %140 = vmatpush1.msra.mxu0 0.0
  %141 = vmatprep.subr.mxu0 0.0
  %142 = vmatpush1.msra.mxu0 0.0
  %143 = vmatprep.subr.mxu0 0.0
  %144 = vmatpush1.msra.mxu0 0.0
  %145 = vmatprep.subr.mxu0 0.0
  %146 = vmatpush1.msra.mxu0 0.0
  %147 = vmatprep.subr.mxu0 0.0
  %148 = vmatpush1.msra.mxu0 0.0
  %149 = vmatprep.subr.mxu0 0.0
  %150 = vmatpush1.msra.mxu0 0.0
  %151 = vmatprep.subr.mxu0 0.0
  %152 = vmatpush1.msra.mxu0 0.0
  %153 = vmatprep.subr.mxu0 0.0
  %154 = vmatpush1.msra.mxu0 0.0
  %155 = vmatprep.subr.mxu0 0.0
  %156 = vmatpush1.msra.mxu0 0.0
  %157 = vmatprep.subr.mxu0 0.0
  %158 = vmatpush1.msra.mxu0 0.0
  %159 = vmatprep.subr.mxu0 0.0
  %160 = vmatpush1.msra.mxu0 0.0
  %161 = vmatprep.subr.mxu0 %v127
  %162 = vmatpush1.msra.mxu0 %v124
  %163 = vmatprep.subr.mxu0 %v44
  %164 = vmatpush1.msra.mxu0 %v43
  %165 = vmatprep.subr.mxu0 %v40
  %166 = vmatpush1.msra.mxu0 %v39
  %167 = vmatprep.subr.mxu0 0.0
  %168 = vmatpush2.msra.mxu0 0.0
  %169 = vmatprep.subr.mxu0 0.0
  %170 = vmatpush2.msra.mxu0 0.0
  %171 = vmatprep.subr.mxu0 0.0
  %172 = vmatpush2.msra.mxu0 0.0
  %173 = vmatprep.subr.mxu0 0.0
  %174 = vmatpush2.msra.mxu0 0.0
  %175 = vmatprep.subr.mxu0 0.0
  %176 = vmatpush2.msra.mxu0 0.0
  %177 = vmatprep.subr.mxu0 0.0
  %178 = vmatpush2.msra.mxu0 0.0
  %179 = vmatprep.subr.mxu0 0.0
  %180 = vmatpush2.msra.mxu0 0.0
  %181 = vmatprep.subr.mxu0 0.0
  %182 = vmatpush2.msra.mxu0 0.0
  %183 = vmatprep.subr.mxu0 0.0
  %184 = vmatpush2.msra.mxu0 0.0
  %185 = vmatprep.subr.mxu0 0.0
  %186 = vmatpush2.msra.mxu0 0.0
  %187 = vmatprep.subr.mxu0 0.0
  %188 = vmatpush2.msra.mxu0 0.0
  %189 = vmatprep.subr.mxu0 0.0
  %190 = vmatpush2.msra.mxu0 0.0
  %191 = vmatprep.subr.mxu0 0.0
  %192 = vmatpush2.msra.mxu0 0.0
  %193 = vmatprep.subr.mxu0 0.0
  %194 = vmatpush2.msra.mxu0 0.0
  %195 = vmatprep.subr.mxu0 0.0
  %196 = vmatpush2.msra.mxu0 0.0
  %197 = vmatprep.subr.mxu0 0.0
  %198 = vmatpush2.msra.mxu0 0.0
  %199 = vmatprep.mubr.f32.mxu0 0.0
  %200 = vmatmul.mubr.f32.gmra.mxu0 %v75
  %v201 = vpop.f32.mrf.mxu0
  %v202 = vadd.f32 %v56, %v201
  %v203 = vpop.f32.mrf.mxu0
  %v204 = vadd.f32 %v60, %v203
  %205 = vmatprep.mubr.f32.mxu0 0.0
  %206 = vmatmul.mubr.f32.gmra.mxu0 %v78
  %v207 = vpop.f32.mrf.mxu0
  %v208 = vadd.f32 %v56, %v207
  %v209 = vpop.f32.mrf.mxu0
  %v210 = vadd.f32 %v60, %v209
  %211 = vmatprep.mubr.f32.mxu0 0.0
  %212 = vmatmul.mubr.f32.gmra.mxu0 %v81
  %v213 = vpop.f32.mrf.mxu0
  %v214 = vadd.f32 %v56, %v213
  %v215 = vpop.f32.mrf.mxu0
  %v216 = vadd.f32 %v60, %v215
  %217 = vmatprep.mubr.f32.mxu0 0.0
  %218 = vmatmul.mubr.f32.gmra.mxu0 %v84
  %v219 = vpop.f32.mrf.mxu0
  %v220 = vadd.f32 %v56, %v219
  %v221 = vpop.f32.mrf.mxu0
  %v222 = vadd.f32 %v60, %v221
  %223 = vmatprep.mubr.f32.mxu0 0.0
  %224 = vmatmul.mubr.f32.gmra.mxu0 %v87
  %v225 = vpop.f32.mrf.mxu0
  %v226 = vadd.f32 %v56, %v225
  %v227 = vpop.f32.mrf.mxu0
  %v228 = vadd.f32 %v60, %v227
  %229 = vmatprep.mubr.f32.mxu0 0.0
  %230 = vmatmul.mubr.f32.gmra.mxu0 %v90
  %v231 = vpop.f32.mrf.mxu0
  %v232 = vadd.f32 %v56, %v231
  %v233 = vpop.f32.mrf.mxu0
  %v234 = vadd.f32 %v60, %v233
  %235 = vmatprep.mubr.f32.mxu0 0.0
  %236 = vmatmul.mubr.f32.gmra.mxu0 %v93
  %v237 = vpop.f32.mrf.mxu0
  %v238 = vadd.f32 %v56, %v237
  %v239 = vpop.f32.mrf.mxu0
  %v240 = vadd.f32 %v60, %v239
  %241 = vmatprep.mubr.f32.mxu0 0.0
  %242 = vmatmul.mubr.f32.gmra.mxu0 %v96
  %v243 = vpop.f32.mrf.mxu0
  %v244 = vadd.f32 %v56, %v243
  %v245 = vpop.f32.mrf.mxu0
  %v246 = vadd.f32 %v60, %v245
  %247 = vmatprep.mubr.f32.mxu0 0.0
  %248 = vmatmul.mubr.f32.gmra.mxu0 %v99
  %v249 = vpop.f32.mrf.mxu0
  %v250 = vadd.f32 %v56, %v249
  %v251 = vpop.f32.mrf.mxu0
  %v252 = vadd.f32 %v60, %v251
  %253 = vmatprep.mubr.f32.mxu0 0.0
  %254 = vmatmul.mubr.f32.gmra.mxu0 %v102
  %v255 = vpop.f32.mrf.mxu0
  %v256 = vadd.f32 %v56, %v255
  %v257 = vpop.f32.mrf.mxu0
  %v258 = vadd.f32 %v60, %v257
  %259 = vmatprep.mubr.f32.mxu0 0.0
  %260 = vmatmul.mubr.f32.gmra.mxu0 %v105
  %v261 = vpop.f32.mrf.mxu0
  %v262 = vadd.f32 %v56, %v261
  %v263 = vpop.f32.mrf.mxu0
  %v264 = vadd.f32 %v60, %v263
  %265 = vmatprep.mubr.f32.mxu0 0.0
  %266 = vmatmul.mubr.f32.gmra.mxu0 %v108
  %v267 = vpop.f32.mrf.mxu0
  %v268 = vadd.f32 %v56, %v267
  %v269 = vpop.f32.mrf.mxu0
  %v270 = vadd.f32 %v60, %v269
  %271 = vmatprep.mubr.f32.mxu0 0.0
  %272 = vmatmul.mubr.f32.gmra.mxu0 %v111
  %v273 = vpop.f32.mrf.mxu0
  %v274 = vadd.f32 %v56, %v273
  %v275 = vpop.f32.mrf.mxu0
  %v276 = vadd.f32 %v60, %v275
  %277 = vmatprep.mubr.f32.mxu0 0.0
  %278 = vmatmul.mubr.f32.gmra.mxu0 %v114
  %v279 = vpop.f32.mrf.mxu0
  %v280 = vadd.f32 %v56, %v279
  %v281 = vpop.f32.mrf.mxu0
  %v282 = vadd.f32 %v60, %v281
  %283 = vmatprep.mubr.f32.mxu0 0.0
  %284 = vmatmul.mubr.f32.gmra.mxu0 %v117
  %v285 = vpop.f32.mrf.mxu0
  %v286 = vadd.f32 %v56, %v285
  %v287 = vpop.f32.mrf.mxu0
  %v288 = vadd.f32 %v60, %v287
  %289 = vmatprep.mubr.f32.mxu0 0.0
  %290 = vmatmul.mubr.f32.gmra.mxu0 %v120
  %v291 = vpop.f32.mrf.mxu0
  %v292 = vadd.f32 %v56, %v291
  %v293 = vpop.f32.mrf.mxu0
  %v294 = vadd.f32 %v60, %v293
  %295 = vdwg.mxu0
  %296 = vmatprep.subr.mxu0 0.0
  %297 = vmatpush1.msra.mxu0 0.0
  %298 = vmatprep.subr.mxu0 0.0
  %299 = vmatpush1.msra.mxu0 0.0
  %300 = vmatprep.subr.mxu0 0.0
  %301 = vmatpush1.msra.mxu0 0.0
  %302 = vmatprep.subr.mxu0 0.0
  %303 = vmatpush1.msra.mxu0 0.0
  %304 = vmatprep.subr.mxu0 0.0
  %305 = vmatpush1.msra.mxu0 0.0
  %306 = vmatprep.subr.mxu0 0.0
  %307 = vmatpush1.msra.mxu0 0.0
  %308 = vmatprep.subr.mxu0 0.0
  %309 = vmatpush1.msra.mxu0 0.0
  %310 = vmatprep.subr.mxu0 0.0
  %311 = vmatpush1.msra.mxu0 0.0
  %312 = vmatprep.subr.mxu0 0.0
  %313 = vmatpush1.msra.mxu0 0.0
  %314 = vmatprep.subr.mxu0 0.0
  %315 = vmatpush1.msra.mxu0 0.0
  %316 = vmatprep.subr.mxu0 0.0
  %317 = vmatpush1.msra.mxu0 0.0
  %318 = vmatprep.subr.mxu0 0.0
  %319 = vmatpush1.msra.mxu0 0.0
  %320 = vmatprep.subr.mxu0 0.0
  %321 = vmatpush1.msra.mxu0 0.0
  %322 = vmatprep.subr.mxu0 %v133
  %323 = vmatpush1.msra.mxu0 %v130
  %324 = vmatprep.subr.mxu0 %v46
  %325 = vmatpush1.msra.mxu0 %v45
  %326 = vmatprep.subr.mxu0 %v42
  %327 = vmatpush1.msra.mxu0 %v41
  %328 = vmatprep.subr.mxu0 0.0
  %329 = vmatpush2.msra.mxu0 0.0
  %330 = vmatprep.subr.mxu0 0.0
  %331 = vmatpush2.msra.mxu0 0.0
  %332 = vmatprep.subr.mxu0 0.0
  %333 = vmatpush2.msra.mxu0 0.0
  %334 = vmatprep.subr.mxu0 0.0
  %335 = vmatpush2.msra.mxu0 0.0
  %336 = vmatprep.subr.mxu0 0.0
  %337 = vmatpush2.msra.mxu0 0.0
  %338 = vmatprep.subr.mxu0 0.0
  %339 = vmatpush2.msra.mxu0 0.0
  %340 = vmatprep.subr.mxu0 0.0
  %341 = vmatpush2.msra.mxu0 0.0
  %342 = vmatprep.subr.mxu0 0.0
  %343 = vmatpush2.msra.mxu0 0.0
  %344 = vmatprep.subr.mxu0 0.0
  %345 = vmatpush2.msra.mxu0 0.0
  %346 = vmatprep.subr.mxu0 0.0
  %347 = vmatpush2.msra.mxu0 0.0
  %348 = vmatprep.subr.mxu0 0.0
  %349 = vmatpush2.msra.mxu0 0.0
  %350 = vmatprep.subr.mxu0 0.0
  %351 = vmatpush2.msra.mxu0 0.0
  %352 = vmatprep.subr.mxu0 0.0
  %353 = vmatpush2.msra.mxu0 0.0
  %354 = vmatprep.subr.mxu0 0.0
  %355 = vmatpush2.msra.mxu0 0.0
  %356 = vmatprep.subr.mxu0 0.0
  %357 = vmatpush2.msra.mxu0 0.0
  %358 = vmatprep.subr.mxu0 0.0
  %359 = vmatpush2.msra.mxu0 0.0
  %360 = vmatprep.mubr.f32.mxu0 0.0
  %361 = vmatmul.mubr.f32.gmra.mxu0 %v75
  %v362 = vpop.f32.mrf.mxu0
  %v363 = vadd.f32 %v64, %v362
  %v364 = vpop.f32.mrf.mxu0
  %v365 = vadd.f32 %v68, %v364
  %366 = vmatprep.mubr.f32.mxu0 0.0
  %367 = vmatmul.mubr.f32.gmra.mxu0 %v78
  %v368 = vpop.f32.mrf.mxu0
  %v369 = vadd.f32 %v64, %v368
  %v370 = vpop.f32.mrf.mxu0
  %v371 = vadd.f32 %v68, %v370
  %372 = vmatprep.mubr.f32.mxu0 0.0
  %373 = vmatmul.mubr.f32.gmra.mxu0 %v81
  %v374 = vpop.f32.mrf.mxu0
  %v375 = vadd.f32 %v64, %v374
  %v376 = vpop.f32.mrf.mxu0
  %v377 = vadd.f32 %v68, %v376
  %378 = vmatprep.mubr.f32.mxu0 0.0
  %379 = vmatmul.mubr.f32.gmra.mxu0 %v84
  %v380 = vpop.f32.mrf.mxu0
  %v381 = vadd.f32 %v64, %v380
  %v382 = vpop.f32.mrf.mxu0
  %v383 = vadd.f32 %v68, %v382
  %384 = vmatprep.mubr.f32.mxu0 0.0
  %385 = vmatmul.mubr.f32.gmra.mxu0 %v87
  %v386 = vpop.f32.mrf.mxu0
  %v387 = vadd.f32 %v64, %v386
  %v388 = vpop.f32.mrf.mxu0
  %v389 = vadd.f32 %v68, %v388
  %390 = vmatprep.mubr.f32.mxu0 0.0
  %391 = vmatmul.mubr.f32.gmra.mxu0 %v90
  %v392 = vpop.f32.mrf.mxu0
  %v393 = vadd.f32 %v64, %v392
  %v394 = vpop.f32.mrf.mxu0
  %v395 = vadd.f32 %v68, %v394
  %396 = vmatprep.mubr.f32.mxu0 0.0
  %397 = vmatmul.mubr.f32.gmra.mxu0 %v93
  %v398 = vpop.f32.mrf.mxu0
  %v399 = vadd.f32 %v64, %v398
  %v400 = vpop.f32.mrf.mxu0
  %v401 = vadd.f32 %v68, %v400
  %402 = vmatprep.mubr.f32.mxu0 0.0
  %403 = vmatmul.mubr.f32.gmra.mxu0 %v96
  %v404 = vpop.f32.mrf.mxu0
  %v405 = vadd.f32 %v64, %v404
  %v406 = vpop.f32.mrf.mxu0
  %v407 = vadd.f32 %v68, %v406
  %408 = vmatprep.mubr.f32.mxu0 0.0
  %409 = vmatmul.mubr.f32.gmra.mxu0 %v99
  %v410 = vpop.f32.mrf.mxu0
  %v411 = vadd.f32 %v64, %v410
  %v412 = vpop.f32.mrf.mxu0
  %v413 = vadd.f32 %v68, %v412
  %414 = vmatprep.mubr.f32.mxu0 0.0
  %415 = vmatmul.mubr.f32.gmra.mxu0 %v102
  %v416 = vpop.f32.mrf.mxu0
  %v417 = vadd.f32 %v64, %v416
  %v418 = vpop.f32.mrf.mxu0
  %v419 = vadd.f32 %v68, %v418
  %420 = vmatprep.mubr.f32.mxu0 0.0
  %421 = vmatmul.mubr.f32.gmra.mxu0 %v105
  %v422 = vpop.f32.mrf.mxu0
  %v423 = vadd.f32 %v64, %v422
  %v424 = vpop.f32.mrf.mxu0
  %v425 = vadd.f32 %v68, %v424
  %426 = vmatprep.mubr.f32.mxu0 0.0
  %427 = vmatmul.mubr.f32.gmra.mxu0 %v108
  %v428 = vpop.f32.mrf.mxu0
  %v429 = vadd.f32 %v64, %v428
  %v430 = vpop.f32.mrf.mxu0
  %v431 = vadd.f32 %v68, %v430
  %432 = vmatprep.mubr.f32.mxu0 0.0
  %433 = vmatmul.mubr.f32.gmra.mxu0 %v111
  %v434 = vpop.f32.mrf.mxu0
  %v435 = vadd.f32 %v64, %v434
  %v436 = vpop.f32.mrf.mxu0
  %v437 = vadd.f32 %v68, %v436
  %438 = vmatprep.mubr.f32.mxu0 0.0
  %439 = vmatmul.mubr.f32.gmra.mxu0 %v114
  %v440 = vpop.f32.mrf.mxu0
  %v441 = vadd.f32 %v64, %v440
  %v442 = vpop.f32.mrf.mxu0
  %v443 = vadd.f32 %v68, %v442
  %444 = vmatprep.mubr.f32.mxu0 0.0
  %445 = vmatmul.mubr.f32.gmra.mxu0 %v117
  %v446 = vpop.f32.mrf.mxu0
  %v447 = vadd.f32 %v64, %v446
  %v448 = vpop.f32.mrf.mxu0
  %v449 = vadd.f32 %v68, %v448
  %450 = vmatprep.mubr.f32.mxu0 0.0
  %451 = vmatmul.mubr.f32.gmra.mxu0 %v120
  %v452 = vpop.f32.mrf.mxu0
  %v453 = vadd.f32 %v64, %v452
  %v454 = vpop.f32.mrf.mxu0
  %v455 = vadd.f32 %v68, %v454
  %456 = vdwg.mxu0
  %457 = vst [vmem:[#allocation2] sm:$0xff] %v202
  %458 = vst [vmem:[#allocation2 + $0x8] sm:$0xff] %v204
  %459 = vst [vmem:[#allocation2 + $0x10] sm:$0xff] %v363
  %460 = vst [vmem:[#allocation2 + $0x18] sm:$0xff] %v365
  %461 = vst [vmem:[#allocation2 + $0x20] sm:$0xff] %v208
  %462 = vst [vmem:[#allocation2 + $0x28] sm:$0xff] %v210
  %463 = vst [vmem:[#allocation2 + $0x30] sm:$0xff] %v369
  %464 = vst [vmem:[#allocation2 + $0x38] sm:$0xff] %v371
  %465 = vst [vmem:[#allocation2 + $0x40] sm:$0xff] %v214
  %466 = vst [vmem:[#allocation2 + $0x48] sm:$0xff] %v216
  %467 = vst [vmem:[#allocation2 + $0x50] sm:$0xff] %v375
  %468 = vst [vmem:[#allocation2 + $0x58] sm:$0xff] %v377
  %469 = vst [vmem:[#allocation2 + $0x60] sm:$0xff] %v220
  %470 = vst [vmem:[#allocation2 + $0x68] sm:$0xff] %v222
  %471 = vst [vmem:[#allocation2 + $0x70] sm:$0xff] %v381
  %472 = vst [vmem:[#allocation2 + $0x78] sm:$0xff] %v383
  %473 = vst [vmem:[#allocation2 + $0x80] sm:$0xff] %v226
  %474 = vst [vmem:[#allocation2 + $0x88] sm:$0xff] %v228
  %475 = vst [vmem:[#allocation2 + $0x90] sm:$0xff] %v387
  %476 = vst [vmem:[#allocation2 + $0x98] sm:$0xff] %v389
  %477 = vst [vmem:[#allocation2 + $0xa0] sm:$0xff] %v232
  %478 = vst [vmem:[#allocation2 + $0xa8] sm:$0xff] %v234
  %479 = vst [vmem:[#allocation2 + $0xb0] sm:$0xff] %v393
  %480 = vst [vmem:[#allocation2 + $0xb8] sm:$0xff] %v395
  %481 = vst [vmem:[#allocation2 + $0xc0] sm:$0xff] %v238
  %482 = vst [vmem:[#allocation2 + $0xc8] sm:$0xff] %v240
  %483 = vst [vmem:[#allocation2 + $0xd0] sm:$0xff] %v399
  %484 = vst [vmem:[#allocation2 + $0xd8] sm:$0xff] %v401
  %485 = vst [vmem:[#allocation2 + $0xe0] sm:$0xff] %v244
  %486 = vst [vmem:[#allocation2 + $0xe8] sm:$0xff] %v246
  %487 = vst [vmem:[#allocation2 + $0xf0] sm:$0xff] %v405
  %488 = vst [vmem:[#allocation2 + $0xf8] sm:$0xff] %v407
  %489 = vst [vmem:[#allocation2 + $0x100] sm:$0xff] %v250
  %490 = vst [vmem:[#allocation2 + $0x108] sm:$0xff] %v252
  %491 = vst [vmem:[#allocation2 + $0x110] sm:$0xff] %v411
  %492 = vst [vmem:[#allocation2 + $0x118] sm:$0xff] %v413
  %493 = vst [vmem:[#allocation2 + $0x120] sm:$0xff] %v256
  %494 = vst [vmem:[#allocation2 + $0x128] sm:$0xff] %v258
  %495 = vst [vmem:[#allocation2 + $0x130] sm:$0xff] %v417
  %496 = vst [vmem:[#allocation2 + $0x138] sm:$0xff] %v419
  %497 = vst [vmem:[#allocation2 + $0x140] sm:$0xff] %v262
  %498 = vst [vmem:[#allocation2 + $0x148] sm:$0xff] %v264
  %499 = vst [vmem:[#allocation2 + $0x150] sm:$0xff] %v423
  %500 = vst [vmem:[#allocation2 + $0x158] sm:$0xff] %v425
  %501 = vst [vmem:[#allocation2 + $0x160] sm:$0xff] %v268
  %502 = vst [vmem:[#allocation2 + $0x168] sm:$0xff] %v270
  %503 = vst [vmem:[#allocation2 + $0x170] sm:$0xff] %v429
  %504 = vst [vmem:[#allocation2 + $0x178] sm:$0xff] %v431
  %505 = vst [vmem:[#allocation2 + $0x180] sm:$0xff] %v274
  %506 = vst [vmem:[#allocation2 + $0x188] sm:$0xff] %v276
  %507 = vst [vmem:[#allocation2 + $0x190] sm:$0xff] %v435
  %508 = vst [vmem:[#allocation2 + $0x198] sm:$0xff] %v437
  %509 = vst [vmem:[#allocation2 + $0x1a0] sm:$0xff] %v280
  %510 = vst [vmem:[#allocation2 + $0x1a8] sm:$0xff] %v282
  %511 = vst [vmem:[#allocation2 + $0x1b0] sm:$0xff] %v441
  %512 = vst [vmem:[#allocation2 + $0x1b8] sm:$0xff] %v443
  %513 = vst [vmem:[#allocation2 + $0x1c0] sm:$0xff] %v286
  %514 = vst [vmem:[#allocation2 + $0x1c8] sm:$0xff] %v288
  %515 = vst [vmem:[#allocation2 + $0x1d0] sm:$0xff] %v447
  %516 = vst [vmem:[#allocation2 + $0x1d8] sm:$0xff] %v449
  %517 = vst [vmem:[#allocation2 + $0x1e0] sm:$0xff] %v292
  %518 = vst [vmem:[#allocation2 + $0x1e8] sm:$0xff] %v294
  %519 = vst [vmem:[#allocation2 + $0x1f0] sm:$0xff] %v453
  %520 = vst [vmem:[#allocation2 + $0x1f8] sm:$0xff] %v455
  %v521 = vld [vmem:[#allocation2] ss:$8 sm:$0xf]
  %s522 = scalar_lea.vmem [#allocation2], 32
  %v523 = vld [vmem:[%s522] ss:$8 sm:$0xf]
  %s524 = scalar_lea.vmem [#allocation2], 64
  %v525 = vld [vmem:[%s524] ss:$8 sm:$0xf]
  %s526 = scalar_lea.vmem [#allocation2], 96
  %v527 = vld [vmem:[%s526] ss:$8 sm:$0xf]
  %s528 = scalar_lea.vmem [#allocation2], 128
  %v529 = vld [vmem:[%s528] ss:$8 sm:$0xf]
  %s530 = scalar_lea.vmem [#allocation2], 160
  %v531 = vld [vmem:[%s530] ss:$8 sm:$0xf]
  %s532 = scalar_lea.vmem [#allocation2], 192
  %v533 = vld [vmem:[%s532] ss:$8 sm:$0xf]
  %s534 = scalar_lea.vmem [#allocation2], 224
  %v535 = vld [vmem:[%s534] ss:$8 sm:$0xf]
  %s536 = scalar_lea.vmem [#allocation2], 256
  %v537 = vld [vmem:[%s536] ss:$8 sm:$0xf]
  %s538 = scalar_lea.vmem [#allocation2], 288
  %v539 = vld [vmem:[%s538] ss:$8 sm:$0xf]
  %s540 = scalar_lea.vmem [#allocation2], 320
  %v541 = vld [vmem:[%s540] ss:$8 sm:$0xf]
  %s542 = scalar_lea.vmem [#allocation2], 352
  %v543 = vld [vmem:[%s542] ss:$8 sm:$0xf]
  %s544 = scalar_lea.vmem [#allocation2], 384
  %v545 = vld [vmem:[%s544] ss:$8 sm:$0xf]
  %s546 = scalar_lea.vmem [#allocation2], 416
  %v547 = vld [vmem:[%s546] ss:$8 sm:$0xf]
  %s548 = scalar_lea.vmem [#allocation2], 448
  %v549 = vld [vmem:[%s548] ss:$8 sm:$0xf]
  %s550 = scalar_lea.vmem [#allocation2], 480
  %v551 = vld [vmem:[%s550] ss:$8 sm:$0xf]
  %v552 = vld [vmem:[%s2] sm:$0xff]
  %v553 = vld [vmem:[%s2 + $0x8] sm:$0xff]
  %v554 = vld [vmem:[%s2 + $0x10] sm:$0xff]
  %v555 = vld [vmem:[%s2 + $0x18] sm:$0xff]
  %v556 = vld [vmem:[%s2 + $0x20] sm:$0xff]
  %v557 = vld [vmem:[%s2 + $0x28] sm:$0xff]
  %v558 = vld [vmem:[%s2 + $0x30] sm:$0xff]
  %v559 = vld [vmem:[%s2 + $0x38] sm:$0xff]
  %v560 = vld [vmem:[%s2 + $0x40] sm:$0xff]
  %v561 = vld [vmem:[%s2 + $0x48] sm:$0xff]
  %v562 = vld [vmem:[%s2 + $0x50] sm:$0xff]
  %v563 = vld [vmem:[%s2 + $0x58] sm:$0xff]
  %v564 = vld [vmem:[%s2 + $0x60] sm:$0xff]
  %v565 = vld [vmem:[%s2 + $0x68] sm:$0xff]
  %v566 = vld [vmem:[%s2 + $0x70] sm:$0xff]
  %v567 = vld [vmem:[%s2 + $0x78] sm:$0xff]
  %v568 = vld [vmem:[%s2 + $0x80] sm:$0xff]
  %v569 = vld [vmem:[%s2 + $0x88] sm:$0xff]
  %v570 = vld [vmem:[%s2 + $0x90] sm:$0xff]
  %v571 = vld [vmem:[%s2 + $0x98] sm:$0xff]
  %v572 = vld [vmem:[%s2 + $0xa0] sm:$0xff]
  %v573 = vld [vmem:[%s2 + $0xa8] sm:$0xff]
  %v574 = vld [vmem:[%s2 + $0xb0] sm:$0xff]
  %v575 = vld [vmem:[%s2 + $0xb8] sm:$0xff]
  %v576 = vld [vmem:[%s2 + $0xc0] sm:$0xff]
  %v577 = vld [vmem:[%s2 + $0xc8] sm:$0xff]
  %v578 = vld [vmem:[%s2 + $0xd0] sm:$0xff]
  %v579 = vld [vmem:[%s2 + $0xd8] sm:$0xff]
  %v580 = vld [vmem:[%s2 + $0xe0] sm:$0xff]
  %v581 = vld [vmem:[%s2 + $0xe8] sm:$0xff]
  %v582 = vld [vmem:[%s2 + $0xf0] sm:$0xff]
  %v583 = vld [vmem:[%s2 + $0xf8] sm:$0xff]
  %v584 = vld [vmem:[%s2 + $0x100] sm:$0xff]
  %v585 = vld [vmem:[%s2 + $0x108] sm:$0xff]
  %v586 = vld [vmem:[%s2 + $0x110] sm:$0xff]
  %v587 = vld [vmem:[%s2 + $0x118] sm:$0xff]
  %v588 = vld [vmem:[%s2 + $0x120] sm:$0xff]
  %v589 = vld [vmem:[%s2 + $0x128] sm:$0xff]
  %v590 = vld [vmem:[%s2 + $0x130] sm:$0xff]
  %v591 = vld [vmem:[%s2 + $0x138] sm:$0xff]
  %v592 = vld [vmem:[%s2 + $0x140] sm:$0xff]
  %v593 = vld [vmem:[%s2 + $0x148] sm:$0xff]
  %v594 = vld [vmem:[%s2 + $0x150] sm:$0xff]
  %v595 = vld [vmem:[%s2 + $0x158] sm:$0xff]
  %v596 = vld [vmem:[%s2 + $0x160] sm:$0xff]
  %v597 = vld [vmem:[%s2 + $0x168] sm:$0xff]
  %v598 = vld [vmem:[%s2 + $0x170] sm:$0xff]
  %v599 = vld [vmem:[%s2 + $0x178] sm:$0xff]
  %v600 = vld [vmem:[%s2 + $0x180] sm:$0xff]
  %v601 = vld [vmem:[%s2 + $0x188] sm:$0xff]
  %v602 = vld [vmem:[%s2 + $0x190] sm:$0xff]
  %v603 = vld [vmem:[%s2 + $0x198] sm:$0xff]
  %v604 = vld [vmem:[%s2 + $0x1a0] sm:$0xff]
  %v605 = vld [vmem:[%s2 + $0x1a8] sm:$0xff]
  %v606 = vld [vmem:[%s2 + $0x1b0] sm:$0xff]
  %v607 = vld [vmem:[%s2 + $0x1b8] sm:$0xff]
  %v608 = vld [vmem:[%s2 + $0x1c0] sm:$0xff]
  %v609 = vld [vmem:[%s2 + $0x1c8] sm:$0xff]
  %v610 = vld [vmem:[%s2 + $0x1d0] sm:$0xff]
  %v611 = vld [vmem:[%s2 + $0x1d8] sm:$0xff]
  %v612 = vld [vmem:[%s2 + $0x1e0] sm:$0xff]
  %v613 = vld [vmem:[%s2 + $0x1e8] sm:$0xff]
  %v614 = vld [vmem:[%s2 + $0x1f0] sm:$0xff]
  %v615 = vld [vmem:[%s2 + $0x1f8] sm:$0xff]
  %616 = vmatprep.subr.mxu0 %v613
  %617 = vmatpush1.msra.mxu0 %v612
  %618 = vmatprep.subr.mxu0 %v609
  %619 = vmatpush1.msra.mxu0 %v608
  %620 = vmatprep.subr.mxu0 %v605
  %621 = vmatpush1.msra.mxu0 %v604
  %622 = vmatprep.subr.mxu0 %v601
  %623 = vmatpush1.msra.mxu0 %v600
  %624 = vmatprep.subr.mxu0 %v597
  %625 = vmatpush1.msra.mxu0 %v596
  %626 = vmatprep.subr.mxu0 %v593
  %627 = vmatpush1.msra.mxu0 %v592
  %628 = vmatprep.subr.mxu0 %v589
  %629 = vmatpush1.msra.mxu0 %v588
  %630 = vmatprep.subr.mxu0 %v585
  %631 = vmatpush1.msra.mxu0 %v584
  %632 = vmatprep.subr.mxu0 %v581
  %633 = vmatpush1.msra.mxu0 %v580
  %634 = vmatprep.subr.mxu0 %v577
  %635 = vmatpush1.msra.mxu0 %v576
  %636 = vmatprep.subr.mxu0 %v573
  %637 = vmatpush1.msra.mxu0 %v572
  %638 = vmatprep.subr.mxu0 %v569
  %639 = vmatpush1.msra.mxu0 %v568
  %640 = vmatprep.subr.mxu0 %v565
  %641 = vmatpush1.msra.mxu0 %v564
  %642 = vmatprep.subr.mxu0 %v561
  %643 = vmatpush1.msra.mxu0 %v560
  %644 = vmatprep.subr.mxu0 %v557
  %645 = vmatpush1.msra.mxu0 %v556
  %646 = vmatprep.subr.mxu0 %v553
  %647 = vmatpush1.msra.mxu0 %v552
  %648 = vmatprep.subr.mxu0 0.0
  %649 = vmatpush2.msra.mxu0 0.0
  %650 = vmatprep.subr.mxu0 0.0
  %651 = vmatpush2.msra.mxu0 0.0
  %652 = vmatprep.subr.mxu0 0.0
  %653 = vmatpush2.msra.mxu0 0.0
  %654 = vmatprep.subr.mxu0 0.0
  %655 = vmatpush2.msra.mxu0 0.0
  %656 = vmatprep.subr.mxu0 0.0
  %657 = vmatpush2.msra.mxu0 0.0
  %658 = vmatprep.subr.mxu0 0.0
  %659 = vmatpush2.msra.mxu0 0.0
  %660 = vmatprep.subr.mxu0 0.0
  %661 = vmatpush2.msra.mxu0 0.0
  %662 = vmatprep.subr.mxu0 0.0
  %663 = vmatpush2.msra.mxu0 0.0
  %664 = vmatprep.subr.mxu0 0.0
  %665 = vmatpush2.msra.mxu0 0.0
  %666 = vmatprep.subr.mxu0 0.0
  %667 = vmatpush2.msra.mxu0 0.0
  %668 = vmatprep.subr.mxu0 0.0
  %669 = vmatpush2.msra.mxu0 0.0
  %670 = vmatprep.subr.mxu0 0.0
  %671 = vmatpush2.msra.mxu0 0.0
  %672 = vmatprep.subr.mxu0 0.0
  %673 = vmatpush2.msra.mxu0 0.0
  %674 = vmatprep.subr.mxu0 0.0
  %675 = vmatpush2.msra.mxu0 0.0
  %676 = vmatprep.subr.mxu0 0.0
  %677 = vmatpush2.msra.mxu0 0.0
  %678 = vmatprep.subr.mxu0 0.0
  %679 = vmatpush2.msra.mxu0 0.0
  %680 = vmatprep.mubr.f32.mxu0 0.0
  %681 = vmatmul.mubr.f32.gmra.mxu0 0.0
  %v682 = vpop.f32.mrf.mxu0
  %v683 = vadd.f32 0.0, %v682
  %v684 = vpop.f32.mrf.mxu0
  %v685 = vadd.f32 0.0, %v684
  %686 = vmatprep.mubr.f32.mxu0 0.0
  %687 = vmatmul.mubr.f32.gmra.mxu0 0.0
  %v688 = vpop.f32.mrf.mxu0
  %v689 = vadd.f32 0.0, %v688
  %v690 = vpop.f32.mrf.mxu0
  %v691 = vadd.f32 0.0, %v690
  %692 = vdwg.mxu0
  %693 = vmatprep.subr.mxu0 %v615
  %694 = vmatpush1.msra.mxu0 %v614
  %695 = vmatprep.subr.mxu0 %v611
  %696 = vmatpush1.msra.mxu0 %v610
  %697 = vmatprep.subr.mxu0 %v607
  %698 = vmatpush1.msra.mxu0 %v606
  %699 = vmatprep.subr.mxu0 %v603
  %700 = vmatpush1.msra.mxu0 %v602
  %701 = vmatprep.subr.mxu0 %v599
  %702 = vmatpush1.msra.mxu0 %v598
  %703 = vmatprep.subr.mxu0 %v595
  %704 = vmatpush1.msra.mxu0 %v594
  %705 = vmatprep.subr.mxu0 %v591
  %706 = vmatpush1.msra.mxu0 %v590
  %707 = vmatprep.subr.mxu0 %v587
  %708 = vmatpush1.msra.mxu0 %v586
  %709 = vmatprep.subr.mxu0 %v583
  %710 = vmatpush1.msra.mxu0 %v582
  %711 = vmatprep.subr.mxu0 %v579
  %712 = vmatpush1.msra.mxu0 %v578
  %713 = vmatprep.subr.mxu0 %v575
  %714 = vmatpush1.msra.mxu0 %v574
  %715 = vmatprep.subr.mxu0 %v571
  %716 = vmatpush1.msra.mxu0 %v570
  %717 = vmatprep.subr.mxu0 %v567
  %718 = vmatpush1.msra.mxu0 %v566
  %719 = vmatprep.subr.mxu0 %v563
  %720 = vmatpush1.msra.mxu0 %v562
  %721 = vmatprep.subr.mxu0 %v559
  %722 = vmatpush1.msra.mxu0 %v558
  %723 = vmatprep.subr.mxu0 %v555
  %724 = vmatpush1.msra.mxu0 %v554
  %725 = vmatprep.subr.mxu0 0.0
  %726 = vmatpush2.msra.mxu0 0.0
  %727 = vmatprep.subr.mxu0 0.0
  %728 = vmatpush2.msra.mxu0 0.0
  %729 = vmatprep.subr.mxu0 0.0
  %730 = vmatpush2.msra.mxu0 0.0
  %731 = vmatprep.subr.mxu0 0.0
  %732 = vmatpush2.msra.mxu0 0.0
  %733 = vmatprep.subr.mxu0 0.0
  %734 = vmatpush2.msra.mxu0 0.0
  %735 = vmatprep.subr.mxu0 0.0
  %736 = vmatpush2.msra.mxu0 0.0
  %737 = vmatprep.subr.mxu0 0.0
  %738 = vmatpush2.msra.mxu0 0.0
  %739 = vmatprep.subr.mxu0 0.0
  %740 = vmatpush2.msra.mxu0 0.0
  %741 = vmatprep.subr.mxu0 0.0
  %742 = vmatpush2.msra.mxu0 0.0
  %743 = vmatprep.subr.mxu0 0.0
  %744 = vmatpush2.msra.mxu0 0.0
  %745 = vmatprep.subr.mxu0 0.0
  %746 = vmatpush2.msra.mxu0 0.0
  %747 = vmatprep.subr.mxu0 0.0
  %748 = vmatpush2.msra.mxu0 0.0
  %749 = vmatprep.subr.mxu0 0.0
  %750 = vmatpush2.msra.mxu0 0.0
  %751 = vmatprep.subr.mxu0 0.0
  %752 = vmatpush2.msra.mxu0 0.0
  %753 = vmatprep.subr.mxu0 0.0
  %754 = vmatpush2.msra.mxu0 0.0
  %755 = vmatprep.subr.mxu0 0.0
  %756 = vmatpush2.msra.mxu0 0.0
  %757 = vmatprep.mubr.f32.mxu0 0.0
  %758 = vmatmul.mubr.f32.gmra.mxu0 0.0
  %v759 = vpop.f32.mrf.mxu0
  %v760 = vadd.f32 0.0, %v759
  %v761 = vpop.f32.mrf.mxu0
  %v762 = vadd.f32 0.0, %v761
  %763 = vmatprep.mubr.f32.mxu0 0.0
  %764 = vmatmul.mubr.f32.gmra.mxu0 0.0
  %v765 = vpop.f32.mrf.mxu0
  %v766 = vadd.f32 0.0, %v765
  %v767 = vpop.f32.mrf.mxu0
  %v768 = vadd.f32 0.0, %v767
  %769 = vdwg.mxu0
  %v778 = vcombine.low %v683, %v685
  %v779 = vcombine.high %v683, %v685
  %v780 = vcombine.low %v760, %v762
  %v781 = vcombine.high %v760, %v762
  %v783 = vunpack.c.l.s4 1966171168
  %v784 = vunpack.c.0.s8 %v783
  %v785 = vlaneseq
  %v786 = vshrl.u32 %v785, 7
  %v787 = vsub.s32 %v784, %v786
  %v788 = vrot.slane %v778, %v787
  %v790 = vunpack.c.l.s4 1966171168
  %v791 = vunpack.c.0.s8 %v790
  %v792 = vlaneseq
  %v793 = vshrl.u32 %v792, 7
  %v794 = vsub.s32 %v791, %v793
  %v795 = vrot.slane %v779, %v794
  %v797 = vunpack.c.l.s4 1966171168
  %v798 = vunpack.c.0.s8 %v797
  %v799 = vlaneseq
  %v800 = vshrl.u32 %v799, 7
  %v801 = vsub.s32 %v798, %v800
  %v802 = vrot.slane %v780, %v801
  %v804 = vunpack.c.l.s4 1966171168
  %v805 = vunpack.c.0.s8 %v804
  %v806 = vlaneseq
  %v807 = vshrl.u32 %v806, 7
  %v808 = vsub.s32 %v805, %v807
  %v809 = vrot.slane %v781, %v808
  %v810 = vcombine.low %v788, %v802
  %v811 = vcombine.high %v788, %v802
  %v812 = vcombine.low %v795, %v809
  %v813 = vcombine.high %v795, %v809
  %v815 = vunpack.c.l.s4 1966171168
  %v816 = vunpack.c.0.s8 %v815
  %v817 = vlaneseq
  %v818 = vshrl.u32 %v817, 7
  %v819 = vsub.s32 %v816, %v818
  %v820 = vrot.slane %v810, %v819
  %v822 = vunpack.c.l.s4 1966171168
  %v823 = vunpack.c.0.s8 %v822
  %v824 = vlaneseq
  %v825 = vshrl.u32 %v824, 7
  %v826 = vsub.s32 %v823, %v825
  %v827 = vrot.slane %v812, %v826
  %v829 = vunpack.c.l.s4 1966171168
  %v830 = vunpack.c.0.s8 %v829
  %v831 = vlaneseq
  %v832 = vshrl.u32 %v831, 7
  %v833 = vsub.s32 %v830, %v832
  %v834 = vrot.slane %v811, %v833
  %v836 = vunpack.c.l.s4 1966171168
  %v837 = vunpack.c.0.s8 %v836
  %v838 = vlaneseq
  %v839 = vshrl.u32 %v838, 7
  %v840 = vsub.s32 %v837, %v839
  %v841 = vrot.slane %v813, %v840
  %v842 = vcombine.high %v820, %v820
  %v843 = vcombine.high %v827, %v827
  %v844 = vcombine.high %v834, %v834
  %v845 = vcombine.high %v841, %v841
  %v846 = vcombine.low %v689, %v691
  %v847 = vcombine.high %v689, %v691
  %v848 = vcombine.low %v766, %v768
  %v849 = vcombine.high %v766, %v768
  %v851 = vunpack.c.l.s4 1966171168
  %v852 = vunpack.c.0.s8 %v851
  %v853 = vlaneseq
  %v854 = vshrl.u32 %v853, 7
  %v855 = vsub.s32 %v852, %v854
  %v856 = vrot.slane %v846, %v855
  %v858 = vunpack.c.l.s4 1966171168
  %v859 = vunpack.c.0.s8 %v858
  %v860 = vlaneseq
  %v861 = vshrl.u32 %v860, 7
  %v862 = vsub.s32 %v859, %v861
  %v863 = vrot.slane %v847, %v862
  %v865 = vunpack.c.l.s4 1966171168
  %v866 = vunpack.c.0.s8 %v865
  %v867 = vlaneseq
  %v868 = vshrl.u32 %v867, 7
  %v869 = vsub.s32 %v866, %v868
  %v870 = vrot.slane %v848, %v869
  %v872 = vunpack.c.l.s4 1966171168
  %v873 = vunpack.c.0.s8 %v872
  %v874 = vlaneseq
  %v875 = vshrl.u32 %v874, 7
  %v876 = vsub.s32 %v873, %v875
  %v877 = vrot.slane %v849, %v876
  %v878 = vcombine.low %v856, %v870
  %v879 = vcombine.high %v856, %v870
  %v880 = vcombine.low %v863, %v877
  %v881 = vcombine.high %v863, %v877
  %v883 = vunpack.c.l.s4 1966171168
  %v884 = vunpack.c.0.s8 %v883
  %v885 = vlaneseq
  %v886 = vshrl.u32 %v885, 7
  %v887 = vsub.s32 %v884, %v886
  %v888 = vrot.slane %v878, %v887
  %v890 = vunpack.c.l.s4 1966171168
  %v891 = vunpack.c.0.s8 %v890
  %v892 = vlaneseq
  %v893 = vshrl.u32 %v892, 7
  %v894 = vsub.s32 %v891, %v893
  %v895 = vrot.slane %v880, %v894
  %v897 = vunpack.c.l.s4 1966171168
  %v898 = vunpack.c.0.s8 %v897
  %v899 = vlaneseq
  %v900 = vshrl.u32 %v899, 7
  %v901 = vsub.s32 %v898, %v900
  %v902 = vrot.slane %v879, %v901
  %v904 = vunpack.c.l.s4 1966171168
  %v905 = vunpack.c.0.s8 %v904
  %v906 = vlaneseq
  %v907 = vshrl.u32 %v906, 7
  %v908 = vsub.s32 %v905, %v907
  %v909 = vrot.slane %v881, %v908
  %v910 = vcombine.high %v888, %v888
  %v911 = vcombine.high %v895, %v895
  %v912 = vcombine.high %v902, %v902
  %v913 = vcombine.high %v909, %v909
  %v930 = vadd.f32 %v521, %v820
  %v931 = vadd.f32 %v523, %v834
  %v932 = vadd.f32 %v525, %v842
  %v933 = vadd.f32 %v527, %v844
  %v934 = vadd.f32 %v529, %v827
  %v935 = vadd.f32 %v531, %v841
  %v936 = vadd.f32 %v533, %v843
  %v937 = vadd.f32 %v535, %v845
  %v938 = vadd.f32 %v537, %v888
  %v939 = vadd.f32 %v539, %v902
  %v940 = vadd.f32 %v541, %v910
  %v941 = vadd.f32 %v543, %v912
  %v942 = vadd.f32 %v545, %v895
  %v943 = vadd.f32 %v547, %v909
  %v944 = vadd.f32 %v549, %v911
  %v945 = vadd.f32 %v551, %v913
  %v946 = vxor.u32 %v930, 2147483648
  %v947 = vxor.u32 %v931, 2147483648
  %v948 = vxor.u32 %v932, 2147483648
  %v949 = vxor.u32 %v933, 2147483648
  %v950 = vxor.u32 %v934, 2147483648
  %v951 = vxor.u32 %v935, 2147483648
  %v952 = vxor.u32 %v936, 2147483648
  %v953 = vxor.u32 %v937, 2147483648
  %v954 = vxor.u32 %v938, 2147483648
  %v955 = vxor.u32 %v939, 2147483648
  %v956 = vxor.u32 %v940, 2147483648
  %v957 = vxor.u32 %v941, 2147483648
  %v958 = vxor.u32 %v942, 2147483648
  %v959 = vxor.u32 %v943, 2147483648
  %v960 = vxor.u32 %v944, 2147483648
  %v961 = vxor.u32 %v945, 2147483648
  %v962 = vmul.f32 %v946, 1.442695
  %v963 = vpow.pop %v962
  %v964 = vmul.f32 %v947, 1.442695
  %v965 = vpow.pop %v964
  %v966 = vmul.f32 %v948, 1.442695
  %v967 = vpow.pop %v966
  %v968 = vmul.f32 %v949, 1.442695
  %v969 = vpow.pop %v968
  %v970 = vmul.f32 %v950, 1.442695
  %v971 = vpow.pop %v970
  %v972 = vmul.f32 %v951, 1.442695
  %v973 = vpow.pop %v972
  %v974 = vmul.f32 %v952, 1.442695
  %v975 = vpow.pop %v974
  %v976 = vmul.f32 %v953, 1.442695
  %v977 = vpow.pop %v976
  %v978 = vmul.f32 %v954, 1.442695
  %v979 = vpow.pop %v978
  %v980 = vmul.f32 %v955, 1.442695
  %v981 = vpow.pop %v980
  %v982 = vmul.f32 %v956, 1.442695
  %v983 = vpow.pop %v982
  %v984 = vmul.f32 %v957, 1.442695
  %v985 = vpow.pop %v984
  %v986 = vmul.f32 %v958, 1.442695
  %v987 = vpow.pop %v986
  %v988 = vmul.f32 %v959, 1.442695
  %v989 = vpow.pop %v988
  %v990 = vmul.f32 %v960, 1.442695
  %v991 = vpow.pop %v990
  %v992 = vmul.f32 %v961, 1.442695
  %v993 = vpow.pop %v992
  %v994 = vadd.f32 %v963, 1.0
  %v995 = vadd.f32 %v965, 1.0
  %v996 = vadd.f32 %v967, 1.0
  %v997 = vadd.f32 %v969, 1.0
  %v998 = vadd.f32 %v971, 1.0
  %v999 = vadd.f32 %v973, 1.0
  %v1000 = vadd.f32 %v975, 1.0
  %v1001 = vadd.f32 %v977, 1.0
  %v1002 = vadd.f32 %v979, 1.0
  %v1003 = vadd.f32 %v981, 1.0
  %v1004 = vadd.f32 %v983, 1.0
  %v1005 = vadd.f32 %v985, 1.0
  %v1006 = vadd.f32 %v987, 1.0
  %v1007 = vadd.f32 %v989, 1.0
  %v1008 = vadd.f32 %v991, 1.0
  %v1009 = vadd.f32 %v993, 1.0
  %v1010 = vrcp.pop %v994
  %v1011 = vmul.f32 1.0, %v1010
  %v1012 = vrcp.pop %v995
  %v1013 = vmul.f32 1.0, %v1012
  %v1014 = vrcp.pop %v996
  %v1015 = vmul.f32 1.0, %v1014
  %v1016 = vrcp.pop %v997
  %v1017 = vmul.f32 1.0, %v1016
  %v1018 = vrcp.pop %v998
  %v1019 = vmul.f32 1.0, %v1018
  %v1020 = vrcp.pop %v999
  %v1021 = vmul.f32 1.0, %v1020
  %v1022 = vrcp.pop %v1000
  %v1023 = vmul.f32 1.0, %v1022
  %v1024 = vrcp.pop %v1001
  %v1025 = vmul.f32 1.0, %v1024
  %v1026 = vrcp.pop %v1002
  %v1027 = vmul.f32 1.0, %v1026
  %v1028 = vrcp.pop %v1003
  %v1029 = vmul.f32 1.0, %v1028
  %v1030 = vrcp.pop %v1004
  %v1031 = vmul.f32 1.0, %v1030
  %v1032 = vrcp.pop %v1005
  %v1033 = vmul.f32 1.0, %v1032
  %v1034 = vrcp.pop %v1006
  %v1035 = vmul.f32 1.0, %v1034
  %v1036 = vrcp.pop %v1007
  %v1037 = vmul.f32 1.0, %v1036
  %v1038 = vrcp.pop %v1008
  %v1039 = vmul.f32 1.0, %v1038
  %v1040 = vrcp.pop %v1009
  %v1041 = vmul.f32 1.0, %v1040
  %v1058 = vrot.slane %v930, 3
  %v1059 = vrot.slane %v931, 3
  %v1060 = vrot.slane %v932, 3
  %v1061 = vrot.slane %v933, 3
  %v1062 = vrot.slane %v934, 3
  %v1063 = vrot.slane %v935, 3
  %v1064 = vrot.slane %v936, 3
  %v1065 = vrot.slane %v937, 3
  %v1066 = vrot.slane %v938, 3
  %v1067 = vrot.slane %v939, 3
  %v1068 = vrot.slane %v940, 3
  %v1069 = vrot.slane %v941, 3
  %v1070 = vrot.slane %v942, 3
  %v1071 = vrot.slane %v943, 3
  %v1072 = vrot.slane %v944, 3
  %v1073 = vrot.slane %v945, 3
  %v1090 = vtanh.pop %v1058
  %v1091 = vtanh.pop %v1059
  %v1092 = vtanh.pop %v1060
  %v1093 = vtanh.pop %v1061
  %v1094 = vtanh.pop %v1062
  %v1095 = vtanh.pop %v1063
  %v1096 = vtanh.pop %v1064
  %v1097 = vtanh.pop %v1065
  %v1098 = vtanh.pop %v1066
  %v1099 = vtanh.pop %v1067
  %v1100 = vtanh.pop %v1068
  %v1101 = vtanh.pop %v1069
  %v1102 = vtanh.pop %v1070
  %v1103 = vtanh.pop %v1071
  %v1104 = vtanh.pop %v1072
  %v1105 = vtanh.pop %v1073
  %v1122 = vrot.slane %v1011, 1
  %v1123 = vrot.slane %v1013, 1
  %v1124 = vrot.slane %v1015, 1
  %v1125 = vrot.slane %v1017, 1
  %v1126 = vrot.slane %v1019, 1
  %v1127 = vrot.slane %v1021, 1
  %v1128 = vrot.slane %v1023, 1
  %v1129 = vrot.slane %v1025, 1
  %v1130 = vrot.slane %v1027, 1
  %v1131 = vrot.slane %v1029, 1
  %v1132 = vrot.slane %v1031, 1
  %v1133 = vrot.slane %v1033, 1
  %v1134 = vrot.slane %v1035, 1
  %v1135 = vrot.slane %v1037, 1
  %v1136 = vrot.slane %v1039, 1
  %v1137 = vrot.slane %v1041, 1
  %v1154 = vmul.f32 %v1122, 0.0
  %v1155 = vmul.f32 %v1123, 0.0
  %v1156 = vmul.f32 %v1124, 0.0
  %v1157 = vmul.f32 %v1125, 0.0
  %v1158 = vmul.f32 %v1126, 0.0
  %v1159 = vmul.f32 %v1127, 0.0
  %v1160 = vmul.f32 %v1128, 0.0
  %v1161 = vmul.f32 %v1129, 0.0
  %v1162 = vmul.f32 %v1130, 0.0
  %v1163 = vmul.f32 %v1131, 0.0
  %v1164 = vmul.f32 %v1132, 0.0
  %v1165 = vmul.f32 %v1133, 0.0
  %v1166 = vmul.f32 %v1134, 0.0
  %v1167 = vmul.f32 %v1135, 0.0
  %v1168 = vmul.f32 %v1136, 0.0
  %v1169 = vmul.f32 %v1137, 0.0
  %v1170 = vmul.f32 %v1011, %v1090
  %v1171 = vmul.f32 %v1013, %v1091
  %v1172 = vmul.f32 %v1015, %v1092
  %v1173 = vmul.f32 %v1017, %v1093
  %v1174 = vmul.f32 %v1019, %v1094
  %v1175 = vmul.f32 %v1021, %v1095
  %v1176 = vmul.f32 %v1023, %v1096
  %v1177 = vmul.f32 %v1025, %v1097
  %v1178 = vmul.f32 %v1027, %v1098
  %v1179 = vmul.f32 %v1029, %v1099
  %v1180 = vmul.f32 %v1031, %v1100
  %v1181 = vmul.f32 %v1033, %v1101
  %v1182 = vmul.f32 %v1035, %v1102
  %v1183 = vmul.f32 %v1037, %v1103
  %v1184 = vmul.f32 %v1039, %v1104
  %v1185 = vmul.f32 %v1041, %v1105
  %v1186 = vadd.f32 %v1154, %v1170
  %v1187 = vadd.f32 %v1155, %v1171
  %v1188 = vadd.f32 %v1156, %v1172
  %v1189 = vadd.f32 %v1157, %v1173
  %v1190 = vadd.f32 %v1158, %v1174
  %v1191 = vadd.f32 %v1159, %v1175
  %v1192 = vadd.f32 %v1160, %v1176
  %v1193 = vadd.f32 %v1161, %v1177
  %v1194 = vadd.f32 %v1162, %v1178
  %v1195 = vadd.f32 %v1163, %v1179
  %v1196 = vadd.f32 %v1164, %v1180
  %v1197 = vadd.f32 %v1165, %v1181
  %v1198 = vadd.f32 %v1166, %v1182
  %v1199 = vadd.f32 %v1167, %v1183
  %v1200 = vadd.f32 %v1168, %v1184
  %v1201 = vadd.f32 %v1169, %v1185
  %v1202 = vtanh.pop %v1186
  %v1203 = vtanh.pop %v1187
  %v1204 = vtanh.pop %v1188
  %v1205 = vtanh.pop %v1189
  %v1206 = vtanh.pop %v1190
  %v1207 = vtanh.pop %v1191
  %v1208 = vtanh.pop %v1192
  %v1209 = vtanh.pop %v1193
  %v1210 = vtanh.pop %v1194
  %v1211 = vtanh.pop %v1195
  %v1212 = vtanh.pop %v1196
  %v1213 = vtanh.pop %v1197
  %v1214 = vtanh.pop %v1198
  %v1215 = vtanh.pop %v1199
  %v1216 = vtanh.pop %v1200
  %v1217 = vtanh.pop %v1201
  %v1218 = vrot.slane %v1011, 2
  %v1219 = vrot.slane %v1013, 2
  %v1220 = vrot.slane %v1015, 2
  %v1221 = vrot.slane %v1017, 2
  %v1222 = vrot.slane %v1019, 2
  %v1223 = vrot.slane %v1021, 2
  %v1224 = vrot.slane %v1023, 2
  %v1225 = vrot.slane %v1025, 2
  %v1226 = vrot.slane %v1027, 2
  %v1227 = vrot.slane %v1029, 2
  %v1228 = vrot.slane %v1031, 2
  %v1229 = vrot.slane %v1033, 2
  %v1230 = vrot.slane %v1035, 2
  %v1231 = vrot.slane %v1037, 2
  %v1232 = vrot.slane %v1039, 2
  %v1233 = vrot.slane %v1041, 2
  %v1250 = vmul.f32 %v1218, %v1202
  %v1251 = vmul.f32 %v1219, %v1203
  %v1252 = vmul.f32 %v1220, %v1204
  %v1253 = vmul.f32 %v1221, %v1205
  %v1254 = vmul.f32 %v1222, %v1206
  %v1255 = vmul.f32 %v1223, %v1207
  %v1256 = vmul.f32 %v1224, %v1208
  %v1257 = vmul.f32 %v1225, %v1209
  %v1258 = vmul.f32 %v1226, %v1210
  %v1259 = vmul.f32 %v1227, %v1211
  %v1260 = vmul.f32 %v1228, %v1212
  %v1261 = vmul.f32 %v1229, %v1213
  %v1262 = vmul.f32 %v1230, %v1214
  %v1263 = vmul.f32 %v1231, %v1215
  %v1264 = vmul.f32 %v1232, %v1216
  %v1265 = vmul.f32 %v1233, %v1217
  %s1266 = scalar_lea.vmem [#allocation2], 1
  %v1267 = vld [vmem:[%s1266] ss:$8 sm:$0xf]
  %s1268 = scalar_lea.vmem [#allocation2], 33
  %v1269 = vld [vmem:[%s1268] ss:$8 sm:$0xf]
  %s1270 = scalar_lea.vmem [#allocation2], 65
  %v1271 = vld [vmem:[%s1270] ss:$8 sm:$0xf]
  %s1272 = scalar_lea.vmem [#allocation2], 97
  %v1273 = vld [vmem:[%s1272] ss:$8 sm:$0xf]
  %s1274 = scalar_lea.vmem [#allocation2], 129
  %v1275 = vld [vmem:[%s1274] ss:$8 sm:$0xf]
  %s1276 = scalar_lea.vmem [#allocation2], 161
  %v1277 = vld [vmem:[%s1276] ss:$8 sm:$0xf]
  %s1278 = scalar_lea.vmem [#allocation2], 193
  %v1279 = vld [vmem:[%s1278] ss:$8 sm:$0xf]
  %s1280 = scalar_lea.vmem [#allocation2], 225
  %v1281 = vld [vmem:[%s1280] ss:$8 sm:$0xf]
  %s1282 = scalar_lea.vmem [#allocation2], 257
  %v1283 = vld [vmem:[%s1282] ss:$8 sm:$0xf]
  %s1284 = scalar_lea.vmem [#allocation2], 289
  %v1285 = vld [vmem:[%s1284] ss:$8 sm:$0xf]
  %s1286 = scalar_lea.vmem [#allocation2], 321
  %v1287 = vld [vmem:[%s1286] ss:$8 sm:$0xf]
  %s1288 = scalar_lea.vmem [#allocation2], 353
  %v1289 = vld [vmem:[%s1288] ss:$8 sm:$0xf]
  %s1290 = scalar_lea.vmem [#allocation2], 385
  %v1291 = vld [vmem:[%s1290] ss:$8 sm:$0xf]
  %s1292 = scalar_lea.vmem [#allocation2], 417
  %v1293 = vld [vmem:[%s1292] ss:$8 sm:$0xf]
  %s1294 = scalar_lea.vmem [#allocation2], 449
  %v1295 = vld [vmem:[%s1294] ss:$8 sm:$0xf]
  %s1296 = scalar_lea.vmem [#allocation2], 481
  %v1297 = vld [vmem:[%s1296] ss:$8 sm:$0xf]
  %v1314 = vcombine.low %v1250, %v1251
  %v1315 = vcombine.low %v1252, %v1253
  %v1316 = vcombine.low %v1254, %v1255
  %v1317 = vcombine.low %v1256, %v1257
  %v1319 = vunpack.c.l.s4 1966171168
  %v1320 = vunpack.c.0.s8 %v1319
  %v1321 = vlaneseq
  %v1322 = vshrl.u32 %v1321, 7
  %v1323 = vsub.s32 %v1320, %v1322
  %v1324 = vrot.slane %v1314, %v1323
  %v1326 = vunpack.c.l.s4 1966171168
  %v1327 = vunpack.c.0.s8 %v1326
  %v1328 = vlaneseq
  %v1329 = vshrl.u32 %v1328, 7
  %v1330 = vsub.s32 %v1327, %v1329
  %v1331 = vrot.slane %v1315, %v1330
  %v1333 = vunpack.c.l.s4 1966171168
  %v1334 = vunpack.c.0.s8 %v1333
  %v1335 = vlaneseq
  %v1336 = vshrl.u32 %v1335, 7
  %v1337 = vsub.s32 %v1334, %v1336
  %v1338 = vrot.slane %v1316, %v1337
  %v1340 = vunpack.c.l.s4 1966171168
  %v1341 = vunpack.c.0.s8 %v1340
  %v1342 = vlaneseq
  %v1343 = vshrl.u32 %v1342, 7
  %v1344 = vsub.s32 %v1341, %v1343
  %v1345 = vrot.slane %v1317, %v1344
  %v1346 = vcombine.low %v1324, %v1331
  %v1347 = vcombine.low %v1338, %v1345
  %v1349 = vunpack.c.l.s4 1966171168
  %v1350 = vunpack.c.0.s8 %v1349
  %v1351 = vlaneseq
  %v1352 = vshrl.u32 %v1351, 7
  %v1353 = vsub.s32 %v1350, %v1352
  %v1354 = vrot.slane %v1346, %v1353
  %v1356 = vunpack.c.l.s4 1966171168
  %v1357 = vunpack.c.0.s8 %v1356
  %v1358 = vlaneseq
  %v1359 = vshrl.u32 %v1358, 7
  %v1360 = vsub.s32 %v1357, %v1359
  %v1361 = vrot.slane %v1347, %v1360
  %v1362 = vcombine.low %v1354, %v1361
  %v1363 = vcombine.low %v1258, %v1259
  %v1364 = vcombine.low %v1260, %v1261
  %v1365 = vcombine.low %v1262, %v1263
  %v1366 = vcombine.low %v1264, %v1265
  %v1368 = vunpack.c.l.s4 1966171168
  %v1369 = vunpack.c.0.s8 %v1368
  %v1370 = vlaneseq
  %v1371 = vshrl.u32 %v1370, 7
  %v1372 = vsub.s32 %v1369, %v1371
  %v1373 = vrot.slane %v1363, %v1372
  %v1375 = vunpack.c.l.s4 1966171168
  %v1376 = vunpack.c.0.s8 %v1375
  %v1377 = vlaneseq
  %v1378 = vshrl.u32 %v1377, 7
  %v1379 = vsub.s32 %v1376, %v1378
  %v1380 = vrot.slane %v1364, %v1379
  %v1382 = vunpack.c.l.s4 1966171168
  %v1383 = vunpack.c.0.s8 %v1382
  %v1384 = vlaneseq
  %v1385 = vshrl.u32 %v1384, 7
  %v1386 = vsub.s32 %v1383, %v1385
  %v1387 = vrot.slane %v1365, %v1386
  %v1389 = vunpack.c.l.s4 1966171168
  %v1390 = vunpack.c.0.s8 %v1389
  %v1391 = vlaneseq
  %v1392 = vshrl.u32 %v1391, 7
  %v1393 = vsub.s32 %v1390, %v1392
  %v1394 = vrot.slane %v1366, %v1393
  %v1395 = vcombine.low %v1373, %v1380
  %v1396 = vcombine.low %v1387, %v1394
  %v1398 = vunpack.c.l.s4 1966171168
  %v1399 = vunpack.c.0.s8 %v1398
  %v1400 = vlaneseq
  %v1401 = vshrl.u32 %v1400, 7
  %v1402 = vsub.s32 %v1399, %v1401
  %v1403 = vrot.slane %v1395, %v1402
  %v1405 = vunpack.c.l.s4 1966171168
  %v1406 = vunpack.c.0.s8 %v1405
  %v1407 = vlaneseq
  %v1408 = vshrl.u32 %v1407, 7
  %v1409 = vsub.s32 %v1406, %v1408
  %v1410 = vrot.slane %v1396, %v1409
  %v1411 = vcombine.low %v1403, %v1410
  %1414 = vmatprep.subr.mxu0 %v613
  %1415 = vmatpush1.msra.mxu0 %v612
  %1416 = vmatprep.subr.mxu0 %v609
  %1417 = vmatpush1.msra.mxu0 %v608
  %1418 = vmatprep.subr.mxu0 %v605
  %1419 = vmatpush1.msra.mxu0 %v604
  %1420 = vmatprep.subr.mxu0 %v601
  %1421 = vmatpush1.msra.mxu0 %v600
  %1422 = vmatprep.subr.mxu0 %v597
  %1423 = vmatpush1.msra.mxu0 %v596
  %1424 = vmatprep.subr.mxu0 %v593
  %1425 = vmatpush1.msra.mxu0 %v592
  %1426 = vmatprep.subr.mxu0 %v589
  %1427 = vmatpush1.msra.mxu0 %v588
  %1428 = vmatprep.subr.mxu0 %v585
  %1429 = vmatpush1.msra.mxu0 %v584
  %1430 = vmatprep.subr.mxu0 %v581
  %1431 = vmatpush1.msra.mxu0 %v580
  %1432 = vmatprep.subr.mxu0 %v577
  %1433 = vmatpush1.msra.mxu0 %v576
  %1434 = vmatprep.subr.mxu0 %v573
  %1435 = vmatpush1.msra.mxu0 %v572
  %1436 = vmatprep.subr.mxu0 %v569
  %1437 = vmatpush1.msra.mxu0 %v568
  %1438 = vmatprep.subr.mxu0 %v565
  %1439 = vmatpush1.msra.mxu0 %v564
  %1440 = vmatprep.subr.mxu0 %v561
  %1441 = vmatpush1.msra.mxu0 %v560
  %1442 = vmatprep.subr.mxu0 %v557
  %1443 = vmatpush1.msra.mxu0 %v556
  %1444 = vmatprep.subr.mxu0 %v553
  %1445 = vmatpush1.msra.mxu0 %v552
  %1446 = vmatprep.subr.mxu0 0.0
  %1447 = vmatpush2.msra.mxu0 0.0
  %1448 = vmatprep.subr.mxu0 0.0
  %1449 = vmatpush2.msra.mxu0 0.0
  %1450 = vmatprep.subr.mxu0 0.0
  %1451 = vmatpush2.msra.mxu0 0.0
  %1452 = vmatprep.subr.mxu0 0.0
  %1453 = vmatpush2.msra.mxu0 0.0
  %1454 = vmatprep.subr.mxu0 0.0
  %1455 = vmatpush2.msra.mxu0 0.0
  %1456 = vmatprep.subr.mxu0 0.0
  %1457 = vmatpush2.msra.mxu0 0.0
  %1458 = vmatprep.subr.mxu0 0.0
  %1459 = vmatpush2.msra.mxu0 0.0
  %1460 = vmatprep.subr.mxu0 0.0
  %1461 = vmatpush2.msra.mxu0 0.0
  %1462 = vmatprep.subr.mxu0 0.0
  %1463 = vmatpush2.msra.mxu0 0.0
  %1464 = vmatprep.subr.mxu0 0.0
  %1465 = vmatpush2.msra.mxu0 0.0
  %1466 = vmatprep.subr.mxu0 0.0
  %1467 = vmatpush2.msra.mxu0 0.0
  %1468 = vmatprep.subr.mxu0 0.0
  %1469 = vmatpush2.msra.mxu0 0.0
  %1470 = vmatprep.subr.mxu0 0.0
  %1471 = vmatpush2.msra.mxu0 0.0
  %1472 = vmatprep.subr.mxu0 0.0
  %1473 = vmatpush2.msra.mxu0 0.0
  %1474 = vmatprep.subr.mxu0 0.0
  %1475 = vmatpush2.msra.mxu0 0.0
  %1476 = vmatprep.subr.mxu0 0.0
  %1477 = vmatpush2.msra.mxu0 0.0
  %1478 = vmatprep.mubr.f32.mxu0 0.0
  %1479 = vmatmul.mubr.f32.gmra.mxu0 %v1362
  %v1480 = vpop.f32.mrf.mxu0
  %v1481 = vadd.f32 0.0, %v1480
  %v1482 = vpop.f32.mrf.mxu0
  %v1483 = vadd.f32 0.0, %v1482
  %1484 = vmatprep.mubr.f32.mxu0 0.0
  %1485 = vmatmul.mubr.f32.gmra.mxu0 %v1411
  %v1486 = vpop.f32.mrf.mxu0
  %v1487 = vadd.f32 0.0, %v1486
  %v1488 = vpop.f32.mrf.mxu0
  %v1489 = vadd.f32 0.0, %v1488
  %1490 = vdwg.mxu0
  %1491 = vmatprep.subr.mxu0 %v615
  %1492 = vmatpush1.msra.mxu0 %v614
  %1493 = vmatprep.subr.mxu0 %v611
  %1494 = vmatpush1.msra.mxu0 %v610
  %1495 = vmatprep.subr.mxu0 %v607
  %1496 = vmatpush1.msra.mxu0 %v606
  %1497 = vmatprep.subr.mxu0 %v603
  %1498 = vmatpush1.msra.mxu0 %v602
  %1499 = vmatprep.subr.mxu0 %v599
  %1500 = vmatpush1.msra.mxu0 %v598
  %1501 = vmatprep.subr.mxu0 %v595
  %1502 = vmatpush1.msra.mxu0 %v594
  %1503 = vmatprep.subr.mxu0 %v591
  %1504 = vmatpush1.msra.mxu0 %v590
  %1505 = vmatprep.subr.mxu0 %v587
  %1506 = vmatpush1.msra.mxu0 %v586
  %1507 = vmatprep.subr.mxu0 %v583
  %1508 = vmatpush1.msra.mxu0 %v582
  %1509 = vmatprep.subr.mxu0 %v579
  %1510 = vmatpush1.msra.mxu0 %v578
  %1511 = vmatprep.subr.mxu0 %v575
  %1512 = vmatpush1.msra.mxu0 %v574
  %1513 = vmatprep.subr.mxu0 %v571
  %1514 = vmatpush1.msra.mxu0 %v570
  %1515 = vmatprep.subr.mxu0 %v567
  %1516 = vmatpush1.msra.mxu0 %v566
  %1517 = vmatprep.subr.mxu0 %v563
  %1518 = vmatpush1.msra.mxu0 %v562
  %1519 = vmatprep.subr.mxu0 %v559
  %1520 = vmatpush1.msra.mxu0 %v558
  %1521 = vmatprep.subr.mxu0 %v555
  %1522 = vmatpush1.msra.mxu0 %v554
  %1523 = vmatprep.subr.mxu0 0.0
  %1524 = vmatpush2.msra.mxu0 0.0
  %1525 = vmatprep.subr.mxu0 0.0
  %1526 = vmatpush2.msra.mxu0 0.0
  %1527 = vmatprep.subr.mxu0 0.0
  %1528 = vmatpush2.msra.mxu0 0.0
  %1529 = vmatprep.subr.mxu0 0.0
  %1530 = vmatpush2.msra.mxu0 0.0
  %1531 = vmatprep.subr.mxu0 0.0
  %1532 = vmatpush2.msra.mxu0 0.0
  %1533 = vmatprep.subr.mxu0 0.0
  %1534 = vmatpush2.msra.mxu0 0.0
  %1535 = vmatprep.subr.mxu0 0.0
  %1536 = vmatpush2.msra.mxu0 0.0
  %1537 = vmatprep.subr.mxu0 0.0
  %1538 = vmatpush2.msra.mxu0 0.0
  %1539 = vmatprep.subr.mxu0 0.0
  %1540 = vmatpush2.msra.mxu0 0.0
  %1541 = vmatprep.subr.mxu0 0.0
  %1542 = vmatpush2.msra.mxu0 0.0
  %1543 = vmatprep.subr.mxu0 0.0
  %1544 = vmatpush2.msra.mxu0 0.0
  %1545 = vmatprep.subr.mxu0 0.0
  %1546 = vmatpush2.msra.mxu0 0.0
  %1547 = vmatprep.subr.mxu0 0.0
  %1548 = vmatpush2.msra.mxu0 0.0
  %1549 = vmatprep.subr.mxu0 0.0
  %1550 = vmatpush2.msra.mxu0 0.0
  %1551 = vmatprep.subr.mxu0 0.0
  %1552 = vmatpush2.msra.mxu0 0.0
  %1553 = vmatprep.subr.mxu0 0.0
  %1554 = vmatpush2.msra.mxu0 0.0
  %1555 = vmatprep.mubr.f32.mxu0 0.0
  %1556 = vmatmul.mubr.f32.gmra.mxu0 %v1362
  %v1557 = vpop.f32.mrf.mxu0
  %v1558 = vadd.f32 0.0, %v1557
  %v1559 = vpop.f32.mrf.mxu0
  %v1560 = vadd.f32 0.0, %v1559
  %1561 = vmatprep.mubr.f32.mxu0 0.0
  %1562 = vmatmul.mubr.f32.gmra.mxu0 %v1411
  %v1563 = vpop.f32.mrf.mxu0
  %v1564 = vadd.f32 0.0, %v1563
  %v1565 = vpop.f32.mrf.mxu0
  %v1566 = vadd.f32 0.0, %v1565
  %1567 = vdwg.mxu0
  %v1576 = vcombine.low %v1481, %v1483
  %v1577 = vcombine.high %v1481, %v1483
  %v1578 = vcombine.low %v1558, %v1560
  %v1579 = vcombine.high %v1558, %v1560
  %v1581 = vunpack.c.l.s4 1966171168
  %v1582 = vunpack.c.0.s8 %v1581
  %v1583 = vlaneseq
  %v1584 = vshrl.u32 %v1583, 7
  %v1585 = vsub.s32 %v1582, %v1584
  %v1586 = vrot.slane %v1576, %v1585
  %v1588 = vunpack.c.l.s4 1966171168
  %v1589 = vunpack.c.0.s8 %v1588
  %v1590 = vlaneseq
  %v1591 = vshrl.u32 %v1590, 7
  %v1592 = vsub.s32 %v1589, %v1591
  %v1593 = vrot.slane %v1577, %v1592
  %v1595 = vunpack.c.l.s4 1966171168
  %v1596 = vunpack.c.0.s8 %v1595
  %v1597 = vlaneseq
  %v1598 = vshrl.u32 %v1597, 7
  %v1599 = vsub.s32 %v1596, %v1598
  %v1600 = vrot.slane %v1578, %v1599
  %v1602 = vunpack.c.l.s4 1966171168
  %v1603 = vunpack.c.0.s8 %v1602
  %v1604 = vlaneseq
  %v1605 = vshrl.u32 %v1604, 7
  %v1606 = vsub.s32 %v1603, %v1605
  %v1607 = vrot.slane %v1579, %v1606
  %v1608 = vcombine.low %v1586, %v1600
  %v1609 = vcombine.high %v1586, %v1600
  %v1610 = vcombine.low %v1593, %v1607
  %v1611 = vcombine.high %v1593, %v1607
  %v1613 = vunpack.c.l.s4 1966171168
  %v1614 = vunpack.c.0.s8 %v1613
  %v1615 = vlaneseq
  %v1616 = vshrl.u32 %v1615, 7
  %v1617 = vsub.s32 %v1614, %v1616
  %v1618 = vrot.slane %v1608, %v1617
  %v1620 = vunpack.c.l.s4 1966171168
  %v1621 = vunpack.c.0.s8 %v1620
  %v1622 = vlaneseq
  %v1623 = vshrl.u32 %v1622, 7
  %v1624 = vsub.s32 %v1621, %v1623
  %v1625 = vrot.slane %v1610, %v1624
  %v1627 = vunpack.c.l.s4 1966171168
  %v1628 = vunpack.c.0.s8 %v1627
  %v1629 = vlaneseq
  %v1630 = vshrl.u32 %v1629, 7
  %v1631 = vsub.s32 %v1628, %v1630
  %v1632 = vrot.slane %v1609, %v1631
  %v1634 = vunpack.c.l.s4 1966171168
  %v1635 = vunpack.c.0.s8 %v1634
  %v1636 = vlaneseq
  %v1637 = vshrl.u32 %v1636, 7
  %v1638 = vsub.s32 %v1635, %v1637
  %v1639 = vrot.slane %v1611, %v1638
  %v1640 = vcombine.high %v1618, %v1618
  %v1641 = vcombine.high %v1625, %v1625
  %v1642 = vcombine.high %v1632, %v1632
  %v1643 = vcombine.high %v1639, %v1639
  %v1644 = vcombine.low %v1487, %v1489
  %v1645 = vcombine.high %v1487, %v1489
  %v1646 = vcombine.low %v1564, %v1566
  %v1647 = vcombine.high %v1564, %v1566
  %v1649 = vunpack.c.l.s4 1966171168
  %v1650 = vunpack.c.0.s8 %v1649
  %v1651 = vlaneseq
  %v1652 = vshrl.u32 %v1651, 7
  %v1653 = vsub.s32 %v1650, %v1652
  %v1654 = vrot.slane %v1644, %v1653
  %v1656 = vunpack.c.l.s4 1966171168
  %v1657 = vunpack.c.0.s8 %v1656
  %v1658 = vlaneseq
  %v1659 = vshrl.u32 %v1658, 7
  %v1660 = vsub.s32 %v1657, %v1659
  %v1661 = vrot.slane %v1645, %v1660
  %v1663 = vunpack.c.l.s4 1966171168
  %v1664 = vunpack.c.0.s8 %v1663
  %v1665 = vlaneseq
  %v1666 = vshrl.u32 %v1665, 7
  %v1667 = vsub.s32 %v1664, %v1666
  %v1668 = vrot.slane %v1646, %v1667
  %v1670 = vunpack.c.l.s4 1966171168
  %v1671 = vunpack.c.0.s8 %v1670
  %v1672 = vlaneseq
  %v1673 = vshrl.u32 %v1672, 7
  %v1674 = vsub.s32 %v1671, %v1673
  %v1675 = vrot.slane %v1647, %v1674
  %v1676 = vcombine.low %v1654, %v1668
  %v1677 = vcombine.high %v1654, %v1668
  %v1678 = vcombine.low %v1661, %v1675
  %v1679 = vcombine.high %v1661, %v1675
  %v1681 = vunpack.c.l.s4 1966171168
  %v1682 = vunpack.c.0.s8 %v1681
  %v1683 = vlaneseq
  %v1684 = vshrl.u32 %v1683, 7
  %v1685 = vsub.s32 %v1682, %v1684
  %v1686 = vrot.slane %v1676, %v1685
  %v1688 = vunpack.c.l.s4 1966171168
  %v1689 = vunpack.c.0.s8 %v1688
  %v1690 = vlaneseq
  %v1691 = vshrl.u32 %v1690, 7
  %v1692 = vsub.s32 %v1689, %v1691
  %v1693 = vrot.slane %v1678, %v1692
  %v1695 = vunpack.c.l.s4 1966171168
  %v1696 = vunpack.c.0.s8 %v1695
  %v1697 = vlaneseq
  %v1698 = vshrl.u32 %v1697, 7
  %v1699 = vsub.s32 %v1696, %v1698
  %v1700 = vrot.slane %v1677, %v1699
  %v1702 = vunpack.c.l.s4 1966171168
  %v1703 = vunpack.c.0.s8 %v1702
  %v1704 = vlaneseq
  %v1705 = vshrl.u32 %v1704, 7
  %v1706 = vsub.s32 %v1703, %v1705
  %v1707 = vrot.slane %v1679, %v1706
  %v1708 = vcombine.high %v1686, %v1686
  %v1709 = vcombine.high %v1693, %v1693
  %v1710 = vcombine.high %v1700, %v1700
  %v1711 = vcombine.high %v1707, %v1707
  %v1728 = vadd.f32 %v1267, %v1618
  %v1729 = vadd.f32 %v1269, %v1632
  %v1730 = vadd.f32 %v1271, %v1640
  %v1731 = vadd.f32 %v1273, %v1642
  %v1732 = vadd.f32 %v1275, %v1625
  %v1733 = vadd.f32 %v1277, %v1639
  %v1734 = vadd.f32 %v1279, %v1641
  %v1735 = vadd.f32 %v1281, %v1643
  %v1736 = vadd.f32 %v1283, %v1686
  %v1737 = vadd.f32 %v1285, %v1700
  %v1738 = vadd.f32 %v1287, %v1708
  %v1739 = vadd.f32 %v1289, %v1710
  %v1740 = vadd.f32 %v1291, %v1693
  %v1741 = vadd.f32 %v1293, %v1707
  %v1742 = vadd.f32 %v1295, %v1709
  %v1743 = vadd.f32 %v1297, %v1711
  %v1744 = vxor.u32 %v1728, 2147483648
  %v1745 = vxor.u32 %v1729, 2147483648
  %v1746 = vxor.u32 %v1730, 2147483648
  %v1747 = vxor.u32 %v1731, 2147483648
  %v1748 = vxor.u32 %v1732, 2147483648
  %v1749 = vxor.u32 %v1733, 2147483648
  %v1750 = vxor.u32 %v1734, 2147483648
  %v1751 = vxor.u32 %v1735, 2147483648
  %v1752 = vxor.u32 %v1736, 2147483648
  %v1753 = vxor.u32 %v1737, 2147483648
  %v1754 = vxor.u32 %v1738, 2147483648
  %v1755 = vxor.u32 %v1739, 2147483648
  %v1756 = vxor.u32 %v1740, 2147483648
  %v1757 = vxor.u32 %v1741, 2147483648
  %v1758 = vxor.u32 %v1742, 2147483648
  %v1759 = vxor.u32 %v1743, 2147483648
  %v1760 = vmul.f32 %v1744, 1.442695
  %v1761 = vpow.pop %v1760
  %v1762 = vmul.f32 %v1745, 1.442695
  %v1763 = vpow.pop %v1762
  %v1764 = vmul.f32 %v1746, 1.442695
  %v1765 = vpow.pop %v1764
  %v1766 = vmul.f32 %v1747, 1.442695
  %v1767 = vpow.pop %v1766
  %v1768 = vmul.f32 %v1748, 1.442695
  %v1769 = vpow.pop %v1768
  %v1770 = vmul.f32 %v1749, 1.442695
  %v1771 = vpow.pop %v1770
  %v1772 = vmul.f32 %v1750, 1.442695
  %v1773 = vpow.pop %v1772
  %v1774 = vmul.f32 %v1751, 1.442695
  %v1775 = vpow.pop %v1774
  %v1776 = vmul.f32 %v1752, 1.442695
  %v1777 = vpow.pop %v1776
  %v1778 = vmul.f32 %v1753, 1.442695
  %v1779 = vpow.pop %v1778
  %v1780 = vmul.f32 %v1754, 1.442695
  %v1781 = vpow.pop %v1780
  %v1782 = vmul.f32 %v1755, 1.442695
  %v1783 = vpow.pop %v1782
  %v1784 = vmul.f32 %v1756, 1.442695
  %v1785 = vpow.pop %v1784
  %v1786 = vmul.f32 %v1757, 1.442695
  %v1787 = vpow.pop %v1786
  %v1788 = vmul.f32 %v1758, 1.442695
  %v1789 = vpow.pop %v1788
  %v1790 = vmul.f32 %v1759, 1.442695
  %v1791 = vpow.pop %v1790
  %v1792 = vadd.f32 %v1761, 1.0
  %v1793 = vadd.f32 %v1763, 1.0
  %v1794 = vadd.f32 %v1765, 1.0
  %v1795 = vadd.f32 %v1767, 1.0
  %v1796 = vadd.f32 %v1769, 1.0
  %v1797 = vadd.f32 %v1771, 1.0
  %v1798 = vadd.f32 %v1773, 1.0
  %v1799 = vadd.f32 %v1775, 1.0
  %v1800 = vadd.f32 %v1777, 1.0
  %v1801 = vadd.f32 %v1779, 1.0
  %v1802 = vadd.f32 %v1781, 1.0
  %v1803 = vadd.f32 %v1783, 1.0
  %v1804 = vadd.f32 %v1785, 1.0
  %v1805 = vadd.f32 %v1787, 1.0
  %v1806 = vadd.f32 %v1789, 1.0
  %v1807 = vadd.f32 %v1791, 1.0
  %v1808 = vrcp.pop %v1792
  %v1809 = vmul.f32 1.0, %v1808
  %v1810 = vrcp.pop %v1793
  %v1811 = vmul.f32 1.0, %v1810
  %v1812 = vrcp.pop %v1794
  %v1813 = vmul.f32 1.0, %v1812
  %v1814 = vrcp.pop %v1795
  %v1815 = vmul.f32 1.0, %v1814
  %v1816 = vrcp.pop %v1796
  %v1817 = vmul.f32 1.0, %v1816
  %v1818 = vrcp.pop %v1797
  %v1819 = vmul.f32 1.0, %v1818
  %v1820 = vrcp.pop %v1798
  %v1821 = vmul.f32 1.0, %v1820
  %v1822 = vrcp.pop %v1799
  %v1823 = vmul.f32 1.0, %v1822
  %v1824 = vrcp.pop %v1800
  %v1825 = vmul.f32 1.0, %v1824
  %v1826 = vrcp.pop %v1801
  %v1827 = vmul.f32 1.0, %v1826
  %v1828 = vrcp.pop %v1802
  %v1829 = vmul.f32 1.0, %v1828
  %v1830 = vrcp.pop %v1803
  %v1831 = vmul.f32 1.0, %v1830
  %v1832 = vrcp.pop %v1804
  %v1833 = vmul.f32 1.0, %v1832
  %v1834 = vrcp.pop %v1805
  %v1835 = vmul.f32 1.0, %v1834
  %v1836 = vrcp.pop %v1806
  %v1837 = vmul.f32 1.0, %v1836
  %v1838 = vrcp.pop %v1807
  %v1839 = vmul.f32 1.0, %v1838
  %v1856 = vrot.slane %v1728, 3
  %v1857 = vrot.slane %v1729, 3
  %v1858 = vrot.slane %v1730, 3
  %v1859 = vrot.slane %v1731, 3
  %v1860 = vrot.slane %v1732, 3
  %v1861 = vrot.slane %v1733, 3
  %v1862 = vrot.slane %v1734, 3
  %v1863 = vrot.slane %v1735, 3
  %v1864 = vrot.slane %v1736, 3
  %v1865 = vrot.slane %v1737, 3
  %v1866 = vrot.slane %v1738, 3
  %v1867 = vrot.slane %v1739, 3
  %v1868 = vrot.slane %v1740, 3
  %v1869 = vrot.slane %v1741, 3
  %v1870 = vrot.slane %v1742, 3
  %v1871 = vrot.slane %v1743, 3
  %v1888 = vtanh.pop %v1856
  %v1889 = vtanh.pop %v1857
  %v1890 = vtanh.pop %v1858
  %v1891 = vtanh.pop %v1859
  %v1892 = vtanh.pop %v1860
  %v1893 = vtanh.pop %v1861
  %v1894 = vtanh.pop %v1862
  %v1895 = vtanh.pop %v1863
  %v1896 = vtanh.pop %v1864
  %v1897 = vtanh.pop %v1865
  %v1898 = vtanh.pop %v1866
  %v1899 = vtanh.pop %v1867
  %v1900 = vtanh.pop %v1868
  %v1901 = vtanh.pop %v1869
  %v1902 = vtanh.pop %v1870
  %v1903 = vtanh.pop %v1871
  %v1920 = vrot.slane %v1809, 1
  %v1921 = vrot.slane %v1811, 1
  %v1922 = vrot.slane %v1813, 1
  %v1923 = vrot.slane %v1815, 1
  %v1924 = vrot.slane %v1817, 1
  %v1925 = vrot.slane %v1819, 1
  %v1926 = vrot.slane %v1821, 1
  %v1927 = vrot.slane %v1823, 1
  %v1928 = vrot.slane %v1825, 1
  %v1929 = vrot.slane %v1827, 1
  %v1930 = vrot.slane %v1829, 1
  %v1931 = vrot.slane %v1831, 1
  %v1932 = vrot.slane %v1833, 1
  %v1933 = vrot.slane %v1835, 1
  %v1934 = vrot.slane %v1837, 1
  %v1935 = vrot.slane %v1839, 1
  %v1952 = vmul.f32 %v1920, %v1186
  %v1953 = vmul.f32 %v1921, %v1187
  %v1954 = vmul.f32 %v1922, %v1188
  %v1955 = vmul.f32 %v1923, %v1189
  %v1956 = vmul.f32 %v1924, %v1190
  %v1957 = vmul.f32 %v1925, %v1191
  %v1958 = vmul.f32 %v1926, %v1192
  %v1959 = vmul.f32 %v1927, %v1193
  %v1960 = vmul.f32 %v1928, %v1194
  %v1961 = vmul.f32 %v1929, %v1195
  %v1962 = vmul.f32 %v1930, %v1196
  %v1963 = vmul.f32 %v1931, %v1197
  %v1964 = vmul.f32 %v1932, %v1198
  %v1965 = vmul.f32 %v1933, %v1199
  %v1966 = vmul.f32 %v1934, %v1200
  %v1967 = vmul.f32 %v1935, %v1201
  %v1968 = vmul.f32 %v1809, %v1888
  %v1969 = vmul.f32 %v1811, %v1889
  %v1970 = vmul.f32 %v1813, %v1890
  %v1971 = vmul.f32 %v1815, %v1891
  %v1972 = vmul.f32 %v1817, %v1892
  %v1973 = vmul.f32 %v1819, %v1893
  %v1974 = vmul.f32 %v1821, %v1894
  %v1975 = vmul.f32 %v1823, %v1895
  %v1976 = vmul.f32 %v1825, %v1896
  %v1977 = vmul.f32 %v1827, %v1897
  %v1978 = vmul.f32 %v1829, %v1898
  %v1979 = vmul.f32 %v1831, %v1899
  %v1980 = vmul.f32 %v1833, %v1900
  %v1981 = vmul.f32 %v1835, %v1901
  %v1982 = vmul.f32 %v1837, %v1902
  %v1983 = vmul.f32 %v1839, %v1903
  %v1984 = vadd.f32 %v1952, %v1968
  %v1985 = vadd.f32 %v1953, %v1969
  %v1986 = vadd.f32 %v1954, %v1970
  %v1987 = vadd.f32 %v1955, %v1971
  %v1988 = vadd.f32 %v1956, %v1972
  %v1989 = vadd.f32 %v1957, %v1973
  %v1990 = vadd.f32 %v1958, %v1974
  %v1991 = vadd.f32 %v1959, %v1975
  %v1992 = vadd.f32 %v1960, %v1976
  %v1993 = vadd.f32 %v1961, %v1977
  %v1994 = vadd.f32 %v1962, %v1978
  %v1995 = vadd.f32 %v1963, %v1979
  %v1996 = vadd.f32 %v1964, %v1980
  %v1997 = vadd.f32 %v1965, %v1981
  %v1998 = vadd.f32 %v1966, %v1982
  %v1999 = vadd.f32 %v1967, %v1983
  %v2000 = vtanh.pop %v1984
  %v2001 = vtanh.pop %v1985
  %v2002 = vtanh.pop %v1986
  %v2003 = vtanh.pop %v1987
  %v2004 = vtanh.pop %v1988
  %v2005 = vtanh.pop %v1989
  %v2006 = vtanh.pop %v1990
  %v2007 = vtanh.pop %v1991
  %v2008 = vtanh.pop %v1992
  %v2009 = vtanh.pop %v1993
  %v2010 = vtanh.pop %v1994
  %v2011 = vtanh.pop %v1995
  %v2012 = vtanh.pop %v1996
  %v2013 = vtanh.pop %v1997
  %v2014 = vtanh.pop %v1998
  %v2015 = vtanh.pop %v1999
  %v2016 = vrot.slane %v1809, 2
  %v2017 = vrot.slane %v1811, 2
  %v2018 = vrot.slane %v1813, 2
  %v2019 = vrot.slane %v1815, 2
  %v2020 = vrot.slane %v1817, 2
  %v2021 = vrot.slane %v1819, 2
  %v2022 = vrot.slane %v1821, 2
  %v2023 = vrot.slane %v1823, 2
  %v2024 = vrot.slane %v1825, 2
  %v2025 = vrot.slane %v1827, 2
  %v2026 = vrot.slane %v1829, 2
  %v2027 = vrot.slane %v1831, 2
  %v2028 = vrot.slane %v1833, 2
  %v2029 = vrot.slane %v1835, 2
  %v2030 = vrot.slane %v1837, 2
  %v2031 = vrot.slane %v1839, 2
  %v2048 = vmul.f32 %v2016, %v2000
  %v2049 = vmul.f32 %v2017, %v2001
  %v2050 = vmul.f32 %v2018, %v2002
  %v2051 = vmul.f32 %v2019, %v2003
  %v2052 = vmul.f32 %v2020, %v2004
  %v2053 = vmul.f32 %v2021, %v2005
  %v2054 = vmul.f32 %v2022, %v2006
  %v2055 = vmul.f32 %v2023, %v2007
  %v2056 = vmul.f32 %v2024, %v2008
  %v2057 = vmul.f32 %v2025, %v2009
  %v2058 = vmul.f32 %v2026, %v2010
  %v2059 = vmul.f32 %v2027, %v2011
  %v2060 = vmul.f32 %v2028, %v2012
  %v2061 = vmul.f32 %v2029, %v2013
  %v2062 = vmul.f32 %v2030, %v2014
  %v2063 = vmul.f32 %v2031, %v2015
  %s2064 = scalar_lea.vmem [#allocation2], 2
  %v2065 = vld [vmem:[%s2064] ss:$8 sm:$0xf]
  %s2066 = scalar_lea.vmem [#allocation2], 34
  %v2067 = vld [vmem:[%s2066] ss:$8 sm:$0xf]
  %s2068 = scalar_lea.vmem [#allocation2], 66
  %v2069 = vld [vmem:[%s2068] ss:$8 sm:$0xf]
  %s2070 = scalar_lea.vmem [#allocation2], 98
  %v2071 = vld [vmem:[%s2070] ss:$8 sm:$0xf]
  %s2072 = scalar_lea.vmem [#allocation2], 130
  %v2073 = vld [vmem:[%s2072] ss:$8 sm:$0xf]
  %s2074 = scalar_lea.vmem [#allocation2], 162
  %v2075 = vld [vmem:[%s2074] ss:$8 sm:$0xf]
  %s2076 = scalar_lea.vmem [#allocation2], 194
  %v2077 = vld [vmem:[%s2076] ss:$8 sm:$0xf]
  %s2078 = scalar_lea.vmem [#allocation2], 226
  %v2079 = vld [vmem:[%s2078] ss:$8 sm:$0xf]
  %s2080 = scalar_lea.vmem [#allocation2], 258
  %v2081 = vld [vmem:[%s2080] ss:$8 sm:$0xf]
  %s2082 = scalar_lea.vmem [#allocation2], 290
  %v2083 = vld [vmem:[%s2082] ss:$8 sm:$0xf]
  %s2084 = scalar_lea.vmem [#allocation2], 322
  %v2085 = vld [vmem:[%s2084] ss:$8 sm:$0xf]
  %s2086 = scalar_lea.vmem [#allocation2], 354
  %v2087 = vld [vmem:[%s2086] ss:$8 sm:$0xf]
  %s2088 = scalar_lea.vmem [#allocation2], 386
  %v2089 = vld [vmem:[%s2088] ss:$8 sm:$0xf]
  %s2090 = scalar_lea.vmem [#allocation2], 418
  %v2091 = vld [vmem:[%s2090] ss:$8 sm:$0xf]
  %s2092 = scalar_lea.vmem [#allocation2], 450
  %v2093 = vld [vmem:[%s2092] ss:$8 sm:$0xf]
  %s2094 = scalar_lea.vmem [#allocation2], 482
  %v2095 = vld [vmem:[%s2094] ss:$8 sm:$0xf]
  %v2112 = vcombine.low %v2048, %v2049
  %v2113 = vcombine.low %v2050, %v2051
  %v2114 = vcombine.low %v2052, %v2053
  %v2115 = vcombine.low %v2054, %v2055
  %v2117 = vunpack.c.l.s4 1966171168
  %v2118 = vunpack.c.0.s8 %v2117
  %v2119 = vlaneseq
  %v2120 = vshrl.u32 %v2119, 7
  %v2121 = vsub.s32 %v2118, %v2120
  %v2122 = vrot.slane %v2112, %v2121
  %v2124 = vunpack.c.l.s4 1966171168
  %v2125 = vunpack.c.0.s8 %v2124
  %v2126 = vlaneseq
  %v2127 = vshrl.u32 %v2126, 7
  %v2128 = vsub.s32 %v2125, %v2127
  %v2129 = vrot.slane %v2113, %v2128
  %v2131 = vunpack.c.l.s4 1966171168
  %v2132 = vunpack.c.0.s8 %v2131
  %v2133 = vlaneseq
  %v2134 = vshrl.u32 %v2133, 7
  %v2135 = vsub.s32 %v2132, %v2134
  %v2136 = vrot.slane %v2114, %v2135
  %v2138 = vunpack.c.l.s4 1966171168
  %v2139 = vunpack.c.0.s8 %v2138
  %v2140 = vlaneseq
  %v2141 = vshrl.u32 %v2140, 7
  %v2142 = vsub.s32 %v2139, %v2141
  %v2143 = vrot.slane %v2115, %v2142
  %v2144 = vcombine.low %v2122, %v2129
  %v2145 = vcombine.low %v2136, %v2143
  %v2147 = vunpack.c.l.s4 1966171168
  %v2148 = vunpack.c.0.s8 %v2147
  %v2149 = vlaneseq
  %v2150 = vshrl.u32 %v2149, 7
  %v2151 = vsub.s32 %v2148, %v2150
  %v2152 = vrot.slane %v2144, %v2151
  %v2154 = vunpack.c.l.s4 1966171168
  %v2155 = vunpack.c.0.s8 %v2154
  %v2156 = vlaneseq
  %v2157 = vshrl.u32 %v2156, 7
  %v2158 = vsub.s32 %v2155, %v2157
  %v2159 = vrot.slane %v2145, %v2158
  %v2160 = vcombine.low %v2152, %v2159
  %v2161 = vcombine.low %v2056, %v2057
  %v2162 = vcombine.low %v2058, %v2059
  %v2163 = vcombine.low %v2060, %v2061
  %v2164 = vcombine.low %v2062, %v2063
  %v2166 = vunpack.c.l.s4 1966171168
  %v2167 = vunpack.c.0.s8 %v2166
  %v2168 = vlaneseq
  %v2169 = vshrl.u32 %v2168, 7
  %v2170 = vsub.s32 %v2167, %v2169
  %v2171 = vrot.slane %v2161, %v2170
  %v2173 = vunpack.c.l.s4 1966171168
  %v2174 = vunpack.c.0.s8 %v2173
  %v2175 = vlaneseq
  %v2176 = vshrl.u32 %v2175, 7
  %v2177 = vsub.s32 %v2174, %v2176
  %v2178 = vrot.slane %v2162, %v2177
  %v2180 = vunpack.c.l.s4 1966171168
  %v2181 = vunpack.c.0.s8 %v2180
  %v2182 = vlaneseq
  %v2183 = vshrl.u32 %v2182, 7
  %v2184 = vsub.s32 %v2181, %v2183
  %v2185 = vrot.slane %v2163, %v2184
  %v2187 = vunpack.c.l.s4 1966171168
  %v2188 = vunpack.c.0.s8 %v2187
  %v2189 = vlaneseq
  %v2190 = vshrl.u32 %v2189, 7
  %v2191 = vsub.s32 %v2188, %v2190
  %v2192 = vrot.slane %v2164, %v2191
  %v2193 = vcombine.low %v2171, %v2178
  %v2194 = vcombine.low %v2185, %v2192
  %v2196 = vunpack.c.l.s4 1966171168
  %v2197 = vunpack.c.0.s8 %v2196
  %v2198 = vlaneseq
  %v2199 = vshrl.u32 %v2198, 7
  %v2200 = vsub.s32 %v2197, %v2199
  %v2201 = vrot.slane %v2193, %v2200
  %v2203 = vunpack.c.l.s4 1966171168
  %v2204 = vunpack.c.0.s8 %v2203
  %v2205 = vlaneseq
  %v2206 = vshrl.u32 %v2205, 7
  %v2207 = vsub.s32 %v2204, %v2206
  %v2208 = vrot.slane %v2194, %v2207
  %v2209 = vcombine.low %v2201, %v2208
  %2212 = vmatprep.subr.mxu0 %v613
  %2213 = vmatpush1.msra.mxu0 %v612
  %2214 = vmatprep.subr.mxu0 %v609
  %2215 = vmatpush1.msra.mxu0 %v608
  %2216 = vmatprep.subr.mxu0 %v605
  %2217 = vmatpush1.msra.mxu0 %v604
  %2218 = vmatprep.subr.mxu0 %v601
  %2219 = vmatpush1.msra.mxu0 %v600
  %2220 = vmatprep.subr.mxu0 %v597
  %2221 = vmatpush1.msra.mxu0 %v596
  %2222 = vmatprep.subr.mxu0 %v593
  %2223 = vmatpush1.msra.mxu0 %v592
  %2224 = vmatprep.subr.mxu0 %v589
  %2225 = vmatpush1.msra.mxu0 %v588
  %2226 = vmatprep.subr.mxu0 %v585
  %2227 = vmatpush1.msra.mxu0 %v584
  %2228 = vmatprep.subr.mxu0 %v581
  %2229 = vmatpush1.msra.mxu0 %v580
  %2230 = vmatprep.subr.mxu0 %v577
  %2231 = vmatpush1.msra.mxu0 %v576
  %2232 = vmatprep.subr.mxu0 %v573
  %2233 = vmatpush1.msra.mxu0 %v572
  %2234 = vmatprep.subr.mxu0 %v569
  %2235 = vmatpush1.msra.mxu0 %v568
  %2236 = vmatprep.subr.mxu0 %v565
  %2237 = vmatpush1.msra.mxu0 %v564
  %2238 = vmatprep.subr.mxu0 %v561
  %2239 = vmatpush1.msra.mxu0 %v560
  %2240 = vmatprep.subr.mxu0 %v557
  %2241 = vmatpush1.msra.mxu0 %v556
  %2242 = vmatprep.subr.mxu0 %v553
  %2243 = vmatpush1.msra.mxu0 %v552
  %2244 = vmatprep.subr.mxu0 0.0
  %2245 = vmatpush2.msra.mxu0 0.0
  %2246 = vmatprep.subr.mxu0 0.0
  %2247 = vmatpush2.msra.mxu0 0.0
  %2248 = vmatprep.subr.mxu0 0.0
  %2249 = vmatpush2.msra.mxu0 0.0
  %2250 = vmatprep.subr.mxu0 0.0
  %2251 = vmatpush2.msra.mxu0 0.0
  %2252 = vmatprep.subr.mxu0 0.0
  %2253 = vmatpush2.msra.mxu0 0.0
  %2254 = vmatprep.subr.mxu0 0.0
  %2255 = vmatpush2.msra.mxu0 0.0
  %2256 = vmatprep.subr.mxu0 0.0
  %2257 = vmatpush2.msra.mxu0 0.0
  %2258 = vmatprep.subr.mxu0 0.0
  %2259 = vmatpush2.msra.mxu0 0.0
  %2260 = vmatprep.subr.mxu0 0.0
  %2261 = vmatpush2.msra.mxu0 0.0
  %2262 = vmatprep.subr.mxu0 0.0
  %2263 = vmatpush2.msra.mxu0 0.0
  %2264 = vmatprep.subr.mxu0 0.0
  %2265 = vmatpush2.msra.mxu0 0.0
  %2266 = vmatprep.subr.mxu0 0.0
  %2267 = vmatpush2.msra.mxu0 0.0
  %2268 = vmatprep.subr.mxu0 0.0
  %2269 = vmatpush2.msra.mxu0 0.0
  %2270 = vmatprep.subr.mxu0 0.0
  %2271 = vmatpush2.msra.mxu0 0.0
  %2272 = vmatprep.subr.mxu0 0.0
  %2273 = vmatpush2.msra.mxu0 0.0
  %2274 = vmatprep.subr.mxu0 0.0
  %2275 = vmatpush2.msra.mxu0 0.0
  %2276 = vmatprep.mubr.f32.mxu0 0.0
  %2277 = vmatmul.mubr.f32.gmra.mxu0 %v2160
  %v2278 = vpop.f32.mrf.mxu0
  %v2279 = vadd.f32 0.0, %v2278
  %v2280 = vpop.f32.mrf.mxu0
  %v2281 = vadd.f32 0.0, %v2280
  %2282 = vmatprep.mubr.f32.mxu0 0.0
  %2283 = vmatmul.mubr.f32.gmra.mxu0 %v2209
  %v2284 = vpop.f32.mrf.mxu0
  %v2285 = vadd.f32 0.0, %v2284
  %v2286 = vpop.f32.mrf.mxu0
  %v2287 = vadd.f32 0.0, %v2286
  %2288 = vdwg.mxu0
  %2289 = vmatprep.subr.mxu0 %v615
  %2290 = vmatpush1.msra.mxu0 %v614
  %2291 = vmatprep.subr.mxu0 %v611
  %2292 = vmatpush1.msra.mxu0 %v610
  %2293 = vmatprep.subr.mxu0 %v607
  %2294 = vmatpush1.msra.mxu0 %v606
  %2295 = vmatprep.subr.mxu0 %v603
  %2296 = vmatpush1.msra.mxu0 %v602
  %2297 = vmatprep.subr.mxu0 %v599
  %2298 = vmatpush1.msra.mxu0 %v598
  %2299 = vmatprep.subr.mxu0 %v595
  %2300 = vmatpush1.msra.mxu0 %v594
  %2301 = vmatprep.subr.mxu0 %v591
  %2302 = vmatpush1.msra.mxu0 %v590
  %2303 = vmatprep.subr.mxu0 %v587
  %2304 = vmatpush1.msra.mxu0 %v586
  %2305 = vmatprep.subr.mxu0 %v583
  %2306 = vmatpush1.msra.mxu0 %v582
  %2307 = vmatprep.subr.mxu0 %v579
  %2308 = vmatpush1.msra.mxu0 %v578
  %2309 = vmatprep.subr.mxu0 %v575
  %2310 = vmatpush1.msra.mxu0 %v574
  %2311 = vmatprep.subr.mxu0 %v571
  %2312 = vmatpush1.msra.mxu0 %v570
  %2313 = vmatprep.subr.mxu0 %v567
  %2314 = vmatpush1.msra.mxu0 %v566
  %2315 = vmatprep.subr.mxu0 %v563
  %2316 = vmatpush1.msra.mxu0 %v562
  %2317 = vmatprep.subr.mxu0 %v559
  %2318 = vmatpush1.msra.mxu0 %v558
  %2319 = vmatprep.subr.mxu0 %v555
  %2320 = vmatpush1.msra.mxu0 %v554
  %2321 = vmatprep.subr.mxu0 0.0
  %2322 = vmatpush2.msra.mxu0 0.0
  %2323 = vmatprep.subr.mxu0 0.0
  %2324 = vmatpush2.msra.mxu0 0.0
  %2325 = vmatprep.subr.mxu0 0.0
  %2326 = vmatpush2.msra.mxu0 0.0
  %2327 = vmatprep.subr.mxu0 0.0
  %2328 = vmatpush2.msra.mxu0 0.0
  %2329 = vmatprep.subr.mxu0 0.0
  %2330 = vmatpush2.msra.mxu0 0.0
  %2331 = vmatprep.subr.mxu0 0.0
  %2332 = vmatpush2.msra.mxu0 0.0
  %2333 = vmatprep.subr.mxu0 0.0
  %2334 = vmatpush2.msra.mxu0 0.0
  %2335 = vmatprep.subr.mxu0 0.0
  %2336 = vmatpush2.msra.mxu0 0.0
  %2337 = vmatprep.subr.mxu0 0.0
  %2338 = vmatpush2.msra.mxu0 0.0
  %2339 = vmatprep.subr.mxu0 0.0
  %2340 = vmatpush2.msra.mxu0 0.0
  %2341 = vmatprep.subr.mxu0 0.0
  %2342 = vmatpush2.msra.mxu0 0.0
  %2343 = vmatprep.subr.mxu0 0.0
  %2344 = vmatpush2.msra.mxu0 0.0
  %2345 = vmatprep.subr.mxu0 0.0
  %2346 = vmatpush2.msra.mxu0 0.0
  %2347 = vmatprep.subr.mxu0 0.0
  %2348 = vmatpush2.msra.mxu0 0.0
  %2349 = vmatprep.subr.mxu0 0.0
  %2350 = vmatpush2.msra.mxu0 0.0
  %2351 = vmatprep.subr.mxu0 0.0
  %2352 = vmatpush2.msra.mxu0 0.0
  %2353 = vmatprep.mubr.f32.mxu0 0.0
  %2354 = vmatmul.mubr.f32.gmra.mxu0 %v2160
  %v2355 = vpop.f32.mrf.mxu0
  %v2356 = vadd.f32 0.0, %v2355
  %v2357 = vpop.f32.mrf.mxu0
  %v2358 = vadd.f32 0.0, %v2357
  %2359 = vmatprep.mubr.f32.mxu0 0.0
  %2360 = vmatmul.mubr.f32.gmra.mxu0 %v2209
  %v2361 = vpop.f32.mrf.mxu0
  %v2362 = vadd.f32 0.0, %v2361
  %v2363 = vpop.f32.mrf.mxu0
  %v2364 = vadd.f32 0.0, %v2363
  %2365 = vdwg.mxu0
  %v2374 = vcombine.low %v2279, %v2281
  %v2375 = vcombine.high %v2279, %v2281
  %v2376 = vcombine.low %v2356, %v2358
  %v2377 = vcombine.high %v2356, %v2358
  %v2379 = vunpack.c.l.s4 1966171168
  %v2380 = vunpack.c.0.s8 %v2379
  %v2381 = vlaneseq
  %v2382 = vshrl.u32 %v2381, 7
  %v2383 = vsub.s32 %v2380, %v2382
  %v2384 = vrot.slane %v2374, %v2383
  %v2386 = vunpack.c.l.s4 1966171168
  %v2387 = vunpack.c.0.s8 %v2386
  %v2388 = vlaneseq
  %v2389 = vshrl.u32 %v2388, 7
  %v2390 = vsub.s32 %v2387, %v2389
  %v2391 = vrot.slane %v2375, %v2390
  %v2393 = vunpack.c.l.s4 1966171168
  %v2394 = vunpack.c.0.s8 %v2393
  %v2395 = vlaneseq
  %v2396 = vshrl.u32 %v2395, 7
  %v2397 = vsub.s32 %v2394, %v2396
  %v2398 = vrot.slane %v2376, %v2397
  %v2400 = vunpack.c.l.s4 1966171168
  %v2401 = vunpack.c.0.s8 %v2400
  %v2402 = vlaneseq
  %v2403 = vshrl.u32 %v2402, 7
  %v2404 = vsub.s32 %v2401, %v2403
  %v2405 = vrot.slane %v2377, %v2404
  %v2406 = vcombine.low %v2384, %v2398
  %v2407 = vcombine.high %v2384, %v2398
  %v2408 = vcombine.low %v2391, %v2405
  %v2409 = vcombine.high %v2391, %v2405
  %v2411 = vunpack.c.l.s4 1966171168
  %v2412 = vunpack.c.0.s8 %v2411
  %v2413 = vlaneseq
  %v2414 = vshrl.u32 %v2413, 7
  %v2415 = vsub.s32 %v2412, %v2414
  %v2416 = vrot.slane %v2406, %v2415
  %v2418 = vunpack.c.l.s4 1966171168
  %v2419 = vunpack.c.0.s8 %v2418
  %v2420 = vlaneseq
  %v2421 = vshrl.u32 %v2420, 7
  %v2422 = vsub.s32 %v2419, %v2421
  %v2423 = vrot.slane %v2408, %v2422
  %v2425 = vunpack.c.l.s4 1966171168
  %v2426 = vunpack.c.0.s8 %v2425
  %v2427 = vlaneseq
  %v2428 = vshrl.u32 %v2427, 7
  %v2429 = vsub.s32 %v2426, %v2428
  %v2430 = vrot.slane %v2407, %v2429
  %v2432 = vunpack.c.l.s4 1966171168
  %v2433 = vunpack.c.0.s8 %v2432
  %v2434 = vlaneseq
  %v2435 = vshrl.u32 %v2434, 7
  %v2436 = vsub.s32 %v2433, %v2435
  %v2437 = vrot.slane %v2409, %v2436
  %v2438 = vcombine.high %v2416, %v2416
  %v2439 = vcombine.high %v2423, %v2423
  %v2440 = vcombine.high %v2430, %v2430
  %v2441 = vcombine.high %v2437, %v2437
  %v2442 = vcombine.low %v2285, %v2287
  %v2443 = vcombine.high %v2285, %v2287
  %v2444 = vcombine.low %v2362, %v2364
  %v2445 = vcombine.high %v2362, %v2364
  %v2447 = vunpack.c.l.s4 1966171168
  %v2448 = vunpack.c.0.s8 %v2447
  %v2449 = vlaneseq
  %v2450 = vshrl.u32 %v2449, 7
  %v2451 = vsub.s32 %v2448, %v2450
  %v2452 = vrot.slane %v2442, %v2451
  %v2454 = vunpack.c.l.s4 1966171168
  %v2455 = vunpack.c.0.s8 %v2454
  %v2456 = vlaneseq
  %v2457 = vshrl.u32 %v2456, 7
  %v2458 = vsub.s32 %v2455, %v2457
  %v2459 = vrot.slane %v2443, %v2458
  %v2461 = vunpack.c.l.s4 1966171168
  %v2462 = vunpack.c.0.s8 %v2461
  %v2463 = vlaneseq
  %v2464 = vshrl.u32 %v2463, 7
  %v2465 = vsub.s32 %v2462, %v2464
  %v2466 = vrot.slane %v2444, %v2465
  %v2468 = vunpack.c.l.s4 1966171168
  %v2469 = vunpack.c.0.s8 %v2468
  %v2470 = vlaneseq
  %v2471 = vshrl.u32 %v2470, 7
  %v2472 = vsub.s32 %v2469, %v2471
  %v2473 = vrot.slane %v2445, %v2472
  %v2474 = vcombine.low %v2452, %v2466
  %v2475 = vcombine.high %v2452, %v2466
  %v2476 = vcombine.low %v2459, %v2473
  %v2477 = vcombine.high %v2459, %v2473
  %v2479 = vunpack.c.l.s4 1966171168
  %v2480 = vunpack.c.0.s8 %v2479
  %v2481 = vlaneseq
  %v2482 = vshrl.u32 %v2481, 7
  %v2483 = vsub.s32 %v2480, %v2482
  %v2484 = vrot.slane %v2474, %v2483
  %v2486 = vunpack.c.l.s4 1966171168
  %v2487 = vunpack.c.0.s8 %v2486
  %v2488 = vlaneseq
  %v2489 = vshrl.u32 %v2488, 7
  %v2490 = vsub.s32 %v2487, %v2489
  %v2491 = vrot.slane %v2476, %v2490
  %v2493 = vunpack.c.l.s4 1966171168
  %v2494 = vunpack.c.0.s8 %v2493
  %v2495 = vlaneseq
  %v2496 = vshrl.u32 %v2495, 7
  %v2497 = vsub.s32 %v2494, %v2496
  %v2498 = vrot.slane %v2475, %v2497
  %v2500 = vunpack.c.l.s4 1966171168
  %v2501 = vunpack.c.0.s8 %v2500
  %v2502 = vlaneseq
  %v2503 = vshrl.u32 %v2502, 7
  %v2504 = vsub.s32 %v2501, %v2503
  %v2505 = vrot.slane %v2477, %v2504
  %v2506 = vcombine.high %v2484, %v2484
  %v2507 = vcombine.high %v2491, %v2491
  %v2508 = vcombine.high %v2498, %v2498
  %v2509 = vcombine.high %v2505, %v2505
  %v2526 = vadd.f32 %v2065, %v2416
  %v2527 = vadd.f32 %v2067, %v2430
  %v2528 = vadd.f32 %v2069, %v2438
  %v2529 = vadd.f32 %v2071, %v2440
  %v2530 = vadd.f32 %v2073, %v2423
  %v2531 = vadd.f32 %v2075, %v2437
  %v2532 = vadd.f32 %v2077, %v2439
  %v2533 = vadd.f32 %v2079, %v2441
  %v2534 = vadd.f32 %v2081, %v2484
  %v2535 = vadd.f32 %v2083, %v2498
  %v2536 = vadd.f32 %v2085, %v2506
  %v2537 = vadd.f32 %v2087, %v2508
  %v2538 = vadd.f32 %v2089, %v2491
  %v2539 = vadd.f32 %v2091, %v2505
  %v2540 = vadd.f32 %v2093, %v2507
  %v2541 = vadd.f32 %v2095, %v2509
  %v2542 = vxor.u32 %v2526, 2147483648
  %v2543 = vxor.u32 %v2527, 2147483648
  %v2544 = vxor.u32 %v2528, 2147483648
  %v2545 = vxor.u32 %v2529, 2147483648
  %v2546 = vxor.u32 %v2530, 2147483648
  %v2547 = vxor.u32 %v2531, 2147483648
  %v2548 = vxor.u32 %v2532, 2147483648
  %v2549 = vxor.u32 %v2533, 2147483648
  %v2550 = vxor.u32 %v2534, 2147483648
  %v2551 = vxor.u32 %v2535, 2147483648
  %v2552 = vxor.u32 %v2536, 2147483648
  %v2553 = vxor.u32 %v2537, 2147483648
  %v2554 = vxor.u32 %v2538, 2147483648
  %v2555 = vxor.u32 %v2539, 2147483648
  %v2556 = vxor.u32 %v2540, 2147483648
  %v2557 = vxor.u32 %v2541, 2147483648
  %v2558 = vmul.f32 %v2542, 1.442695
  %v2559 = vpow.pop %v2558
  %v2560 = vmul.f32 %v2543, 1.442695
  %v2561 = vpow.pop %v2560
  %v2562 = vmul.f32 %v2544, 1.442695
  %v2563 = vpow.pop %v2562
  %v2564 = vmul.f32 %v2545, 1.442695
  %v2565 = vpow.pop %v2564
  %v2566 = vmul.f32 %v2546, 1.442695
  %v2567 = vpow.pop %v2566
  %v2568 = vmul.f32 %v2547, 1.442695
  %v2569 = vpow.pop %v2568
  %v2570 = vmul.f32 %v2548, 1.442695
  %v2571 = vpow.pop %v2570
  %v2572 = vmul.f32 %v2549, 1.442695
  %v2573 = vpow.pop %v2572
  %v2574 = vmul.f32 %v2550, 1.442695
  %v2575 = vpow.pop %v2574
  %v2576 = vmul.f32 %v2551, 1.442695
  %v2577 = vpow.pop %v2576
  %v2578 = vmul.f32 %v2552, 1.442695
  %v2579 = vpow.pop %v2578
  %v2580 = vmul.f32 %v2553, 1.442695
  %v2581 = vpow.pop %v2580
  %v2582 = vmul.f32 %v2554, 1.442695
  %v2583 = vpow.pop %v2582
  %v2584 = vmul.f32 %v2555, 1.442695
  %v2585 = vpow.pop %v2584
  %v2586 = vmul.f32 %v2556, 1.442695
  %v2587 = vpow.pop %v2586
  %v2588 = vmul.f32 %v2557, 1.442695
  %v2589 = vpow.pop %v2588
  %v2590 = vadd.f32 %v2559, 1.0
  %v2591 = vadd.f32 %v2561, 1.0
  %v2592 = vadd.f32 %v2563, 1.0
  %v2593 = vadd.f32 %v2565, 1.0
  %v2594 = vadd.f32 %v2567, 1.0
  %v2595 = vadd.f32 %v2569, 1.0
  %v2596 = vadd.f32 %v2571, 1.0
  %v2597 = vadd.f32 %v2573, 1.0
  %v2598 = vadd.f32 %v2575, 1.0
  %v2599 = vadd.f32 %v2577, 1.0
  %v2600 = vadd.f32 %v2579, 1.0
  %v2601 = vadd.f32 %v2581, 1.0
  %v2602 = vadd.f32 %v2583, 1.0
  %v2603 = vadd.f32 %v2585, 1.0
  %v2604 = vadd.f32 %v2587, 1.0
  %v2605 = vadd.f32 %v2589, 1.0
  %v2606 = vrcp.pop %v2590
  %v2607 = vmul.f32 1.0, %v2606
  %v2608 = vrcp.pop %v2591
  %v2609 = vmul.f32 1.0, %v2608
  %v2610 = vrcp.pop %v2592
  %v2611 = vmul.f32 1.0, %v2610
  %v2612 = vrcp.pop %v2593
  %v2613 = vmul.f32 1.0, %v2612
  %v2614 = vrcp.pop %v2594
  %v2615 = vmul.f32 1.0, %v2614
  %v2616 = vrcp.pop %v2595
  %v2617 = vmul.f32 1.0, %v2616
  %v2618 = vrcp.pop %v2596
  %v2619 = vmul.f32 1.0, %v2618
  %v2620 = vrcp.pop %v2597
  %v2621 = vmul.f32 1.0, %v2620
  %v2622 = vrcp.pop %v2598
  %v2623 = vmul.f32 1.0, %v2622
  %v2624 = vrcp.pop %v2599
  %v2625 = vmul.f32 1.0, %v2624
  %v2626 = vrcp.pop %v2600
  %v2627 = vmul.f32 1.0, %v2626
  %v2628 = vrcp.pop %v2601
  %v2629 = vmul.f32 1.0, %v2628
  %v2630 = vrcp.pop %v2602
  %v2631 = vmul.f32 1.0, %v2630
  %v2632 = vrcp.pop %v2603
  %v2633 = vmul.f32 1.0, %v2632
  %v2634 = vrcp.pop %v2604
  %v2635 = vmul.f32 1.0, %v2634
  %v2636 = vrcp.pop %v2605
  %v2637 = vmul.f32 1.0, %v2636
  %v2654 = vrot.slane %v2526, 3
  %v2655 = vrot.slane %v2527, 3
  %v2656 = vrot.slane %v2528, 3
  %v2657 = vrot.slane %v2529, 3
  %v2658 = vrot.slane %v2530, 3
  %v2659 = vrot.slane %v2531, 3
  %v2660 = vrot.slane %v2532, 3
  %v2661 = vrot.slane %v2533, 3
  %v2662 = vrot.slane %v2534, 3
  %v2663 = vrot.slane %v2535, 3
  %v2664 = vrot.slane %v2536, 3
  %v2665 = vrot.slane %v2537, 3
  %v2666 = vrot.slane %v2538, 3
  %v2667 = vrot.slane %v2539, 3
  %v2668 = vrot.slane %v2540, 3
  %v2669 = vrot.slane %v2541, 3
  %v2686 = vtanh.pop %v2654
  %v2687 = vtanh.pop %v2655
  %v2688 = vtanh.pop %v2656
  %v2689 = vtanh.pop %v2657
  %v2690 = vtanh.pop %v2658
  %v2691 = vtanh.pop %v2659
  %v2692 = vtanh.pop %v2660
  %v2693 = vtanh.pop %v2661
  %v2694 = vtanh.pop %v2662
  %v2695 = vtanh.pop %v2663
  %v2696 = vtanh.pop %v2664
  %v2697 = vtanh.pop %v2665
  %v2698 = vtanh.pop %v2666
  %v2699 = vtanh.pop %v2667
  %v2700 = vtanh.pop %v2668
  %v2701 = vtanh.pop %v2669
  %v2718 = vrot.slane %v2607, 1
  %v2719 = vrot.slane %v2609, 1
  %v2720 = vrot.slane %v2611, 1
  %v2721 = vrot.slane %v2613, 1
  %v2722 = vrot.slane %v2615, 1
  %v2723 = vrot.slane %v2617, 1
  %v2724 = vrot.slane %v2619, 1
  %v2725 = vrot.slane %v2621, 1
  %v2726 = vrot.slane %v2623, 1
  %v2727 = vrot.slane %v2625, 1
  %v2728 = vrot.slane %v2627, 1
  %v2729 = vrot.slane %v2629, 1
  %v2730 = vrot.slane %v2631, 1
  %v2731 = vrot.slane %v2633, 1
  %v2732 = vrot.slane %v2635, 1
  %v2733 = vrot.slane %v2637, 1
  %v2750 = vmul.f32 %v2718, %v1984
  %v2751 = vmul.f32 %v2719, %v1985
  %v2752 = vmul.f32 %v2720, %v1986
  %v2753 = vmul.f32 %v2721, %v1987
  %v2754 = vmul.f32 %v2722, %v1988
  %v2755 = vmul.f32 %v2723, %v1989
  %v2756 = vmul.f32 %v2724, %v1990
  %v2757 = vmul.f32 %v2725, %v1991
  %v2758 = vmul.f32 %v2726, %v1992
  %v2759 = vmul.f32 %v2727, %v1993
  %v2760 = vmul.f32 %v2728, %v1994
  %v2761 = vmul.f32 %v2729, %v1995
  %v2762 = vmul.f32 %v2730, %v1996
  %v2763 = vmul.f32 %v2731, %v1997
  %v2764 = vmul.f32 %v2732, %v1998
  %v2765 = vmul.f32 %v2733, %v1999
  %v2766 = vmul.f32 %v2607, %v2686
  %v2767 = vmul.f32 %v2609, %v2687
  %v2768 = vmul.f32 %v2611, %v2688
  %v2769 = vmul.f32 %v2613, %v2689
  %v2770 = vmul.f32 %v2615, %v2690
  %v2771 = vmul.f32 %v2617, %v2691
  %v2772 = vmul.f32 %v2619, %v2692
  %v2773 = vmul.f32 %v2621, %v2693
  %v2774 = vmul.f32 %v2623, %v2694
  %v2775 = vmul.f32 %v2625, %v2695
  %v2776 = vmul.f32 %v2627, %v2696
  %v2777 = vmul.f32 %v2629, %v2697
  %v2778 = vmul.f32 %v2631, %v2698
  %v2779 = vmul.f32 %v2633, %v2699
  %v2780 = vmul.f32 %v2635, %v2700
  %v2781 = vmul.f32 %v2637, %v2701
  %v2782 = vadd.f32 %v2750, %v2766
  %v2783 = vadd.f32 %v2751, %v2767
  %v2784 = vadd.f32 %v2752, %v2768
  %v2785 = vadd.f32 %v2753, %v2769
  %v2786 = vadd.f32 %v2754, %v2770
  %v2787 = vadd.f32 %v2755, %v2771
  %v2788 = vadd.f32 %v2756, %v2772
  %v2789 = vadd.f32 %v2757, %v2773
  %v2790 = vadd.f32 %v2758, %v2774
  %v2791 = vadd.f32 %v2759, %v2775
  %v2792 = vadd.f32 %v2760, %v2776
  %v2793 = vadd.f32 %v2761, %v2777
  %v2794 = vadd.f32 %v2762, %v2778
  %v2795 = vadd.f32 %v2763, %v2779
  %v2796 = vadd.f32 %v2764, %v2780
  %v2797 = vadd.f32 %v2765, %v2781
  %v2798 = vtanh.pop %v2782
  %v2799 = vtanh.pop %v2783
  %v2800 = vtanh.pop %v2784
  %v2801 = vtanh.pop %v2785
  %v2802 = vtanh.pop %v2786
  %v2803 = vtanh.pop %v2787
  %v2804 = vtanh.pop %v2788
  %v2805 = vtanh.pop %v2789
  %v2806 = vtanh.pop %v2790
  %v2807 = vtanh.pop %v2791
  %v2808 = vtanh.pop %v2792
  %v2809 = vtanh.pop %v2793
  %v2810 = vtanh.pop %v2794
  %v2811 = vtanh.pop %v2795
  %v2812 = vtanh.pop %v2796
  %v2813 = vtanh.pop %v2797
  %v2814 = vrot.slane %v2607, 2
  %v2815 = vrot.slane %v2609, 2
  %v2816 = vrot.slane %v2611, 2
  %v2817 = vrot.slane %v2613, 2
  %v2818 = vrot.slane %v2615, 2
  %v2819 = vrot.slane %v2617, 2
  %v2820 = vrot.slane %v2619, 2
  %v2821 = vrot.slane %v2621, 2
  %v2822 = vrot.slane %v2623, 2
  %v2823 = vrot.slane %v2625, 2
  %v2824 = vrot.slane %v2627, 2
  %v2825 = vrot.slane %v2629, 2
  %v2826 = vrot.slane %v2631, 2
  %v2827 = vrot.slane %v2633, 2
  %v2828 = vrot.slane %v2635, 2
  %v2829 = vrot.slane %v2637, 2
  %v2846 = vmul.f32 %v2814, %v2798
  %v2847 = vmul.f32 %v2815, %v2799
  %v2848 = vmul.f32 %v2816, %v2800
  %v2849 = vmul.f32 %v2817, %v2801
  %v2850 = vmul.f32 %v2818, %v2802
  %v2851 = vmul.f32 %v2819, %v2803
  %v2852 = vmul.f32 %v2820, %v2804
  %v2853 = vmul.f32 %v2821, %v2805
  %v2854 = vmul.f32 %v2822, %v2806
  %v2855 = vmul.f32 %v2823, %v2807
  %v2856 = vmul.f32 %v2824, %v2808
  %v2857 = vmul.f32 %v2825, %v2809
  %v2858 = vmul.f32 %v2826, %v2810
  %v2859 = vmul.f32 %v2827, %v2811
  %v2860 = vmul.f32 %v2828, %v2812
  %v2861 = vmul.f32 %v2829, %v2813
  %s2862 = scalar_lea.vmem [#allocation2], 3
  %v2863 = vld [vmem:[%s2862] ss:$8 sm:$0xf]
  %s2864 = scalar_lea.vmem [#allocation2], 35
  %v2865 = vld [vmem:[%s2864] ss:$8 sm:$0xf]
  %s2866 = scalar_lea.vmem [#allocation2], 67
  %v2867 = vld [vmem:[%s2866] ss:$8 sm:$0xf]
  %s2868 = scalar_lea.vmem [#allocation2], 99
  %v2869 = vld [vmem:[%s2868] ss:$8 sm:$0xf]
  %s2870 = scalar_lea.vmem [#allocation2], 131
  %v2871 = vld [vmem:[%s2870] ss:$8 sm:$0xf]
  %s2872 = scalar_lea.vmem [#allocation2], 163
  %v2873 = vld [vmem:[%s2872] ss:$8 sm:$0xf]
  %s2874 = scalar_lea.vmem [#allocation2], 195
  %v2875 = vld [vmem:[%s2874] ss:$8 sm:$0xf]
  %s2876 = scalar_lea.vmem [#allocation2], 227
  %v2877 = vld [vmem:[%s2876] ss:$8 sm:$0xf]
  %s2878 = scalar_lea.vmem [#allocation2], 259
  %v2879 = vld [vmem:[%s2878] ss:$8 sm:$0xf]
  %s2880 = scalar_lea.vmem [#allocation2], 291
  %v2881 = vld [vmem:[%s2880] ss:$8 sm:$0xf]
  %s2882 = scalar_lea.vmem [#allocation2], 323
  %v2883 = vld [vmem:[%s2882] ss:$8 sm:$0xf]
  %s2884 = scalar_lea.vmem [#allocation2], 355
  %v2885 = vld [vmem:[%s2884] ss:$8 sm:$0xf]
  %s2886 = scalar_lea.vmem [#allocation2], 387
  %v2887 = vld [vmem:[%s2886] ss:$8 sm:$0xf]
  %s2888 = scalar_lea.vmem [#allocation2], 419
  %v2889 = vld [vmem:[%s2888] ss:$8 sm:$0xf]
  %s2890 = scalar_lea.vmem [#allocation2], 451
  %v2891 = vld [vmem:[%s2890] ss:$8 sm:$0xf]
  %s2892 = scalar_lea.vmem [#allocation2], 483
  %v2893 = vld [vmem:[%s2892] ss:$8 sm:$0xf]
  %v2910 = vcombine.low %v2846, %v2847
  %v2911 = vcombine.low %v2848, %v2849
  %v2912 = vcombine.low %v2850, %v2851
  %v2913 = vcombine.low %v2852, %v2853
  %v2915 = vunpack.c.l.s4 1966171168
  %v2916 = vunpack.c.0.s8 %v2915
  %v2917 = vlaneseq
  %v2918 = vshrl.u32 %v2917, 7
  %v2919 = vsub.s32 %v2916, %v2918
  %v2920 = vrot.slane %v2910, %v2919
  %v2922 = vunpack.c.l.s4 1966171168
  %v2923 = vunpack.c.0.s8 %v2922
  %v2924 = vlaneseq
  %v2925 = vshrl.u32 %v2924, 7
  %v2926 = vsub.s32 %v2923, %v2925
  %v2927 = vrot.slane %v2911, %v2926
  %v2929 = vunpack.c.l.s4 1966171168
  %v2930 = vunpack.c.0.s8 %v2929
  %v2931 = vlaneseq
  %v2932 = vshrl.u32 %v2931, 7
  %v2933 = vsub.s32 %v2930, %v2932
  %v2934 = vrot.slane %v2912, %v2933
  %v2936 = vunpack.c.l.s4 1966171168
  %v2937 = vunpack.c.0.s8 %v2936
  %v2938 = vlaneseq
  %v2939 = vshrl.u32 %v2938, 7
  %v2940 = vsub.s32 %v2937, %v2939
  %v2941 = vrot.slane %v2913, %v2940
  %v2942 = vcombine.low %v2920, %v2927
  %v2943 = vcombine.low %v2934, %v2941
  %v2945 = vunpack.c.l.s4 1966171168
  %v2946 = vunpack.c.0.s8 %v2945
  %v2947 = vlaneseq
  %v2948 = vshrl.u32 %v2947, 7
  %v2949 = vsub.s32 %v2946, %v2948
  %v2950 = vrot.slane %v2942, %v2949
  %v2952 = vunpack.c.l.s4 1966171168
  %v2953 = vunpack.c.0.s8 %v2952
  %v2954 = vlaneseq
  %v2955 = vshrl.u32 %v2954, 7
  %v2956 = vsub.s32 %v2953, %v2955
  %v2957 = vrot.slane %v2943, %v2956
  %v2958 = vcombine.low %v2950, %v2957
  %v2959 = vcombine.low %v2854, %v2855
  %v2960 = vcombine.low %v2856, %v2857
  %v2961 = vcombine.low %v2858, %v2859
  %v2962 = vcombine.low %v2860, %v2861
  %v2964 = vunpack.c.l.s4 1966171168
  %v2965 = vunpack.c.0.s8 %v2964
  %v2966 = vlaneseq
  %v2967 = vshrl.u32 %v2966, 7
  %v2968 = vsub.s32 %v2965, %v2967
  %v2969 = vrot.slane %v2959, %v2968
  %v2971 = vunpack.c.l.s4 1966171168
  %v2972 = vunpack.c.0.s8 %v2971
  %v2973 = vlaneseq
  %v2974 = vshrl.u32 %v2973, 7
  %v2975 = vsub.s32 %v2972, %v2974
  %v2976 = vrot.slane %v2960, %v2975
  %v2978 = vunpack.c.l.s4 1966171168
  %v2979 = vunpack.c.0.s8 %v2978
  %v2980 = vlaneseq
  %v2981 = vshrl.u32 %v2980, 7
  %v2982 = vsub.s32 %v2979, %v2981
  %v2983 = vrot.slane %v2961, %v2982
  %v2985 = vunpack.c.l.s4 1966171168
  %v2986 = vunpack.c.0.s8 %v2985
  %v2987 = vlaneseq
  %v2988 = vshrl.u32 %v2987, 7
  %v2989 = vsub.s32 %v2986, %v2988
  %v2990 = vrot.slane %v2962, %v2989
  %v2991 = vcombine.low %v2969, %v2976
  %v2992 = vcombine.low %v2983, %v2990
  %v2994 = vunpack.c.l.s4 1966171168
  %v2995 = vunpack.c.0.s8 %v2994
  %v2996 = vlaneseq
  %v2997 = vshrl.u32 %v2996, 7
  %v2998 = vsub.s32 %v2995, %v2997
  %v2999 = vrot.slane %v2991, %v2998
  %v3001 = vunpack.c.l.s4 1966171168
  %v3002 = vunpack.c.0.s8 %v3001
  %v3003 = vlaneseq
  %v3004 = vshrl.u32 %v3003, 7
  %v3005 = vsub.s32 %v3002, %v3004
  %v3006 = vrot.slane %v2992, %v3005
  %v3007 = vcombine.low %v2999, %v3006
  %3010 = vmatprep.subr.mxu0 %v613
  %3011 = vmatpush1.msra.mxu0 %v612
  %3012 = vmatprep.subr.mxu0 %v609
  %3013 = vmatpush1.msra.mxu0 %v608
  %3014 = vmatprep.subr.mxu0 %v605
  %3015 = vmatpush1.msra.mxu0 %v604
  %3016 = vmatprep.subr.mxu0 %v601
  %3017 = vmatpush1.msra.mxu0 %v600
  %3018 = vmatprep.subr.mxu0 %v597
  %3019 = vmatpush1.msra.mxu0 %v596
  %3020 = vmatprep.subr.mxu0 %v593
  %3021 = vmatpush1.msra.mxu0 %v592
  %3022 = vmatprep.subr.mxu0 %v589
  %3023 = vmatpush1.msra.mxu0 %v588
  %3024 = vmatprep.subr.mxu0 %v585
  %3025 = vmatpush1.msra.mxu0 %v584
  %3026 = vmatprep.subr.mxu0 %v581
  %3027 = vmatpush1.msra.mxu0 %v580
  %3028 = vmatprep.subr.mxu0 %v577
  %3029 = vmatpush1.msra.mxu0 %v576
  %3030 = vmatprep.subr.mxu0 %v573
  %3031 = vmatpush1.msra.mxu0 %v572
  %3032 = vmatprep.subr.mxu0 %v569
  %3033 = vmatpush1.msra.mxu0 %v568
  %3034 = vmatprep.subr.mxu0 %v565
  %3035 = vmatpush1.msra.mxu0 %v564
  %3036 = vmatprep.subr.mxu0 %v561
  %3037 = vmatpush1.msra.mxu0 %v560
  %3038 = vmatprep.subr.mxu0 %v557
  %3039 = vmatpush1.msra.mxu0 %v556
  %3040 = vmatprep.subr.mxu0 %v553
  %3041 = vmatpush1.msra.mxu0 %v552
  %3042 = vmatprep.subr.mxu0 0.0
  %3043 = vmatpush2.msra.mxu0 0.0
  %3044 = vmatprep.subr.mxu0 0.0
  %3045 = vmatpush2.msra.mxu0 0.0
  %3046 = vmatprep.subr.mxu0 0.0
  %3047 = vmatpush2.msra.mxu0 0.0
  %3048 = vmatprep.subr.mxu0 0.0
  %3049 = vmatpush2.msra.mxu0 0.0
  %3050 = vmatprep.subr.mxu0 0.0
  %3051 = vmatpush2.msra.mxu0 0.0
  %3052 = vmatprep.subr.mxu0 0.0
  %3053 = vmatpush2.msra.mxu0 0.0
  %3054 = vmatprep.subr.mxu0 0.0
  %3055 = vmatpush2.msra.mxu0 0.0
  %3056 = vmatprep.subr.mxu0 0.0
  %3057 = vmatpush2.msra.mxu0 0.0
  %3058 = vmatprep.subr.mxu0 0.0
  %3059 = vmatpush2.msra.mxu0 0.0
  %3060 = vmatprep.subr.mxu0 0.0
  %3061 = vmatpush2.msra.mxu0 0.0
  %3062 = vmatprep.subr.mxu0 0.0
  %3063 = vmatpush2.msra.mxu0 0.0
  %3064 = vmatprep.subr.mxu0 0.0
  %3065 = vmatpush2.msra.mxu0 0.0
  %3066 = vmatprep.subr.mxu0 0.0
  %3067 = vmatpush2.msra.mxu0 0.0
  %3068 = vmatprep.subr.mxu0 0.0
  %3069 = vmatpush2.msra.mxu0 0.0
  %3070 = vmatprep.subr.mxu0 0.0
  %3071 = vmatpush2.msra.mxu0 0.0
  %3072 = vmatprep.subr.mxu0 0.0
  %3073 = vmatpush2.msra.mxu0 0.0
  %3074 = vmatprep.mubr.f32.mxu0 0.0
  %3075 = vmatmul.mubr.f32.gmra.mxu0 %v2958
  %v3076 = vpop.f32.mrf.mxu0
  %v3077 = vadd.f32 0.0, %v3076
  %v3078 = vpop.f32.mrf.mxu0
  %v3079 = vadd.f32 0.0, %v3078
  %3080 = vmatprep.mubr.f32.mxu0 0.0
  %3081 = vmatmul.mubr.f32.gmra.mxu0 %v3007
  %v3082 = vpop.f32.mrf.mxu0
  %v3083 = vadd.f32 0.0, %v3082
  %v3084 = vpop.f32.mrf.mxu0
  %v3085 = vadd.f32 0.0, %v3084
  %3086 = vdwg.mxu0
  %3087 = vmatprep.subr.mxu0 %v615
  %3088 = vmatpush1.msra.mxu0 %v614
  %3089 = vmatprep.subr.mxu0 %v611
  %3090 = vmatpush1.msra.mxu0 %v610
  %3091 = vmatprep.subr.mxu0 %v607
  %3092 = vmatpush1.msra.mxu0 %v606
  %3093 = vmatprep.subr.mxu0 %v603
  %3094 = vmatpush1.msra.mxu0 %v602
  %3095 = vmatprep.subr.mxu0 %v599
  %3096 = vmatpush1.msra.mxu0 %v598
  %3097 = vmatprep.subr.mxu0 %v595
  %3098 = vmatpush1.msra.mxu0 %v594
  %3099 = vmatprep.subr.mxu0 %v591
  %3100 = vmatpush1.msra.mxu0 %v590
  %3101 = vmatprep.subr.mxu0 %v587
  %3102 = vmatpush1.msra.mxu0 %v586
  %3103 = vmatprep.subr.mxu0 %v583
  %3104 = vmatpush1.msra.mxu0 %v582
  %3105 = vmatprep.subr.mxu0 %v579
  %3106 = vmatpush1.msra.mxu0 %v578
  %3107 = vmatprep.subr.mxu0 %v575
  %3108 = vmatpush1.msra.mxu0 %v574
  %3109 = vmatprep.subr.mxu0 %v571
  %3110 = vmatpush1.msra.mxu0 %v570
  %3111 = vmatprep.subr.mxu0 %v567
  %3112 = vmatpush1.msra.mxu0 %v566
  %3113 = vmatprep.subr.mxu0 %v563
  %3114 = vmatpush1.msra.mxu0 %v562
  %3115 = vmatprep.subr.mxu0 %v559
  %3116 = vmatpush1.msra.mxu0 %v558
  %3117 = vmatprep.subr.mxu0 %v555
  %3118 = vmatpush1.msra.mxu0 %v554
  %3119 = vmatprep.subr.mxu0 0.0
  %3120 = vmatpush2.msra.mxu0 0.0
  %3121 = vmatprep.subr.mxu0 0.0
  %3122 = vmatpush2.msra.mxu0 0.0
  %3123 = vmatprep.subr.mxu0 0.0
  %3124 = vmatpush2.msra.mxu0 0.0
  %3125 = vmatprep.subr.mxu0 0.0
  %3126 = vmatpush2.msra.mxu0 0.0
  %3127 = vmatprep.subr.mxu0 0.0
  %3128 = vmatpush2.msra.mxu0 0.0
  %3129 = vmatprep.subr.mxu0 0.0
  %3130 = vmatpush2.msra.mxu0 0.0
  %3131 = vmatprep.subr.mxu0 0.0
  %3132 = vmatpush2.msra.mxu0 0.0
  %3133 = vmatprep.subr.mxu0 0.0
  %3134 = vmatpush2.msra.mxu0 0.0
  %3135 = vmatprep.subr.mxu0 0.0
  %3136 = vmatpush2.msra.mxu0 0.0
  %3137 = vmatprep.subr.mxu0 0.0
  %3138 = vmatpush2.msra.mxu0 0.0
  %3139 = vmatprep.subr.mxu0 0.0
  %3140 = vmatpush2.msra.mxu0 0.0
  %3141 = vmatprep.subr.mxu0 0.0
  %3142 = vmatpush2.msra.mxu0 0.0
  %3143 = vmatprep.subr.mxu0 0.0
  %3144 = vmatpush2.msra.mxu0 0.0
  %3145 = vmatprep.subr.mxu0 0.0
  %3146 = vmatpush2.msra.mxu0 0.0
  %3147 = vmatprep.subr.mxu0 0.0
  %3148 = vmatpush2.msra.mxu0 0.0
  %3149 = vmatprep.subr.mxu0 0.0
  %3150 = vmatpush2.msra.mxu0 0.0
  %3151 = vmatprep.mubr.f32.mxu0 0.0
  %3152 = vmatmul.mubr.f32.gmra.mxu0 %v2958
  %v3153 = vpop.f32.mrf.mxu0
  %v3154 = vadd.f32 0.0, %v3153
  %v3155 = vpop.f32.mrf.mxu0
  %v3156 = vadd.f32 0.0, %v3155
  %3157 = vmatprep.mubr.f32.mxu0 0.0
  %3158 = vmatmul.mubr.f32.gmra.mxu0 %v3007
  %v3159 = vpop.f32.mrf.mxu0
  %v3160 = vadd.f32 0.0, %v3159
  %v3161 = vpop.f32.mrf.mxu0
  %v3162 = vadd.f32 0.0, %v3161
  %3163 = vdwg.mxu0
  %v3172 = vcombine.low %v3077, %v3079
  %v3173 = vcombine.high %v3077, %v3079
  %v3174 = vcombine.low %v3154, %v3156
  %v3175 = vcombine.high %v3154, %v3156
  %v3177 = vunpack.c.l.s4 1966171168
  %v3178 = vunpack.c.0.s8 %v3177
  %v3179 = vlaneseq
  %v3180 = vshrl.u32 %v3179, 7
  %v3181 = vsub.s32 %v3178, %v3180
  %v3182 = vrot.slane %v3172, %v3181
  %v3184 = vunpack.c.l.s4 1966171168
  %v3185 = vunpack.c.0.s8 %v3184
  %v3186 = vlaneseq
  %v3187 = vshrl.u32 %v3186, 7
  %v3188 = vsub.s32 %v3185, %v3187
  %v3189 = vrot.slane %v3173, %v3188
  %v3191 = vunpack.c.l.s4 1966171168
  %v3192 = vunpack.c.0.s8 %v3191
  %v3193 = vlaneseq
  %v3194 = vshrl.u32 %v3193, 7
  %v3195 = vsub.s32 %v3192, %v3194
  %v3196 = vrot.slane %v3174, %v3195
  %v3198 = vunpack.c.l.s4 1966171168
  %v3199 = vunpack.c.0.s8 %v3198
  %v3200 = vlaneseq
  %v3201 = vshrl.u32 %v3200, 7
  %v3202 = vsub.s32 %v3199, %v3201
  %v3203 = vrot.slane %v3175, %v3202
  %v3204 = vcombine.low %v3182, %v3196
  %v3205 = vcombine.high %v3182, %v3196
  %v3206 = vcombine.low %v3189, %v3203
  %v3207 = vcombine.high %v3189, %v3203
  %v3209 = vunpack.c.l.s4 1966171168
  %v3210 = vunpack.c.0.s8 %v3209
  %v3211 = vlaneseq
  %v3212 = vshrl.u32 %v3211, 7
  %v3213 = vsub.s32 %v3210, %v3212
  %v3214 = vrot.slane %v3204, %v3213
  %v3216 = vunpack.c.l.s4 1966171168
  %v3217 = vunpack.c.0.s8 %v3216
  %v3218 = vlaneseq
  %v3219 = vshrl.u32 %v3218, 7
  %v3220 = vsub.s32 %v3217, %v3219
  %v3221 = vrot.slane %v3206, %v3220
  %v3223 = vunpack.c.l.s4 1966171168
  %v3224 = vunpack.c.0.s8 %v3223
  %v3225 = vlaneseq
  %v3226 = vshrl.u32 %v3225, 7
  %v3227 = vsub.s32 %v3224, %v3226
  %v3228 = vrot.slane %v3205, %v3227
  %v3230 = vunpack.c.l.s4 1966171168
  %v3231 = vunpack.c.0.s8 %v3230
  %v3232 = vlaneseq
  %v3233 = vshrl.u32 %v3232, 7
  %v3234 = vsub.s32 %v3231, %v3233
  %v3235 = vrot.slane %v3207, %v3234
  %v3236 = vcombine.high %v3214, %v3214
  %v3237 = vcombine.high %v3221, %v3221
  %v3238 = vcombine.high %v3228, %v3228
  %v3239 = vcombine.high %v3235, %v3235
  %v3240 = vcombine.low %v3083, %v3085
  %v3241 = vcombine.high %v3083, %v3085
  %v3242 = vcombine.low %v3160, %v3162
  %v3243 = vcombine.high %v3160, %v3162
  %v3245 = vunpack.c.l.s4 1966171168
  %v3246 = vunpack.c.0.s8 %v3245
  %v3247 = vlaneseq
  %v3248 = vshrl.u32 %v3247, 7
  %v3249 = vsub.s32 %v3246, %v3248
  %v3250 = vrot.slane %v3240, %v3249
  %v3252 = vunpack.c.l.s4 1966171168
  %v3253 = vunpack.c.0.s8 %v3252
  %v3254 = vlaneseq
  %v3255 = vshrl.u32 %v3254, 7
  %v3256 = vsub.s32 %v3253, %v3255
  %v3257 = vrot.slane %v3241, %v3256
  %v3259 = vunpack.c.l.s4 1966171168
  %v3260 = vunpack.c.0.s8 %v3259
  %v3261 = vlaneseq
  %v3262 = vshrl.u32 %v3261, 7
  %v3263 = vsub.s32 %v3260, %v3262
  %v3264 = vrot.slane %v3242, %v3263
  %v3266 = vunpack.c.l.s4 1966171168
  %v3267 = vunpack.c.0.s8 %v3266
  %v3268 = vlaneseq
  %v3269 = vshrl.u32 %v3268, 7
  %v3270 = vsub.s32 %v3267, %v3269
  %v3271 = vrot.slane %v3243, %v3270
  %v3272 = vcombine.low %v3250, %v3264
  %v3273 = vcombine.high %v3250, %v3264
  %v3274 = vcombine.low %v3257, %v3271
  %v3275 = vcombine.high %v3257, %v3271
  %v3277 = vunpack.c.l.s4 1966171168
  %v3278 = vunpack.c.0.s8 %v3277
  %v3279 = vlaneseq
  %v3280 = vshrl.u32 %v3279, 7
  %v3281 = vsub.s32 %v3278, %v3280
  %v3282 = vrot.slane %v3272, %v3281
  %v3284 = vunpack.c.l.s4 1966171168
  %v3285 = vunpack.c.0.s8 %v3284
  %v3286 = vlaneseq
  %v3287 = vshrl.u32 %v3286, 7
  %v3288 = vsub.s32 %v3285, %v3287
  %v3289 = vrot.slane %v3274, %v3288
  %v3291 = vunpack.c.l.s4 1966171168
  %v3292 = vunpack.c.0.s8 %v3291
  %v3293 = vlaneseq
  %v3294 = vshrl.u32 %v3293, 7
  %v3295 = vsub.s32 %v3292, %v3294
  %v3296 = vrot.slane %v3273, %v3295
  %v3298 = vunpack.c.l.s4 1966171168
  %v3299 = vunpack.c.0.s8 %v3298
  %v3300 = vlaneseq
  %v3301 = vshrl.u32 %v3300, 7
  %v3302 = vsub.s32 %v3299, %v3301
  %v3303 = vrot.slane %v3275, %v3302
  %v3304 = vcombine.high %v3282, %v3282
  %v3305 = vcombine.high %v3289, %v3289
  %v3306 = vcombine.high %v3296, %v3296
  %v3307 = vcombine.high %v3303, %v3303
  %v3324 = vadd.f32 %v2863, %v3214
  %v3325 = vadd.f32 %v2865, %v3228
  %v3326 = vadd.f32 %v2867, %v3236
  %v3327 = vadd.f32 %v2869, %v3238
  %v3328 = vadd.f32 %v2871, %v3221
  %v3329 = vadd.f32 %v2873, %v3235
  %v3330 = vadd.f32 %v2875, %v3237
  %v3331 = vadd.f32 %v2877, %v3239
  %v3332 = vadd.f32 %v2879, %v3282
  %v3333 = vadd.f32 %v2881, %v3296
  %v3334 = vadd.f32 %v2883, %v3304
  %v3335 = vadd.f32 %v2885, %v3306
  %v3336 = vadd.f32 %v2887, %v3289
  %v3337 = vadd.f32 %v2889, %v3303
  %v3338 = vadd.f32 %v2891, %v3305
  %v3339 = vadd.f32 %v2893, %v3307
  %v3340 = vxor.u32 %v3324, 2147483648
  %v3341 = vxor.u32 %v3325, 2147483648
  %v3342 = vxor.u32 %v3326, 2147483648
  %v3343 = vxor.u32 %v3327, 2147483648
  %v3344 = vxor.u32 %v3328, 2147483648
  %v3345 = vxor.u32 %v3329, 2147483648
  %v3346 = vxor.u32 %v3330, 2147483648
  %v3347 = vxor.u32 %v3331, 2147483648
  %v3348 = vxor.u32 %v3332, 2147483648
  %v3349 = vxor.u32 %v3333, 2147483648
  %v3350 = vxor.u32 %v3334, 2147483648
  %v3351 = vxor.u32 %v3335, 2147483648
  %v3352 = vxor.u32 %v3336, 2147483648
  %v3353 = vxor.u32 %v3337, 2147483648
  %v3354 = vxor.u32 %v3338, 2147483648
  %v3355 = vxor.u32 %v3339, 2147483648
  %v3356 = vmul.f32 %v3340, 1.442695
  %v3357 = vpow.pop %v3356
  %v3358 = vmul.f32 %v3341, 1.442695
  %v3359 = vpow.pop %v3358
  %v3360 = vmul.f32 %v3342, 1.442695
  %v3361 = vpow.pop %v3360
  %v3362 = vmul.f32 %v3343, 1.442695
  %v3363 = vpow.pop %v3362
  %v3364 = vmul.f32 %v3344, 1.442695
  %v3365 = vpow.pop %v3364
  %v3366 = vmul.f32 %v3345, 1.442695
  %v3367 = vpow.pop %v3366
  %v3368 = vmul.f32 %v3346, 1.442695
  %v3369 = vpow.pop %v3368
  %v3370 = vmul.f32 %v3347, 1.442695
  %v3371 = vpow.pop %v3370
  %v3372 = vmul.f32 %v3348, 1.442695
  %v3373 = vpow.pop %v3372
  %v3374 = vmul.f32 %v3349, 1.442695
  %v3375 = vpow.pop %v3374
  %v3376 = vmul.f32 %v3350, 1.442695
  %v3377 = vpow.pop %v3376
  %v3378 = vmul.f32 %v3351, 1.442695
  %v3379 = vpow.pop %v3378
  %v3380 = vmul.f32 %v3352, 1.442695
  %v3381 = vpow.pop %v3380
  %v3382 = vmul.f32 %v3353, 1.442695
  %v3383 = vpow.pop %v3382
  %v3384 = vmul.f32 %v3354, 1.442695
  %v3385 = vpow.pop %v3384
  %v3386 = vmul.f32 %v3355, 1.442695
  %v3387 = vpow.pop %v3386
  %v3388 = vadd.f32 %v3357, 1.0
  %v3389 = vadd.f32 %v3359, 1.0
  %v3390 = vadd.f32 %v3361, 1.0
  %v3391 = vadd.f32 %v3363, 1.0
  %v3392 = vadd.f32 %v3365, 1.0
  %v3393 = vadd.f32 %v3367, 1.0
  %v3394 = vadd.f32 %v3369, 1.0
  %v3395 = vadd.f32 %v3371, 1.0
  %v3396 = vadd.f32 %v3373, 1.0
  %v3397 = vadd.f32 %v3375, 1.0
  %v3398 = vadd.f32 %v3377, 1.0
  %v3399 = vadd.f32 %v3379, 1.0
  %v3400 = vadd.f32 %v3381, 1.0
  %v3401 = vadd.f32 %v3383, 1.0
  %v3402 = vadd.f32 %v3385, 1.0
  %v3403 = vadd.f32 %v3387, 1.0
  %v3404 = vrcp.pop %v3388
  %v3405 = vmul.f32 1.0, %v3404
  %v3406 = vrcp.pop %v3389
  %v3407 = vmul.f32 1.0, %v3406
  %v3408 = vrcp.pop %v3390
  %v3409 = vmul.f32 1.0, %v3408
  %v3410 = vrcp.pop %v3391
  %v3411 = vmul.f32 1.0, %v3410
  %v3412 = vrcp.pop %v3392
  %v3413 = vmul.f32 1.0, %v3412
  %v3414 = vrcp.pop %v3393
  %v3415 = vmul.f32 1.0, %v3414
  %v3416 = vrcp.pop %v3394
  %v3417 = vmul.f32 1.0, %v3416
  %v3418 = vrcp.pop %v3395
  %v3419 = vmul.f32 1.0, %v3418
  %v3420 = vrcp.pop %v3396
  %v3421 = vmul.f32 1.0, %v3420
  %v3422 = vrcp.pop %v3397
  %v3423 = vmul.f32 1.0, %v3422
  %v3424 = vrcp.pop %v3398
  %v3425 = vmul.f32 1.0, %v3424
  %v3426 = vrcp.pop %v3399
  %v3427 = vmul.f32 1.0, %v3426
  %v3428 = vrcp.pop %v3400
  %v3429 = vmul.f32 1.0, %v3428
  %v3430 = vrcp.pop %v3401
  %v3431 = vmul.f32 1.0, %v3430
  %v3432 = vrcp.pop %v3402
  %v3433 = vmul.f32 1.0, %v3432
  %v3434 = vrcp.pop %v3403
  %v3435 = vmul.f32 1.0, %v3434
  %v3452 = vrot.slane %v3324, 3
  %v3453 = vrot.slane %v3325, 3
  %v3454 = vrot.slane %v3326, 3
  %v3455 = vrot.slane %v3327, 3
  %v3456 = vrot.slane %v3328, 3
  %v3457 = vrot.slane %v3329, 3
  %v3458 = vrot.slane %v3330, 3
  %v3459 = vrot.slane %v3331, 3
  %v3460 = vrot.slane %v3332, 3
  %v3461 = vrot.slane %v3333, 3
  %v3462 = vrot.slane %v3334, 3
  %v3463 = vrot.slane %v3335, 3
  %v3464 = vrot.slane %v3336, 3
  %v3465 = vrot.slane %v3337, 3
  %v3466 = vrot.slane %v3338, 3
  %v3467 = vrot.slane %v3339, 3
  %v3484 = vtanh.pop %v3452
  %v3485 = vtanh.pop %v3453
  %v3486 = vtanh.pop %v3454
  %v3487 = vtanh.pop %v3455
  %v3488 = vtanh.pop %v3456
  %v3489 = vtanh.pop %v3457
  %v3490 = vtanh.pop %v3458
  %v3491 = vtanh.pop %v3459
  %v3492 = vtanh.pop %v3460
  %v3493 = vtanh.pop %v3461
  %v3494 = vtanh.pop %v3462
  %v3495 = vtanh.pop %v3463
  %v3496 = vtanh.pop %v3464
  %v3497 = vtanh.pop %v3465
  %v3498 = vtanh.pop %v3466
  %v3499 = vtanh.pop %v3467
  %v3516 = vrot.slane %v3405, 1
  %v3517 = vrot.slane %v3407, 1
  %v3518 = vrot.slane %v3409, 1
  %v3519 = vrot.slane %v3411, 1
  %v3520 = vrot.slane %v3413, 1
  %v3521 = vrot.slane %v3415, 1
  %v3522 = vrot.slane %v3417, 1
  %v3523 = vrot.slane %v3419, 1
  %v3524 = vrot.slane %v3421, 1
  %v3525 = vrot.slane %v3423, 1
  %v3526 = vrot.slane %v3425, 1
  %v3527 = vrot.slane %v3427, 1
  %v3528 = vrot.slane %v3429, 1
  %v3529 = vrot.slane %v3431, 1
  %v3530 = vrot.slane %v3433, 1
  %v3531 = vrot.slane %v3435, 1
  %v3548 = vmul.f32 %v3516, %v2782
  %v3549 = vmul.f32 %v3517, %v2783
  %v3550 = vmul.f32 %v3518, %v2784
  %v3551 = vmul.f32 %v3519, %v2785
  %v3552 = vmul.f32 %v3520, %v2786
  %v3553 = vmul.f32 %v3521, %v2787
  %v3554 = vmul.f32 %v3522, %v2788
  %v3555 = vmul.f32 %v3523, %v2789
  %v3556 = vmul.f32 %v3524, %v2790
  %v3557 = vmul.f32 %v3525, %v2791
  %v3558 = vmul.f32 %v3526, %v2792
  %v3559 = vmul.f32 %v3527, %v2793
  %v3560 = vmul.f32 %v3528, %v2794
  %v3561 = vmul.f32 %v3529, %v2795
  %v3562 = vmul.f32 %v3530, %v2796
  %v3563 = vmul.f32 %v3531, %v2797
  %v3564 = vmul.f32 %v3405, %v3484
  %v3565 = vmul.f32 %v3407, %v3485
  %v3566 = vmul.f32 %v3409, %v3486
  %v3567 = vmul.f32 %v3411, %v3487
  %v3568 = vmul.f32 %v3413, %v3488
  %v3569 = vmul.f32 %v3415, %v3489
  %v3570 = vmul.f32 %v3417, %v3490
  %v3571 = vmul.f32 %v3419, %v3491
  %v3572 = vmul.f32 %v3421, %v3492
  %v3573 = vmul.f32 %v3423, %v3493
  %v3574 = vmul.f32 %v3425, %v3494
  %v3575 = vmul.f32 %v3427, %v3495
  %v3576 = vmul.f32 %v3429, %v3496
  %v3577 = vmul.f32 %v3431, %v3497
  %v3578 = vmul.f32 %v3433, %v3498
  %v3579 = vmul.f32 %v3435, %v3499
  %v3580 = vadd.f32 %v3548, %v3564
  %v3581 = vadd.f32 %v3549, %v3565
  %v3582 = vadd.f32 %v3550, %v3566
  %v3583 = vadd.f32 %v3551, %v3567
  %v3584 = vadd.f32 %v3552, %v3568
  %v3585 = vadd.f32 %v3553, %v3569
  %v3586 = vadd.f32 %v3554, %v3570
  %v3587 = vadd.f32 %v3555, %v3571
  %v3588 = vadd.f32 %v3556, %v3572
  %v3589 = vadd.f32 %v3557, %v3573
  %v3590 = vadd.f32 %v3558, %v3574
  %v3591 = vadd.f32 %v3559, %v3575
  %v3592 = vadd.f32 %v3560, %v3576
  %v3593 = vadd.f32 %v3561, %v3577
  %v3594 = vadd.f32 %v3562, %v3578
  %v3595 = vadd.f32 %v3563, %v3579
  %v3596 = vtanh.pop %v3580
  %v3597 = vtanh.pop %v3581
  %v3598 = vtanh.pop %v3582
  %v3599 = vtanh.pop %v3583
  %v3600 = vtanh.pop %v3584
  %v3601 = vtanh.pop %v3585
  %v3602 = vtanh.pop %v3586
  %v3603 = vtanh.pop %v3587
  %v3604 = vtanh.pop %v3588
  %v3605 = vtanh.pop %v3589
  %v3606 = vtanh.pop %v3590
  %v3607 = vtanh.pop %v3591
  %v3608 = vtanh.pop %v3592
  %v3609 = vtanh.pop %v3593
  %v3610 = vtanh.pop %v3594
  %v3611 = vtanh.pop %v3595
  %v3612 = vrot.slane %v3405, 2
  %v3613 = vrot.slane %v3407, 2
  %v3614 = vrot.slane %v3409, 2
  %v3615 = vrot.slane %v3411, 2
  %v3616 = vrot.slane %v3413, 2
  %v3617 = vrot.slane %v3415, 2
  %v3618 = vrot.slane %v3417, 2
  %v3619 = vrot.slane %v3419, 2
  %v3620 = vrot.slane %v3421, 2
  %v3621 = vrot.slane %v3423, 2
  %v3622 = vrot.slane %v3425, 2
  %v3623 = vrot.slane %v3427, 2
  %v3624 = vrot.slane %v3429, 2
  %v3625 = vrot.slane %v3431, 2
  %v3626 = vrot.slane %v3433, 2
  %v3627 = vrot.slane %v3435, 2
  %v3644 = vmul.f32 %v3612, %v3596
  %v3645 = vmul.f32 %v3613, %v3597
  %v3646 = vmul.f32 %v3614, %v3598
  %v3647 = vmul.f32 %v3615, %v3599
  %v3648 = vmul.f32 %v3616, %v3600
  %v3649 = vmul.f32 %v3617, %v3601
  %v3650 = vmul.f32 %v3618, %v3602
  %v3651 = vmul.f32 %v3619, %v3603
  %v3652 = vmul.f32 %v3620, %v3604
  %v3653 = vmul.f32 %v3621, %v3605
  %v3654 = vmul.f32 %v3622, %v3606
  %v3655 = vmul.f32 %v3623, %v3607
  %v3656 = vmul.f32 %v3624, %v3608
  %v3657 = vmul.f32 %v3625, %v3609
  %v3658 = vmul.f32 %v3626, %v3610
  %v3659 = vmul.f32 %v3627, %v3611
  %s3660 = scalar_lea.vmem [#allocation2], 4
  %v3661 = vld [vmem:[%s3660] ss:$8 sm:$0xf]
  %s3662 = scalar_lea.vmem [#allocation2], 36
  %v3663 = vld [vmem:[%s3662] ss:$8 sm:$0xf]
  %s3664 = scalar_lea.vmem [#allocation2], 68
  %v3665 = vld [vmem:[%s3664] ss:$8 sm:$0xf]
  %s3666 = scalar_lea.vmem [#allocation2], 100
  %v3667 = vld [vmem:[%s3666] ss:$8 sm:$0xf]
  %s3668 = scalar_lea.vmem [#allocation2], 132
  %v3669 = vld [vmem:[%s3668] ss:$8 sm:$0xf]
  %s3670 = scalar_lea.vmem [#allocation2], 164
  %v3671 = vld [vmem:[%s3670] ss:$8 sm:$0xf]
  %s3672 = scalar_lea.vmem [#allocation2], 196
  %v3673 = vld [vmem:[%s3672] ss:$8 sm:$0xf]
  %s3674 = scalar_lea.vmem [#allocation2], 228
  %v3675 = vld [vmem:[%s3674] ss:$8 sm:$0xf]
  %s3676 = scalar_lea.vmem [#allocation2], 260
  %v3677 = vld [vmem:[%s3676] ss:$8 sm:$0xf]
  %s3678 = scalar_lea.vmem [#allocation2], 292
  %v3679 = vld [vmem:[%s3678] ss:$8 sm:$0xf]
  %s3680 = scalar_lea.vmem [#allocation2], 324
  %v3681 = vld [vmem:[%s3680] ss:$8 sm:$0xf]
  %s3682 = scalar_lea.vmem [#allocation2], 356
  %v3683 = vld [vmem:[%s3682] ss:$8 sm:$0xf]
  %s3684 = scalar_lea.vmem [#allocation2], 388
  %v3685 = vld [vmem:[%s3684] ss:$8 sm:$0xf]
  %s3686 = scalar_lea.vmem [#allocation2], 420
  %v3687 = vld [vmem:[%s3686] ss:$8 sm:$0xf]
  %s3688 = scalar_lea.vmem [#allocation2], 452
  %v3689 = vld [vmem:[%s3688] ss:$8 sm:$0xf]
  %s3690 = scalar_lea.vmem [#allocation2], 484
  %v3691 = vld [vmem:[%s3690] ss:$8 sm:$0xf]
  %v3708 = vcombine.low %v3644, %v3645
  %v3709 = vcombine.low %v3646, %v3647
  %v3710 = vcombine.low %v3648, %v3649
  %v3711 = vcombine.low %v3650, %v3651
  %v3713 = vunpack.c.l.s4 1966171168
  %v3714 = vunpack.c.0.s8 %v3713
  %v3715 = vlaneseq
  %v3716 = vshrl.u32 %v3715, 7
  %v3717 = vsub.s32 %v3714, %v3716
  %v3718 = vrot.slane %v3708, %v3717
  %v3720 = vunpack.c.l.s4 1966171168
  %v3721 = vunpack.c.0.s8 %v3720
  %v3722 = vlaneseq
  %v3723 = vshrl.u32 %v3722, 7
  %v3724 = vsub.s32 %v3721, %v3723
  %v3725 = vrot.slane %v3709, %v3724
  %v3727 = vunpack.c.l.s4 1966171168
  %v3728 = vunpack.c.0.s8 %v3727
  %v3729 = vlaneseq
  %v3730 = vshrl.u32 %v3729, 7
  %v3731 = vsub.s32 %v3728, %v3730
  %v3732 = vrot.slane %v3710, %v3731
  %v3734 = vunpack.c.l.s4 1966171168
  %v3735 = vunpack.c.0.s8 %v3734
  %v3736 = vlaneseq
  %v3737 = vshrl.u32 %v3736, 7
  %v3738 = vsub.s32 %v3735, %v3737
  %v3739 = vrot.slane %v3711, %v3738
  %v3740 = vcombine.low %v3718, %v3725
  %v3741 = vcombine.low %v3732, %v3739
  %v3743 = vunpack.c.l.s4 1966171168
  %v3744 = vunpack.c.0.s8 %v3743
  %v3745 = vlaneseq
  %v3746 = vshrl.u32 %v3745, 7
  %v3747 = vsub.s32 %v3744, %v3746
  %v3748 = vrot.slane %v3740, %v3747
  %v3750 = vunpack.c.l.s4 1966171168
  %v3751 = vunpack.c.0.s8 %v3750
  %v3752 = vlaneseq
  %v3753 = vshrl.u32 %v3752, 7
  %v3754 = vsub.s32 %v3751, %v3753
  %v3755 = vrot.slane %v3741, %v3754
  %v3756 = vcombine.low %v3748, %v3755
  %v3757 = vcombine.low %v3652, %v3653
  %v3758 = vcombine.low %v3654, %v3655
  %v3759 = vcombine.low %v3656, %v3657
  %v3760 = vcombine.low %v3658, %v3659
  %v3762 = vunpack.c.l.s4 1966171168
  %v3763 = vunpack.c.0.s8 %v3762
  %v3764 = vlaneseq
  %v3765 = vshrl.u32 %v3764, 7
  %v3766 = vsub.s32 %v3763, %v3765
  %v3767 = vrot.slane %v3757, %v3766
  %v3769 = vunpack.c.l.s4 1966171168
  %v3770 = vunpack.c.0.s8 %v3769
  %v3771 = vlaneseq
  %v3772 = vshrl.u32 %v3771, 7
  %v3773 = vsub.s32 %v3770, %v3772
  %v3774 = vrot.slane %v3758, %v3773
  %v3776 = vunpack.c.l.s4 1966171168
  %v3777 = vunpack.c.0.s8 %v3776
  %v3778 = vlaneseq
  %v3779 = vshrl.u32 %v3778, 7
  %v3780 = vsub.s32 %v3777, %v3779
  %v3781 = vrot.slane %v3759, %v3780
  %v3783 = vunpack.c.l.s4 1966171168
  %v3784 = vunpack.c.0.s8 %v3783
  %v3785 = vlaneseq
  %v3786 = vshrl.u32 %v3785, 7
  %v3787 = vsub.s32 %v3784, %v3786
  %v3788 = vrot.slane %v3760, %v3787
  %v3789 = vcombine.low %v3767, %v3774
  %v3790 = vcombine.low %v3781, %v3788
  %v3792 = vunpack.c.l.s4 1966171168
  %v3793 = vunpack.c.0.s8 %v3792
  %v3794 = vlaneseq
  %v3795 = vshrl.u32 %v3794, 7
  %v3796 = vsub.s32 %v3793, %v3795
  %v3797 = vrot.slane %v3789, %v3796
  %v3799 = vunpack.c.l.s4 1966171168
  %v3800 = vunpack.c.0.s8 %v3799
  %v3801 = vlaneseq
  %v3802 = vshrl.u32 %v3801, 7
  %v3803 = vsub.s32 %v3800, %v3802
  %v3804 = vrot.slane %v3790, %v3803
  %v3805 = vcombine.low %v3797, %v3804
  %3808 = vmatprep.subr.mxu0 %v613
  %3809 = vmatpush1.msra.mxu0 %v612
  %3810 = vmatprep.subr.mxu0 %v609
  %3811 = vmatpush1.msra.mxu0 %v608
  %3812 = vmatprep.subr.mxu0 %v605
  %3813 = vmatpush1.msra.mxu0 %v604
  %3814 = vmatprep.subr.mxu0 %v601
  %3815 = vmatpush1.msra.mxu0 %v600
  %3816 = vmatprep.subr.mxu0 %v597
  %3817 = vmatpush1.msra.mxu0 %v596
  %3818 = vmatprep.subr.mxu0 %v593
  %3819 = vmatpush1.msra.mxu0 %v592
  %3820 = vmatprep.subr.mxu0 %v589
  %3821 = vmatpush1.msra.mxu0 %v588
  %3822 = vmatprep.subr.mxu0 %v585
  %3823 = vmatpush1.msra.mxu0 %v584
  %3824 = vmatprep.subr.mxu0 %v581
  %3825 = vmatpush1.msra.mxu0 %v580
  %3826 = vmatprep.subr.mxu0 %v577
  %3827 = vmatpush1.msra.mxu0 %v576
  %3828 = vmatprep.subr.mxu0 %v573
  %3829 = vmatpush1.msra.mxu0 %v572
  %3830 = vmatprep.subr.mxu0 %v569
  %3831 = vmatpush1.msra.mxu0 %v568
  %3832 = vmatprep.subr.mxu0 %v565
  %3833 = vmatpush1.msra.mxu0 %v564
  %3834 = vmatprep.subr.mxu0 %v561
  %3835 = vmatpush1.msra.mxu0 %v560
  %3836 = vmatprep.subr.mxu0 %v557
  %3837 = vmatpush1.msra.mxu0 %v556
  %3838 = vmatprep.subr.mxu0 %v553
  %3839 = vmatpush1.msra.mxu0 %v552
  %3840 = vmatprep.subr.mxu0 0.0
  %3841 = vmatpush2.msra.mxu0 0.0
  %3842 = vmatprep.subr.mxu0 0.0
  %3843 = vmatpush2.msra.mxu0 0.0
  %3844 = vmatprep.subr.mxu0 0.0
  %3845 = vmatpush2.msra.mxu0 0.0
  %3846 = vmatprep.subr.mxu0 0.0
  %3847 = vmatpush2.msra.mxu0 0.0
  %3848 = vmatprep.subr.mxu0 0.0
  %3849 = vmatpush2.msra.mxu0 0.0
  %3850 = vmatprep.subr.mxu0 0.0
  %3851 = vmatpush2.msra.mxu0 0.0
  %3852 = vmatprep.subr.mxu0 0.0
  %3853 = vmatpush2.msra.mxu0 0.0
  %3854 = vmatprep.subr.mxu0 0.0
  %3855 = vmatpush2.msra.mxu0 0.0
  %3856 = vmatprep.subr.mxu0 0.0
  %3857 = vmatpush2.msra.mxu0 0.0
  %3858 = vmatprep.subr.mxu0 0.0
  %3859 = vmatpush2.msra.mxu0 0.0
  %3860 = vmatprep.subr.mxu0 0.0
  %3861 = vmatpush2.msra.mxu0 0.0
  %3862 = vmatprep.subr.mxu0 0.0
  %3863 = vmatpush2.msra.mxu0 0.0
  %3864 = vmatprep.subr.mxu0 0.0
  %3865 = vmatpush2.msra.mxu0 0.0
  %3866 = vmatprep.subr.mxu0 0.0
  %3867 = vmatpush2.msra.mxu0 0.0
  %3868 = vmatprep.subr.mxu0 0.0
  %3869 = vmatpush2.msra.mxu0 0.0
  %3870 = vmatprep.subr.mxu0 0.0
  %3871 = vmatpush2.msra.mxu0 0.0
  %3872 = vmatprep.mubr.f32.mxu0 0.0
  %3873 = vmatmul.mubr.f32.gmra.mxu0 %v3756
  %v3874 = vpop.f32.mrf.mxu0
  %v3875 = vadd.f32 0.0, %v3874
  %v3876 = vpop.f32.mrf.mxu0
  %v3877 = vadd.f32 0.0, %v3876
  %3878 = vmatprep.mubr.f32.mxu0 0.0
  %3879 = vmatmul.mubr.f32.gmra.mxu0 %v3805
  %v3880 = vpop.f32.mrf.mxu0
  %v3881 = vadd.f32 0.0, %v3880
  %v3882 = vpop.f32.mrf.mxu0
  %v3883 = vadd.f32 0.0, %v3882
  %3884 = vdwg.mxu0
  %3885 = vmatprep.subr.mxu0 %v615
  %3886 = vmatpush1.msra.mxu0 %v614
  %3887 = vmatprep.subr.mxu0 %v611
  %3888 = vmatpush1.msra.mxu0 %v610
  %3889 = vmatprep.subr.mxu0 %v607
  %3890 = vmatpush1.msra.mxu0 %v606
  %3891 = vmatprep.subr.mxu0 %v603
  %3892 = vmatpush1.msra.mxu0 %v602
  %3893 = vmatprep.subr.mxu0 %v599
  %3894 = vmatpush1.msra.mxu0 %v598
  %3895 = vmatprep.subr.mxu0 %v595
  %3896 = vmatpush1.msra.mxu0 %v594
  %3897 = vmatprep.subr.mxu0 %v591
  %3898 = vmatpush1.msra.mxu0 %v590
  %3899 = vmatprep.subr.mxu0 %v587
  %3900 = vmatpush1.msra.mxu0 %v586
  %3901 = vmatprep.subr.mxu0 %v583
  %3902 = vmatpush1.msra.mxu0 %v582
  %3903 = vmatprep.subr.mxu0 %v579
  %3904 = vmatpush1.msra.mxu0 %v578
  %3905 = vmatprep.subr.mxu0 %v575
  %3906 = vmatpush1.msra.mxu0 %v574
  %3907 = vmatprep.subr.mxu0 %v571
  %3908 = vmatpush1.msra.mxu0 %v570
  %3909 = vmatprep.subr.mxu0 %v567
  %3910 = vmatpush1.msra.mxu0 %v566
  %3911 = vmatprep.subr.mxu0 %v563
  %3912 = vmatpush1.msra.mxu0 %v562
  %3913 = vmatprep.subr.mxu0 %v559
  %3914 = vmatpush1.msra.mxu0 %v558
  %3915 = vmatprep.subr.mxu0 %v555
  %3916 = vmatpush1.msra.mxu0 %v554
  %3917 = vmatprep.subr.mxu0 0.0
  %3918 = vmatpush2.msra.mxu0 0.0
  %3919 = vmatprep.subr.mxu0 0.0
  %3920 = vmatpush2.msra.mxu0 0.0
  %3921 = vmatprep.subr.mxu0 0.0
  %3922 = vmatpush2.msra.mxu0 0.0
  %3923 = vmatprep.subr.mxu0 0.0
  %3924 = vmatpush2.msra.mxu0 0.0
  %3925 = vmatprep.subr.mxu0 0.0
  %3926 = vmatpush2.msra.mxu0 0.0
  %3927 = vmatprep.subr.mxu0 0.0
  %3928 = vmatpush2.msra.mxu0 0.0
  %3929 = vmatprep.subr.mxu0 0.0
  %3930 = vmatpush2.msra.mxu0 0.0
  %3931 = vmatprep.subr.mxu0 0.0
  %3932 = vmatpush2.msra.mxu0 0.0
  %3933 = vmatprep.subr.mxu0 0.0
  %3934 = vmatpush2.msra.mxu0 0.0
  %3935 = vmatprep.subr.mxu0 0.0
  %3936 = vmatpush2.msra.mxu0 0.0
  %3937 = vmatprep.subr.mxu0 0.0
  %3938 = vmatpush2.msra.mxu0 0.0
  %3939 = vmatprep.subr.mxu0 0.0
  %3940 = vmatpush2.msra.mxu0 0.0
  %3941 = vmatprep.subr.mxu0 0.0
  %3942 = vmatpush2.msra.mxu0 0.0
  %3943 = vmatprep.subr.mxu0 0.0
  %3944 = vmatpush2.msra.mxu0 0.0
  %3945 = vmatprep.subr.mxu0 0.0
  %3946 = vmatpush2.msra.mxu0 0.0
  %3947 = vmatprep.subr.mxu0 0.0
  %3948 = vmatpush2.msra.mxu0 0.0
  %3949 = vmatprep.mubr.f32.mxu0 0.0
  %3950 = vmatmul.mubr.f32.gmra.mxu0 %v3756
  %v3951 = vpop.f32.mrf.mxu0
  %v3952 = vadd.f32 0.0, %v3951
  %v3953 = vpop.f32.mrf.mxu0
  %v3954 = vadd.f32 0.0, %v3953
  %3955 = vmatprep.mubr.f32.mxu0 0.0
  %3956 = vmatmul.mubr.f32.gmra.mxu0 %v3805
  %v3957 = vpop.f32.mrf.mxu0
  %v3958 = vadd.f32 0.0, %v3957
  %v3959 = vpop.f32.mrf.mxu0
  %v3960 = vadd.f32 0.0, %v3959
  %3961 = vdwg.mxu0
  %v3970 = vcombine.low %v3875, %v3877
  %v3971 = vcombine.high %v3875, %v3877
  %v3972 = vcombine.low %v3952, %v3954
  %v3973 = vcombine.high %v3952, %v3954
  %v3975 = vunpack.c.l.s4 1966171168
  %v3976 = vunpack.c.0.s8 %v3975
  %v3977 = vlaneseq
  %v3978 = vshrl.u32 %v3977, 7
  %v3979 = vsub.s32 %v3976, %v3978
  %v3980 = vrot.slane %v3970, %v3979
  %v3982 = vunpack.c.l.s4 1966171168
  %v3983 = vunpack.c.0.s8 %v3982
  %v3984 = vlaneseq
  %v3985 = vshrl.u32 %v3984, 7
  %v3986 = vsub.s32 %v3983, %v3985
  %v3987 = vrot.slane %v3971, %v3986
  %v3989 = vunpack.c.l.s4 1966171168
  %v3990 = vunpack.c.0.s8 %v3989
  %v3991 = vlaneseq
  %v3992 = vshrl.u32 %v3991, 7
  %v3993 = vsub.s32 %v3990, %v3992
  %v3994 = vrot.slane %v3972, %v3993
  %v3996 = vunpack.c.l.s4 1966171168
  %v3997 = vunpack.c.0.s8 %v3996
  %v3998 = vlaneseq
  %v3999 = vshrl.u32 %v3998, 7
  %v4000 = vsub.s32 %v3997, %v3999
  %v4001 = vrot.slane %v3973, %v4000
  %v4002 = vcombine.low %v3980, %v3994
  %v4003 = vcombine.high %v3980, %v3994
  %v4004 = vcombine.low %v3987, %v4001
  %v4005 = vcombine.high %v3987, %v4001
  %v4007 = vunpack.c.l.s4 1966171168
  %v4008 = vunpack.c.0.s8 %v4007
  %v4009 = vlaneseq
  %v4010 = vshrl.u32 %v4009, 7
  %v4011 = vsub.s32 %v4008, %v4010
  %v4012 = vrot.slane %v4002, %v4011
  %v4014 = vunpack.c.l.s4 1966171168
  %v4015 = vunpack.c.0.s8 %v4014
  %v4016 = vlaneseq
  %v4017 = vshrl.u32 %v4016, 7
  %v4018 = vsub.s32 %v4015, %v4017
  %v4019 = vrot.slane %v4004, %v4018
  %v4021 = vunpack.c.l.s4 1966171168
  %v4022 = vunpack.c.0.s8 %v4021
  %v4023 = vlaneseq
  %v4024 = vshrl.u32 %v4023, 7
  %v4025 = vsub.s32 %v4022, %v4024
  %v4026 = vrot.slane %v4003, %v4025
  %v4028 = vunpack.c.l.s4 1966171168
  %v4029 = vunpack.c.0.s8 %v4028
  %v4030 = vlaneseq
  %v4031 = vshrl.u32 %v4030, 7
  %v4032 = vsub.s32 %v4029, %v4031
  %v4033 = vrot.slane %v4005, %v4032
  %v4034 = vcombine.high %v4012, %v4012
  %v4035 = vcombine.high %v4019, %v4019
  %v4036 = vcombine.high %v4026, %v4026
  %v4037 = vcombine.high %v4033, %v4033
  %v4038 = vcombine.low %v3881, %v3883
  %v4039 = vcombine.high %v3881, %v3883
  %v4040 = vcombine.low %v3958, %v3960
  %v4041 = vcombine.high %v3958, %v3960
  %v4043 = vunpack.c.l.s4 1966171168
  %v4044 = vunpack.c.0.s8 %v4043
  %v4045 = vlaneseq
  %v4046 = vshrl.u32 %v4045, 7
  %v4047 = vsub.s32 %v4044, %v4046
  %v4048 = vrot.slane %v4038, %v4047
  %v4050 = vunpack.c.l.s4 1966171168
  %v4051 = vunpack.c.0.s8 %v4050
  %v4052 = vlaneseq
  %v4053 = vshrl.u32 %v4052, 7
  %v4054 = vsub.s32 %v4051, %v4053
  %v4055 = vrot.slane %v4039, %v4054
  %v4057 = vunpack.c.l.s4 1966171168
  %v4058 = vunpack.c.0.s8 %v4057
  %v4059 = vlaneseq
  %v4060 = vshrl.u32 %v4059, 7
  %v4061 = vsub.s32 %v4058, %v4060
  %v4062 = vrot.slane %v4040, %v4061
  %v4064 = vunpack.c.l.s4 1966171168
  %v4065 = vunpack.c.0.s8 %v4064
  %v4066 = vlaneseq
  %v4067 = vshrl.u32 %v4066, 7
  %v4068 = vsub.s32 %v4065, %v4067
  %v4069 = vrot.slane %v4041, %v4068
  %v4070 = vcombine.low %v4048, %v4062
  %v4071 = vcombine.high %v4048, %v4062
  %v4072 = vcombine.low %v4055, %v4069
  %v4073 = vcombine.high %v4055, %v4069
  %v4075 = vunpack.c.l.s4 1966171168
  %v4076 = vunpack.c.0.s8 %v4075
  %v4077 = vlaneseq
  %v4078 = vshrl.u32 %v4077, 7
  %v4079 = vsub.s32 %v4076, %v4078
  %v4080 = vrot.slane %v4070, %v4079
  %v4082 = vunpack.c.l.s4 1966171168
  %v4083 = vunpack.c.0.s8 %v4082
  %v4084 = vlaneseq
  %v4085 = vshrl.u32 %v4084, 7
  %v4086 = vsub.s32 %v4083, %v4085
  %v4087 = vrot.slane %v4072, %v4086
  %v4089 = vunpack.c.l.s4 1966171168
  %v4090 = vunpack.c.0.s8 %v4089
  %v4091 = vlaneseq
  %v4092 = vshrl.u32 %v4091, 7
  %v4093 = vsub.s32 %v4090, %v4092
  %v4094 = vrot.slane %v4071, %v4093
  %v4096 = vunpack.c.l.s4 1966171168
  %v4097 = vunpack.c.0.s8 %v4096
  %v4098 = vlaneseq
  %v4099 = vshrl.u32 %v4098, 7
  %v4100 = vsub.s32 %v4097, %v4099
  %v4101 = vrot.slane %v4073, %v4100
  %v4102 = vcombine.high %v4080, %v4080
  %v4103 = vcombine.high %v4087, %v4087
  %v4104 = vcombine.high %v4094, %v4094
  %v4105 = vcombine.high %v4101, %v4101
  %v4122 = vadd.f32 %v3661, %v4012
  %v4123 = vadd.f32 %v3663, %v4026
  %v4124 = vadd.f32 %v3665, %v4034
  %v4125 = vadd.f32 %v3667, %v4036
  %v4126 = vadd.f32 %v3669, %v4019
  %v4127 = vadd.f32 %v3671, %v4033
  %v4128 = vadd.f32 %v3673, %v4035
  %v4129 = vadd.f32 %v3675, %v4037
  %v4130 = vadd.f32 %v3677, %v4080
  %v4131 = vadd.f32 %v3679, %v4094
  %v4132 = vadd.f32 %v3681, %v4102
  %v4133 = vadd.f32 %v3683, %v4104
  %v4134 = vadd.f32 %v3685, %v4087
  %v4135 = vadd.f32 %v3687, %v4101
  %v4136 = vadd.f32 %v3689, %v4103
  %v4137 = vadd.f32 %v3691, %v4105
  %v4138 = vxor.u32 %v4122, 2147483648
  %v4139 = vxor.u32 %v4123, 2147483648
  %v4140 = vxor.u32 %v4124, 2147483648
  %v4141 = vxor.u32 %v4125, 2147483648
  %v4142 = vxor.u32 %v4126, 2147483648
  %v4143 = vxor.u32 %v4127, 2147483648
  %v4144 = vxor.u32 %v4128, 2147483648
  %v4145 = vxor.u32 %v4129, 2147483648
  %v4146 = vxor.u32 %v4130, 2147483648
  %v4147 = vxor.u32 %v4131, 2147483648
  %v4148 = vxor.u32 %v4132, 2147483648
  %v4149 = vxor.u32 %v4133, 2147483648
  %v4150 = vxor.u32 %v4134, 2147483648
  %v4151 = vxor.u32 %v4135, 2147483648
  %v4152 = vxor.u32 %v4136, 2147483648
  %v4153 = vxor.u32 %v4137, 2147483648
  %v4154 = vmul.f32 %v4138, 1.442695
  %v4155 = vpow.pop %v4154
  %v4156 = vmul.f32 %v4139, 1.442695
  %v4157 = vpow.pop %v4156
  %v4158 = vmul.f32 %v4140, 1.442695
  %v4159 = vpow.pop %v4158
  %v4160 = vmul.f32 %v4141, 1.442695
  %v4161 = vpow.pop %v4160
  %v4162 = vmul.f32 %v4142, 1.442695
  %v4163 = vpow.pop %v4162
  %v4164 = vmul.f32 %v4143, 1.442695
  %v4165 = vpow.pop %v4164
  %v4166 = vmul.f32 %v4144, 1.442695
  %v4167 = vpow.pop %v4166
  %v4168 = vmul.f32 %v4145, 1.442695
  %v4169 = vpow.pop %v4168
  %v4170 = vmul.f32 %v4146, 1.442695
  %v4171 = vpow.pop %v4170
  %v4172 = vmul.f32 %v4147, 1.442695
  %v4173 = vpow.pop %v4172
  %v4174 = vmul.f32 %v4148, 1.442695
  %v4175 = vpow.pop %v4174
  %v4176 = vmul.f32 %v4149, 1.442695
  %v4177 = vpow.pop %v4176
  %v4178 = vmul.f32 %v4150, 1.442695
  %v4179 = vpow.pop %v4178
  %v4180 = vmul.f32 %v4151, 1.442695
  %v4181 = vpow.pop %v4180
  %v4182 = vmul.f32 %v4152, 1.442695
  %v4183 = vpow.pop %v4182
  %v4184 = vmul.f32 %v4153, 1.442695
  %v4185 = vpow.pop %v4184
  %v4186 = vadd.f32 %v4155, 1.0
  %v4187 = vadd.f32 %v4157, 1.0
  %v4188 = vadd.f32 %v4159, 1.0
  %v4189 = vadd.f32 %v4161, 1.0
  %v4190 = vadd.f32 %v4163, 1.0
  %v4191 = vadd.f32 %v4165, 1.0
  %v4192 = vadd.f32 %v4167, 1.0
  %v4193 = vadd.f32 %v4169, 1.0
  %v4194 = vadd.f32 %v4171, 1.0
  %v4195 = vadd.f32 %v4173, 1.0
  %v4196 = vadd.f32 %v4175, 1.0
  %v4197 = vadd.f32 %v4177, 1.0
  %v4198 = vadd.f32 %v4179, 1.0
  %v4199 = vadd.f32 %v4181, 1.0
  %v4200 = vadd.f32 %v4183, 1.0
  %v4201 = vadd.f32 %v4185, 1.0
  %v4202 = vrcp.pop %v4186
  %v4203 = vmul.f32 1.0, %v4202
  %v4204 = vrcp.pop %v4187
  %v4205 = vmul.f32 1.0, %v4204
  %v4206 = vrcp.pop %v4188
  %v4207 = vmul.f32 1.0, %v4206
  %v4208 = vrcp.pop %v4189
  %v4209 = vmul.f32 1.0, %v4208
  %v4210 = vrcp.pop %v4190
  %v4211 = vmul.f32 1.0, %v4210
  %v4212 = vrcp.pop %v4191
  %v4213 = vmul.f32 1.0, %v4212
  %v4214 = vrcp.pop %v4192
  %v4215 = vmul.f32 1.0, %v4214
  %v4216 = vrcp.pop %v4193
  %v4217 = vmul.f32 1.0, %v4216
  %v4218 = vrcp.pop %v4194
  %v4219 = vmul.f32 1.0, %v4218
  %v4220 = vrcp.pop %v4195
  %v4221 = vmul.f32 1.0, %v4220
  %v4222 = vrcp.pop %v4196
  %v4223 = vmul.f32 1.0, %v4222
  %v4224 = vrcp.pop %v4197
  %v4225 = vmul.f32 1.0, %v4224
  %v4226 = vrcp.pop %v4198
  %v4227 = vmul.f32 1.0, %v4226
  %v4228 = vrcp.pop %v4199
  %v4229 = vmul.f32 1.0, %v4228
  %v4230 = vrcp.pop %v4200
  %v4231 = vmul.f32 1.0, %v4230
  %v4232 = vrcp.pop %v4201
  %v4233 = vmul.f32 1.0, %v4232
  %v4250 = vrot.slane %v4122, 3
  %v4251 = vrot.slane %v4123, 3
  %v4252 = vrot.slane %v4124, 3
  %v4253 = vrot.slane %v4125, 3
  %v4254 = vrot.slane %v4126, 3
  %v4255 = vrot.slane %v4127, 3
  %v4256 = vrot.slane %v4128, 3
  %v4257 = vrot.slane %v4129, 3
  %v4258 = vrot.slane %v4130, 3
  %v4259 = vrot.slane %v4131, 3
  %v4260 = vrot.slane %v4132, 3
  %v4261 = vrot.slane %v4133, 3
  %v4262 = vrot.slane %v4134, 3
  %v4263 = vrot.slane %v4135, 3
  %v4264 = vrot.slane %v4136, 3
  %v4265 = vrot.slane %v4137, 3
  %v4282 = vtanh.pop %v4250
  %v4283 = vtanh.pop %v4251
  %v4284 = vtanh.pop %v4252
  %v4285 = vtanh.pop %v4253
  %v4286 = vtanh.pop %v4254
  %v4287 = vtanh.pop %v4255
  %v4288 = vtanh.pop %v4256
  %v4289 = vtanh.pop %v4257
  %v4290 = vtanh.pop %v4258
  %v4291 = vtanh.pop %v4259
  %v4292 = vtanh.pop %v4260
  %v4293 = vtanh.pop %v4261
  %v4294 = vtanh.pop %v4262
  %v4295 = vtanh.pop %v4263
  %v4296 = vtanh.pop %v4264
  %v4297 = vtanh.pop %v4265
  %v4314 = vrot.slane %v4203, 1
  %v4315 = vrot.slane %v4205, 1
  %v4316 = vrot.slane %v4207, 1
  %v4317 = vrot.slane %v4209, 1
  %v4318 = vrot.slane %v4211, 1
  %v4319 = vrot.slane %v4213, 1
  %v4320 = vrot.slane %v4215, 1
  %v4321 = vrot.slane %v4217, 1
  %v4322 = vrot.slane %v4219, 1
  %v4323 = vrot.slane %v4221, 1
  %v4324 = vrot.slane %v4223, 1
  %v4325 = vrot.slane %v4225, 1
  %v4326 = vrot.slane %v4227, 1
  %v4327 = vrot.slane %v4229, 1
  %v4328 = vrot.slane %v4231, 1
  %v4329 = vrot.slane %v4233, 1
  %v4346 = vmul.f32 %v4314, %v3580
  %v4347 = vmul.f32 %v4315, %v3581
  %v4348 = vmul.f32 %v4316, %v3582
  %v4349 = vmul.f32 %v4317, %v3583
  %v4350 = vmul.f32 %v4318, %v3584
  %v4351 = vmul.f32 %v4319, %v3585
  %v4352 = vmul.f32 %v4320, %v3586
  %v4353 = vmul.f32 %v4321, %v3587
  %v4354 = vmul.f32 %v4322, %v3588
  %v4355 = vmul.f32 %v4323, %v3589
  %v4356 = vmul.f32 %v4324, %v3590
  %v4357 = vmul.f32 %v4325, %v3591
  %v4358 = vmul.f32 %v4326, %v3592
  %v4359 = vmul.f32 %v4327, %v3593
  %v4360 = vmul.f32 %v4328, %v3594
  %v4361 = vmul.f32 %v4329, %v3595
  %v4362 = vmul.f32 %v4203, %v4282
  %v4363 = vmul.f32 %v4205, %v4283
  %v4364 = vmul.f32 %v4207, %v4284
  %v4365 = vmul.f32 %v4209, %v4285
  %v4366 = vmul.f32 %v4211, %v4286
  %v4367 = vmul.f32 %v4213, %v4287
  %v4368 = vmul.f32 %v4215, %v4288
  %v4369 = vmul.f32 %v4217, %v4289
  %v4370 = vmul.f32 %v4219, %v4290
  %v4371 = vmul.f32 %v4221, %v4291
  %v4372 = vmul.f32 %v4223, %v4292
  %v4373 = vmul.f32 %v4225, %v4293
  %v4374 = vmul.f32 %v4227, %v4294
  %v4375 = vmul.f32 %v4229, %v4295
  %v4376 = vmul.f32 %v4231, %v4296
  %v4377 = vmul.f32 %v4233, %v4297
  %v4378 = vadd.f32 %v4346, %v4362
  %v4379 = vadd.f32 %v4347, %v4363
  %v4380 = vadd.f32 %v4348, %v4364
  %v4381 = vadd.f32 %v4349, %v4365
  %v4382 = vadd.f32 %v4350, %v4366
  %v4383 = vadd.f32 %v4351, %v4367
  %v4384 = vadd.f32 %v4352, %v4368
  %v4385 = vadd.f32 %v4353, %v4369
  %v4386 = vadd.f32 %v4354, %v4370
  %v4387 = vadd.f32 %v4355, %v4371
  %v4388 = vadd.f32 %v4356, %v4372
  %v4389 = vadd.f32 %v4357, %v4373
  %v4390 = vadd.f32 %v4358, %v4374
  %v4391 = vadd.f32 %v4359, %v4375
  %v4392 = vadd.f32 %v4360, %v4376
  %v4393 = vadd.f32 %v4361, %v4377
  %v4394 = vtanh.pop %v4378
  %v4395 = vtanh.pop %v4379
  %v4396 = vtanh.pop %v4380
  %v4397 = vtanh.pop %v4381
  %v4398 = vtanh.pop %v4382
  %v4399 = vtanh.pop %v4383
  %v4400 = vtanh.pop %v4384
  %v4401 = vtanh.pop %v4385
  %v4402 = vtanh.pop %v4386
  %v4403 = vtanh.pop %v4387
  %v4404 = vtanh.pop %v4388
  %v4405 = vtanh.pop %v4389
  %v4406 = vtanh.pop %v4390
  %v4407 = vtanh.pop %v4391
  %v4408 = vtanh.pop %v4392
  %v4409 = vtanh.pop %v4393
  %v4410 = vrot.slane %v4203, 2
  %v4411 = vrot.slane %v4205, 2
  %v4412 = vrot.slane %v4207, 2
  %v4413 = vrot.slane %v4209, 2
  %v4414 = vrot.slane %v4211, 2
  %v4415 = vrot.slane %v4213, 2
  %v4416 = vrot.slane %v4215, 2
  %v4417 = vrot.slane %v4217, 2
  %v4418 = vrot.slane %v4219, 2
  %v4419 = vrot.slane %v4221, 2
  %v4420 = vrot.slane %v4223, 2
  %v4421 = vrot.slane %v4225, 2
  %v4422 = vrot.slane %v4227, 2
  %v4423 = vrot.slane %v4229, 2
  %v4424 = vrot.slane %v4231, 2
  %v4425 = vrot.slane %v4233, 2
  %v4442 = vmul.f32 %v4410, %v4394
  %v4443 = vmul.f32 %v4411, %v4395
  %v4444 = vmul.f32 %v4412, %v4396
  %v4445 = vmul.f32 %v4413, %v4397
  %v4446 = vmul.f32 %v4414, %v4398
  %v4447 = vmul.f32 %v4415, %v4399
  %v4448 = vmul.f32 %v4416, %v4400
  %v4449 = vmul.f32 %v4417, %v4401
  %v4450 = vmul.f32 %v4418, %v4402
  %v4451 = vmul.f32 %v4419, %v4403
  %v4452 = vmul.f32 %v4420, %v4404
  %v4453 = vmul.f32 %v4421, %v4405
  %v4454 = vmul.f32 %v4422, %v4406
  %v4455 = vmul.f32 %v4423, %v4407
  %v4456 = vmul.f32 %v4424, %v4408
  %v4457 = vmul.f32 %v4425, %v4409
  %s4458 = scalar_lea.vmem [#allocation2], 5
  %v4459 = vld [vmem:[%s4458] ss:$8 sm:$0xf]
  %s4460 = scalar_lea.vmem [#allocation2], 37
  %v4461 = vld [vmem:[%s4460] ss:$8 sm:$0xf]
  %s4462 = scalar_lea.vmem [#allocation2], 69
  %v4463 = vld [vmem:[%s4462] ss:$8 sm:$0xf]
  %s4464 = scalar_lea.vmem [#allocation2], 101
  %v4465 = vld [vmem:[%s4464] ss:$8 sm:$0xf]
  %s4466 = scalar_lea.vmem [#allocation2], 133
  %v4467 = vld [vmem:[%s4466] ss:$8 sm:$0xf]
  %s4468 = scalar_lea.vmem [#allocation2], 165
  %v4469 = vld [vmem:[%s4468] ss:$8 sm:$0xf]
  %s4470 = scalar_lea.vmem [#allocation2], 197
  %v4471 = vld [vmem:[%s4470] ss:$8 sm:$0xf]
  %s4472 = scalar_lea.vmem [#allocation2], 229
  %v4473 = vld [vmem:[%s4472] ss:$8 sm:$0xf]
  %s4474 = scalar_lea.vmem [#allocation2], 261
  %v4475 = vld [vmem:[%s4474] ss:$8 sm:$0xf]
  %s4476 = scalar_lea.vmem [#allocation2], 293
  %v4477 = vld [vmem:[%s4476] ss:$8 sm:$0xf]
  %s4478 = scalar_lea.vmem [#allocation2], 325
  %v4479 = vld [vmem:[%s4478] ss:$8 sm:$0xf]
  %s4480 = scalar_lea.vmem [#allocation2], 357
  %v4481 = vld [vmem:[%s4480] ss:$8 sm:$0xf]
  %s4482 = scalar_lea.vmem [#allocation2], 389
  %v4483 = vld [vmem:[%s4482] ss:$8 sm:$0xf]
  %s4484 = scalar_lea.vmem [#allocation2], 421
  %v4485 = vld [vmem:[%s4484] ss:$8 sm:$0xf]
  %s4486 = scalar_lea.vmem [#allocation2], 453
  %v4487 = vld [vmem:[%s4486] ss:$8 sm:$0xf]
  %s4488 = scalar_lea.vmem [#allocation2], 485
  %v4489 = vld [vmem:[%s4488] ss:$8 sm:$0xf]
  %v4506 = vcombine.low %v4442, %v4443
  %v4507 = vcombine.low %v4444, %v4445
  %v4508 = vcombine.low %v4446, %v4447
  %v4509 = vcombine.low %v4448, %v4449
  %v4511 = vunpack.c.l.s4 1966171168
  %v4512 = vunpack.c.0.s8 %v4511
  %v4513 = vlaneseq
  %v4514 = vshrl.u32 %v4513, 7
  %v4515 = vsub.s32 %v4512, %v4514
  %v4516 = vrot.slane %v4506, %v4515
  %v4518 = vunpack.c.l.s4 1966171168
  %v4519 = vunpack.c.0.s8 %v4518
  %v4520 = vlaneseq
  %v4521 = vshrl.u32 %v4520, 7
  %v4522 = vsub.s32 %v4519, %v4521
  %v4523 = vrot.slane %v4507, %v4522
  %v4525 = vunpack.c.l.s4 1966171168
  %v4526 = vunpack.c.0.s8 %v4525
  %v4527 = vlaneseq
  %v4528 = vshrl.u32 %v4527, 7
  %v4529 = vsub.s32 %v4526, %v4528
  %v4530 = vrot.slane %v4508, %v4529
  %v4532 = vunpack.c.l.s4 1966171168
  %v4533 = vunpack.c.0.s8 %v4532
  %v4534 = vlaneseq
  %v4535 = vshrl.u32 %v4534, 7
  %v4536 = vsub.s32 %v4533, %v4535
  %v4537 = vrot.slane %v4509, %v4536
  %v4538 = vcombine.low %v4516, %v4523
  %v4539 = vcombine.low %v4530, %v4537
  %v4541 = vunpack.c.l.s4 1966171168
  %v4542 = vunpack.c.0.s8 %v4541
  %v4543 = vlaneseq
  %v4544 = vshrl.u32 %v4543, 7
  %v4545 = vsub.s32 %v4542, %v4544
  %v4546 = vrot.slane %v4538, %v4545
  %v4548 = vunpack.c.l.s4 1966171168
  %v4549 = vunpack.c.0.s8 %v4548
  %v4550 = vlaneseq
  %v4551 = vshrl.u32 %v4550, 7
  %v4552 = vsub.s32 %v4549, %v4551
  %v4553 = vrot.slane %v4539, %v4552
  %v4554 = vcombine.low %v4546, %v4553
  %v4555 = vcombine.low %v4450, %v4451
  %v4556 = vcombine.low %v4452, %v4453
  %v4557 = vcombine.low %v4454, %v4455
  %v4558 = vcombine.low %v4456, %v4457
  %v4560 = vunpack.c.l.s4 1966171168
  %v4561 = vunpack.c.0.s8 %v4560
  %v4562 = vlaneseq
  %v4563 = vshrl.u32 %v4562, 7
  %v4564 = vsub.s32 %v4561, %v4563
  %v4565 = vrot.slane %v4555, %v4564
  %v4567 = vunpack.c.l.s4 1966171168
  %v4568 = vunpack.c.0.s8 %v4567
  %v4569 = vlaneseq
  %v4570 = vshrl.u32 %v4569, 7
  %v4571 = vsub.s32 %v4568, %v4570
  %v4572 = vrot.slane %v4556, %v4571
  %v4574 = vunpack.c.l.s4 1966171168
  %v4575 = vunpack.c.0.s8 %v4574
  %v4576 = vlaneseq
  %v4577 = vshrl.u32 %v4576, 7
  %v4578 = vsub.s32 %v4575, %v4577
  %v4579 = vrot.slane %v4557, %v4578
  %v4581 = vunpack.c.l.s4 1966171168
  %v4582 = vunpack.c.0.s8 %v4581
  %v4583 = vlaneseq
  %v4584 = vshrl.u32 %v4583, 7
  %v4585 = vsub.s32 %v4582, %v4584
  %v4586 = vrot.slane %v4558, %v4585
  %v4587 = vcombine.low %v4565, %v4572
  %v4588 = vcombine.low %v4579, %v4586
  %v4590 = vunpack.c.l.s4 1966171168
  %v4591 = vunpack.c.0.s8 %v4590
  %v4592 = vlaneseq
  %v4593 = vshrl.u32 %v4592, 7
  %v4594 = vsub.s32 %v4591, %v4593
  %v4595 = vrot.slane %v4587, %v4594
  %v4597 = vunpack.c.l.s4 1966171168
  %v4598 = vunpack.c.0.s8 %v4597
  %v4599 = vlaneseq
  %v4600 = vshrl.u32 %v4599, 7
  %v4601 = vsub.s32 %v4598, %v4600
  %v4602 = vrot.slane %v4588, %v4601
  %v4603 = vcombine.low %v4595, %v4602
  %4606 = vmatprep.subr.mxu0 %v613
  %4607 = vmatpush1.msra.mxu0 %v612
  %4608 = vmatprep.subr.mxu0 %v609
  %4609 = vmatpush1.msra.mxu0 %v608
  %4610 = vmatprep.subr.mxu0 %v605
  %4611 = vmatpush1.msra.mxu0 %v604
  %4612 = vmatprep.subr.mxu0 %v601
  %4613 = vmatpush1.msra.mxu0 %v600
  %4614 = vmatprep.subr.mxu0 %v597
  %4615 = vmatpush1.msra.mxu0 %v596
  %4616 = vmatprep.subr.mxu0 %v593
  %4617 = vmatpush1.msra.mxu0 %v592
  %4618 = vmatprep.subr.mxu0 %v589
  %4619 = vmatpush1.msra.mxu0 %v588
  %4620 = vmatprep.subr.mxu0 %v585
  %4621 = vmatpush1.msra.mxu0 %v584
  %4622 = vmatprep.subr.mxu0 %v581
  %4623 = vmatpush1.msra.mxu0 %v580
  %4624 = vmatprep.subr.mxu0 %v577
  %4625 = vmatpush1.msra.mxu0 %v576
  %4626 = vmatprep.subr.mxu0 %v573
  %4627 = vmatpush1.msra.mxu0 %v572
  %4628 = vmatprep.subr.mxu0 %v569
  %4629 = vmatpush1.msra.mxu0 %v568
  %4630 = vmatprep.subr.mxu0 %v565
  %4631 = vmatpush1.msra.mxu0 %v564
  %4632 = vmatprep.subr.mxu0 %v561
  %4633 = vmatpush1.msra.mxu0 %v560
  %4634 = vmatprep.subr.mxu0 %v557
  %4635 = vmatpush1.msra.mxu0 %v556
  %4636 = vmatprep.subr.mxu0 %v553
  %4637 = vmatpush1.msra.mxu0 %v552
  %4638 = vmatprep.subr.mxu0 0.0
  %4639 = vmatpush2.msra.mxu0 0.0
  %4640 = vmatprep.subr.mxu0 0.0
  %4641 = vmatpush2.msra.mxu0 0.0
  %4642 = vmatprep.subr.mxu0 0.0
  %4643 = vmatpush2.msra.mxu0 0.0
  %4644 = vmatprep.subr.mxu0 0.0
  %4645 = vmatpush2.msra.mxu0 0.0
  %4646 = vmatprep.subr.mxu0 0.0
  %4647 = vmatpush2.msra.mxu0 0.0
  %4648 = vmatprep.subr.mxu0 0.0
  %4649 = vmatpush2.msra.mxu0 0.0
  %4650 = vmatprep.subr.mxu0 0.0
  %4651 = vmatpush2.msra.mxu0 0.0
  %4652 = vmatprep.subr.mxu0 0.0
  %4653 = vmatpush2.msra.mxu0 0.0
  %4654 = vmatprep.subr.mxu0 0.0
  %4655 = vmatpush2.msra.mxu0 0.0
  %4656 = vmatprep.subr.mxu0 0.0
  %4657 = vmatpush2.msra.mxu0 0.0
  %4658 = vmatprep.subr.mxu0 0.0
  %4659 = vmatpush2.msra.mxu0 0.0
  %4660 = vmatprep.subr.mxu0 0.0
  %4661 = vmatpush2.msra.mxu0 0.0
  %4662 = vmatprep.subr.mxu0 0.0
  %4663 = vmatpush2.msra.mxu0 0.0
  %4664 = vmatprep.subr.mxu0 0.0
  %4665 = vmatpush2.msra.mxu0 0.0
  %4666 = vmatprep.subr.mxu0 0.0
  %4667 = vmatpush2.msra.mxu0 0.0
  %4668 = vmatprep.subr.mxu0 0.0
  %4669 = vmatpush2.msra.mxu0 0.0
  %4670 = vmatprep.mubr.f32.mxu0 0.0
  %4671 = vmatmul.mubr.f32.gmra.mxu0 %v4554
  %v4672 = vpop.f32.mrf.mxu0
  %v4673 = vadd.f32 0.0, %v4672
  %v4674 = vpop.f32.mrf.mxu0
  %v4675 = vadd.f32 0.0, %v4674
  %4676 = vmatprep.mubr.f32.mxu0 0.0
  %4677 = vmatmul.mubr.f32.gmra.mxu0 %v4603
  %v4678 = vpop.f32.mrf.mxu0
  %v4679 = vadd.f32 0.0, %v4678
  %v4680 = vpop.f32.mrf.mxu0
  %v4681 = vadd.f32 0.0, %v4680
  %4682 = vdwg.mxu0
  %4683 = vmatprep.subr.mxu0 %v615
  %4684 = vmatpush1.msra.mxu0 %v614
  %4685 = vmatprep.subr.mxu0 %v611
  %4686 = vmatpush1.msra.mxu0 %v610
  %4687 = vmatprep.subr.mxu0 %v607
  %4688 = vmatpush1.msra.mxu0 %v606
  %4689 = vmatprep.subr.mxu0 %v603
  %4690 = vmatpush1.msra.mxu0 %v602
  %4691 = vmatprep.subr.mxu0 %v599
  %4692 = vmatpush1.msra.mxu0 %v598
  %4693 = vmatprep.subr.mxu0 %v595
  %4694 = vmatpush1.msra.mxu0 %v594
  %4695 = vmatprep.subr.mxu0 %v591
  %4696 = vmatpush1.msra.mxu0 %v590
  %4697 = vmatprep.subr.mxu0 %v587
  %4698 = vmatpush1.msra.mxu0 %v586
  %4699 = vmatprep.subr.mxu0 %v583
  %4700 = vmatpush1.msra.mxu0 %v582
  %4701 = vmatprep.subr.mxu0 %v579
  %4702 = vmatpush1.msra.mxu0 %v578
  %4703 = vmatprep.subr.mxu0 %v575
  %4704 = vmatpush1.msra.mxu0 %v574
  %4705 = vmatprep.subr.mxu0 %v571
  %4706 = vmatpush1.msra.mxu0 %v570
  %4707 = vmatprep.subr.mxu0 %v567
  %4708 = vmatpush1.msra.mxu0 %v566
  %4709 = vmatprep.subr.mxu0 %v563
  %4710 = vmatpush1.msra.mxu0 %v562
  %4711 = vmatprep.subr.mxu0 %v559
  %4712 = vmatpush1.msra.mxu0 %v558
  %4713 = vmatprep.subr.mxu0 %v555
  %4714 = vmatpush1.msra.mxu0 %v554
  %4715 = vmatprep.subr.mxu0 0.0
  %4716 = vmatpush2.msra.mxu0 0.0
  %4717 = vmatprep.subr.mxu0 0.0
  %4718 = vmatpush2.msra.mxu0 0.0
  %4719 = vmatprep.subr.mxu0 0.0
  %4720 = vmatpush2.msra.mxu0 0.0
  %4721 = vmatprep.subr.mxu0 0.0
  %4722 = vmatpush2.msra.mxu0 0.0
  %4723 = vmatprep.subr.mxu0 0.0
  %4724 = vmatpush2.msra.mxu0 0.0
  %4725 = vmatprep.subr.mxu0 0.0
  %4726 = vmatpush2.msra.mxu0 0.0
  %4727 = vmatprep.subr.mxu0 0.0
  %4728 = vmatpush2.msra.mxu0 0.0
  %4729 = vmatprep.subr.mxu0 0.0
  %4730 = vmatpush2.msra.mxu0 0.0
  %4731 = vmatprep.subr.mxu0 0.0
  %4732 = vmatpush2.msra.mxu0 0.0
  %4733 = vmatprep.subr.mxu0 0.0
  %4734 = vmatpush2.msra.mxu0 0.0
  %4735 = vmatprep.subr.mxu0 0.0
  %4736 = vmatpush2.msra.mxu0 0.0
  %4737 = vmatprep.subr.mxu0 0.0
  %4738 = vmatpush2.msra.mxu0 0.0
  %4739 = vmatprep.subr.mxu0 0.0
  %4740 = vmatpush2.msra.mxu0 0.0
  %4741 = vmatprep.subr.mxu0 0.0
  %4742 = vmatpush2.msra.mxu0 0.0
  %4743 = vmatprep.subr.mxu0 0.0
  %4744 = vmatpush2.msra.mxu0 0.0
  %4745 = vmatprep.subr.mxu0 0.0
  %4746 = vmatpush2.msra.mxu0 0.0
  %4747 = vmatprep.mubr.f32.mxu0 0.0
  %4748 = vmatmul.mubr.f32.gmra.mxu0 %v4554
  %v4749 = vpop.f32.mrf.mxu0
  %v4750 = vadd.f32 0.0, %v4749
  %v4751 = vpop.f32.mrf.mxu0
  %v4752 = vadd.f32 0.0, %v4751
  %4753 = vmatprep.mubr.f32.mxu0 0.0
  %4754 = vmatmul.mubr.f32.gmra.mxu0 %v4603
  %v4755 = vpop.f32.mrf.mxu0
  %v4756 = vadd.f32 0.0, %v4755
  %v4757 = vpop.f32.mrf.mxu0
  %v4758 = vadd.f32 0.0, %v4757
  %4759 = vdwg.mxu0
  %v4768 = vcombine.low %v4673, %v4675
  %v4769 = vcombine.high %v4673, %v4675
  %v4770 = vcombine.low %v4750, %v4752
  %v4771 = vcombine.high %v4750, %v4752
  %v4773 = vunpack.c.l.s4 1966171168
  %v4774 = vunpack.c.0.s8 %v4773
  %v4775 = vlaneseq
  %v4776 = vshrl.u32 %v4775, 7
  %v4777 = vsub.s32 %v4774, %v4776
  %v4778 = vrot.slane %v4768, %v4777
  %v4780 = vunpack.c.l.s4 1966171168
  %v4781 = vunpack.c.0.s8 %v4780
  %v4782 = vlaneseq
  %v4783 = vshrl.u32 %v4782, 7
  %v4784 = vsub.s32 %v4781, %v4783
  %v4785 = vrot.slane %v4769, %v4784
  %v4787 = vunpack.c.l.s4 1966171168
  %v4788 = vunpack.c.0.s8 %v4787
  %v4789 = vlaneseq
  %v4790 = vshrl.u32 %v4789, 7
  %v4791 = vsub.s32 %v4788, %v4790
  %v4792 = vrot.slane %v4770, %v4791
  %v4794 = vunpack.c.l.s4 1966171168
  %v4795 = vunpack.c.0.s8 %v4794
  %v4796 = vlaneseq
  %v4797 = vshrl.u32 %v4796, 7
  %v4798 = vsub.s32 %v4795, %v4797
  %v4799 = vrot.slane %v4771, %v4798
  %v4800 = vcombine.low %v4778, %v4792
  %v4801 = vcombine.high %v4778, %v4792
  %v4802 = vcombine.low %v4785, %v4799
  %v4803 = vcombine.high %v4785, %v4799
  %v4805 = vunpack.c.l.s4 1966171168
  %v4806 = vunpack.c.0.s8 %v4805
  %v4807 = vlaneseq
  %v4808 = vshrl.u32 %v4807, 7
  %v4809 = vsub.s32 %v4806, %v4808
  %v4810 = vrot.slane %v4800, %v4809
  %v4812 = vunpack.c.l.s4 1966171168
  %v4813 = vunpack.c.0.s8 %v4812
  %v4814 = vlaneseq
  %v4815 = vshrl.u32 %v4814, 7
  %v4816 = vsub.s32 %v4813, %v4815
  %v4817 = vrot.slane %v4802, %v4816
  %v4819 = vunpack.c.l.s4 1966171168
  %v4820 = vunpack.c.0.s8 %v4819
  %v4821 = vlaneseq
  %v4822 = vshrl.u32 %v4821, 7
  %v4823 = vsub.s32 %v4820, %v4822
  %v4824 = vrot.slane %v4801, %v4823
  %v4826 = vunpack.c.l.s4 1966171168
  %v4827 = vunpack.c.0.s8 %v4826
  %v4828 = vlaneseq
  %v4829 = vshrl.u32 %v4828, 7
  %v4830 = vsub.s32 %v4827, %v4829
  %v4831 = vrot.slane %v4803, %v4830
  %v4832 = vcombine.high %v4810, %v4810
  %v4833 = vcombine.high %v4817, %v4817
  %v4834 = vcombine.high %v4824, %v4824
  %v4835 = vcombine.high %v4831, %v4831
  %v4836 = vcombine.low %v4679, %v4681
  %v4837 = vcombine.high %v4679, %v4681
  %v4838 = vcombine.low %v4756, %v4758
  %v4839 = vcombine.high %v4756, %v4758
  %v4841 = vunpack.c.l.s4 1966171168
  %v4842 = vunpack.c.0.s8 %v4841
  %v4843 = vlaneseq
  %v4844 = vshrl.u32 %v4843, 7
  %v4845 = vsub.s32 %v4842, %v4844
  %v4846 = vrot.slane %v4836, %v4845
  %v4848 = vunpack.c.l.s4 1966171168
  %v4849 = vunpack.c.0.s8 %v4848
  %v4850 = vlaneseq
  %v4851 = vshrl.u32 %v4850, 7
  %v4852 = vsub.s32 %v4849, %v4851
  %v4853 = vrot.slane %v4837, %v4852
  %v4855 = vunpack.c.l.s4 1966171168
  %v4856 = vunpack.c.0.s8 %v4855
  %v4857 = vlaneseq
  %v4858 = vshrl.u32 %v4857, 7
  %v4859 = vsub.s32 %v4856, %v4858
  %v4860 = vrot.slane %v4838, %v4859
  %v4862 = vunpack.c.l.s4 1966171168
  %v4863 = vunpack.c.0.s8 %v4862
  %v4864 = vlaneseq
  %v4865 = vshrl.u32 %v4864, 7
  %v4866 = vsub.s32 %v4863, %v4865
  %v4867 = vrot.slane %v4839, %v4866
  %v4868 = vcombine.low %v4846, %v4860
  %v4869 = vcombine.high %v4846, %v4860
  %v4870 = vcombine.low %v4853, %v4867
  %v4871 = vcombine.high %v4853, %v4867
  %v4873 = vunpack.c.l.s4 1966171168
  %v4874 = vunpack.c.0.s8 %v4873
  %v4875 = vlaneseq
  %v4876 = vshrl.u32 %v4875, 7
  %v4877 = vsub.s32 %v4874, %v4876
  %v4878 = vrot.slane %v4868, %v4877
  %v4880 = vunpack.c.l.s4 1966171168
  %v4881 = vunpack.c.0.s8 %v4880
  %v4882 = vlaneseq
  %v4883 = vshrl.u32 %v4882, 7
  %v4884 = vsub.s32 %v4881, %v4883
  %v4885 = vrot.slane %v4870, %v4884
  %v4887 = vunpack.c.l.s4 1966171168
  %v4888 = vunpack.c.0.s8 %v4887
  %v4889 = vlaneseq
  %v4890 = vshrl.u32 %v4889, 7
  %v4891 = vsub.s32 %v4888, %v4890
  %v4892 = vrot.slane %v4869, %v4891
  %v4894 = vunpack.c.l.s4 1966171168
  %v4895 = vunpack.c.0.s8 %v4894
  %v4896 = vlaneseq
  %v4897 = vshrl.u32 %v4896, 7
  %v4898 = vsub.s32 %v4895, %v4897
  %v4899 = vrot.slane %v4871, %v4898
  %v4900 = vcombine.high %v4878, %v4878
  %v4901 = vcombine.high %v4885, %v4885
  %v4902 = vcombine.high %v4892, %v4892
  %v4903 = vcombine.high %v4899, %v4899
  %v4920 = vadd.f32 %v4459, %v4810
  %v4921 = vadd.f32 %v4461, %v4824
  %v4922 = vadd.f32 %v4463, %v4832
  %v4923 = vadd.f32 %v4465, %v4834
  %v4924 = vadd.f32 %v4467, %v4817
  %v4925 = vadd.f32 %v4469, %v4831
  %v4926 = vadd.f32 %v4471, %v4833
  %v4927 = vadd.f32 %v4473, %v4835
  %v4928 = vadd.f32 %v4475, %v4878
  %v4929 = vadd.f32 %v4477, %v4892
  %v4930 = vadd.f32 %v4479, %v4900
  %v4931 = vadd.f32 %v4481, %v4902
  %v4932 = vadd.f32 %v4483, %v4885
  %v4933 = vadd.f32 %v4485, %v4899
  %v4934 = vadd.f32 %v4487, %v4901
  %v4935 = vadd.f32 %v4489, %v4903
  %v4936 = vxor.u32 %v4920, 2147483648
  %v4937 = vxor.u32 %v4921, 2147483648
  %v4938 = vxor.u32 %v4922, 2147483648
  %v4939 = vxor.u32 %v4923, 2147483648
  %v4940 = vxor.u32 %v4924, 2147483648
  %v4941 = vxor.u32 %v4925, 2147483648
  %v4942 = vxor.u32 %v4926, 2147483648
  %v4943 = vxor.u32 %v4927, 2147483648
  %v4944 = vxor.u32 %v4928, 2147483648
  %v4945 = vxor.u32 %v4929, 2147483648
  %v4946 = vxor.u32 %v4930, 2147483648
  %v4947 = vxor.u32 %v4931, 2147483648
  %v4948 = vxor.u32 %v4932, 2147483648
  %v4949 = vxor.u32 %v4933, 2147483648
  %v4950 = vxor.u32 %v4934, 2147483648
  %v4951 = vxor.u32 %v4935, 2147483648
  %v4952 = vmul.f32 %v4936, 1.442695
  %v4953 = vpow.pop %v4952
  %v4954 = vmul.f32 %v4937, 1.442695
  %v4955 = vpow.pop %v4954
  %v4956 = vmul.f32 %v4938, 1.442695
  %v4957 = vpow.pop %v4956
  %v4958 = vmul.f32 %v4939, 1.442695
  %v4959 = vpow.pop %v4958
  %v4960 = vmul.f32 %v4940, 1.442695
  %v4961 = vpow.pop %v4960
  %v4962 = vmul.f32 %v4941, 1.442695
  %v4963 = vpow.pop %v4962
  %v4964 = vmul.f32 %v4942, 1.442695
  %v4965 = vpow.pop %v4964
  %v4966 = vmul.f32 %v4943, 1.442695
  %v4967 = vpow.pop %v4966
  %v4968 = vmul.f32 %v4944, 1.442695
  %v4969 = vpow.pop %v4968
  %v4970 = vmul.f32 %v4945, 1.442695
  %v4971 = vpow.pop %v4970
  %v4972 = vmul.f32 %v4946, 1.442695
  %v4973 = vpow.pop %v4972
  %v4974 = vmul.f32 %v4947, 1.442695
  %v4975 = vpow.pop %v4974
  %v4976 = vmul.f32 %v4948, 1.442695
  %v4977 = vpow.pop %v4976
  %v4978 = vmul.f32 %v4949, 1.442695
  %v4979 = vpow.pop %v4978
  %v4980 = vmul.f32 %v4950, 1.442695
  %v4981 = vpow.pop %v4980
  %v4982 = vmul.f32 %v4951, 1.442695
  %v4983 = vpow.pop %v4982
  %v4984 = vadd.f32 %v4953, 1.0
  %v4985 = vadd.f32 %v4955, 1.0
  %v4986 = vadd.f32 %v4957, 1.0
  %v4987 = vadd.f32 %v4959, 1.0
  %v4988 = vadd.f32 %v4961, 1.0
  %v4989 = vadd.f32 %v4963, 1.0
  %v4990 = vadd.f32 %v4965, 1.0
  %v4991 = vadd.f32 %v4967, 1.0
  %v4992 = vadd.f32 %v4969, 1.0
  %v4993 = vadd.f32 %v4971, 1.0
  %v4994 = vadd.f32 %v4973, 1.0
  %v4995 = vadd.f32 %v4975, 1.0
  %v4996 = vadd.f32 %v4977, 1.0
  %v4997 = vadd.f32 %v4979, 1.0
  %v4998 = vadd.f32 %v4981, 1.0
  %v4999 = vadd.f32 %v4983, 1.0
  %v5000 = vrcp.pop %v4984
  %v5001 = vmul.f32 1.0, %v5000
  %v5002 = vrcp.pop %v4985
  %v5003 = vmul.f32 1.0, %v5002
  %v5004 = vrcp.pop %v4986
  %v5005 = vmul.f32 1.0, %v5004
  %v5006 = vrcp.pop %v4987
  %v5007 = vmul.f32 1.0, %v5006
  %v5008 = vrcp.pop %v4988
  %v5009 = vmul.f32 1.0, %v5008
  %v5010 = vrcp.pop %v4989
  %v5011 = vmul.f32 1.0, %v5010
  %v5012 = vrcp.pop %v4990
  %v5013 = vmul.f32 1.0, %v5012
  %v5014 = vrcp.pop %v4991
  %v5015 = vmul.f32 1.0, %v5014
  %v5016 = vrcp.pop %v4992
  %v5017 = vmul.f32 1.0, %v5016
  %v5018 = vrcp.pop %v4993
  %v5019 = vmul.f32 1.0, %v5018
  %v5020 = vrcp.pop %v4994
  %v5021 = vmul.f32 1.0, %v5020
  %v5022 = vrcp.pop %v4995
  %v5023 = vmul.f32 1.0, %v5022
  %v5024 = vrcp.pop %v4996
  %v5025 = vmul.f32 1.0, %v5024
  %v5026 = vrcp.pop %v4997
  %v5027 = vmul.f32 1.0, %v5026
  %v5028 = vrcp.pop %v4998
  %v5029 = vmul.f32 1.0, %v5028
  %v5030 = vrcp.pop %v4999
  %v5031 = vmul.f32 1.0, %v5030
  %v5048 = vrot.slane %v4920, 3
  %v5049 = vrot.slane %v4921, 3
  %v5050 = vrot.slane %v4922, 3
  %v5051 = vrot.slane %v4923, 3
  %v5052 = vrot.slane %v4924, 3
  %v5053 = vrot.slane %v4925, 3
  %v5054 = vrot.slane %v4926, 3
  %v5055 = vrot.slane %v4927, 3
  %v5056 = vrot.slane %v4928, 3
  %v5057 = vrot.slane %v4929, 3
  %v5058 = vrot.slane %v4930, 3
  %v5059 = vrot.slane %v4931, 3
  %v5060 = vrot.slane %v4932, 3
  %v5061 = vrot.slane %v4933, 3
  %v5062 = vrot.slane %v4934, 3
  %v5063 = vrot.slane %v4935, 3
  %v5080 = vtanh.pop %v5048
  %v5081 = vtanh.pop %v5049
  %v5082 = vtanh.pop %v5050
  %v5083 = vtanh.pop %v5051
  %v5084 = vtanh.pop %v5052
  %v5085 = vtanh.pop %v5053
  %v5086 = vtanh.pop %v5054
  %v5087 = vtanh.pop %v5055
  %v5088 = vtanh.pop %v5056
  %v5089 = vtanh.pop %v5057
  %v5090 = vtanh.pop %v5058
  %v5091 = vtanh.pop %v5059
  %v5092 = vtanh.pop %v5060
  %v5093 = vtanh.pop %v5061
  %v5094 = vtanh.pop %v5062
  %v5095 = vtanh.pop %v5063
  %v5112 = vrot.slane %v5001, 1
  %v5113 = vrot.slane %v5003, 1
  %v5114 = vrot.slane %v5005, 1
  %v5115 = vrot.slane %v5007, 1
  %v5116 = vrot.slane %v5009, 1
  %v5117 = vrot.slane %v5011, 1
  %v5118 = vrot.slane %v5013, 1
  %v5119 = vrot.slane %v5015, 1
  %v5120 = vrot.slane %v5017, 1
  %v5121 = vrot.slane %v5019, 1
  %v5122 = vrot.slane %v5021, 1
  %v5123 = vrot.slane %v5023, 1
  %v5124 = vrot.slane %v5025, 1
  %v5125 = vrot.slane %v5027, 1
  %v5126 = vrot.slane %v5029, 1
  %v5127 = vrot.slane %v5031, 1
  %v5144 = vmul.f32 %v5112, %v4378
  %v5145 = vmul.f32 %v5113, %v4379
  %v5146 = vmul.f32 %v5114, %v4380
  %v5147 = vmul.f32 %v5115, %v4381
  %v5148 = vmul.f32 %v5116, %v4382
  %v5149 = vmul.f32 %v5117, %v4383
  %v5150 = vmul.f32 %v5118, %v4384
  %v5151 = vmul.f32 %v5119, %v4385
  %v5152 = vmul.f32 %v5120, %v4386
  %v5153 = vmul.f32 %v5121, %v4387
  %v5154 = vmul.f32 %v5122, %v4388
  %v5155 = vmul.f32 %v5123, %v4389
  %v5156 = vmul.f32 %v5124, %v4390
  %v5157 = vmul.f32 %v5125, %v4391
  %v5158 = vmul.f32 %v5126, %v4392
  %v5159 = vmul.f32 %v5127, %v4393
  %v5160 = vmul.f32 %v5001, %v5080
  %v5161 = vmul.f32 %v5003, %v5081
  %v5162 = vmul.f32 %v5005, %v5082
  %v5163 = vmul.f32 %v5007, %v5083
  %v5164 = vmul.f32 %v5009, %v5084
  %v5165 = vmul.f32 %v5011, %v5085
  %v5166 = vmul.f32 %v5013, %v5086
  %v5167 = vmul.f32 %v5015, %v5087
  %v5168 = vmul.f32 %v5017, %v5088
  %v5169 = vmul.f32 %v5019, %v5089
  %v5170 = vmul.f32 %v5021, %v5090
  %v5171 = vmul.f32 %v5023, %v5091
  %v5172 = vmul.f32 %v5025, %v5092
  %v5173 = vmul.f32 %v5027, %v5093
  %v5174 = vmul.f32 %v5029, %v5094
  %v5175 = vmul.f32 %v5031, %v5095
  %v5176 = vadd.f32 %v5144, %v5160
  %v5177 = vadd.f32 %v5145, %v5161
  %v5178 = vadd.f32 %v5146, %v5162
  %v5179 = vadd.f32 %v5147, %v5163
  %v5180 = vadd.f32 %v5148, %v5164
  %v5181 = vadd.f32 %v5149, %v5165
  %v5182 = vadd.f32 %v5150, %v5166
  %v5183 = vadd.f32 %v5151, %v5167
  %v5184 = vadd.f32 %v5152, %v5168
  %v5185 = vadd.f32 %v5153, %v5169
  %v5186 = vadd.f32 %v5154, %v5170
  %v5187 = vadd.f32 %v5155, %v5171
  %v5188 = vadd.f32 %v5156, %v5172
  %v5189 = vadd.f32 %v5157, %v5173
  %v5190 = vadd.f32 %v5158, %v5174
  %v5191 = vadd.f32 %v5159, %v5175
  %v5192 = vtanh.pop %v5176
  %v5193 = vtanh.pop %v5177
  %v5194 = vtanh.pop %v5178
  %v5195 = vtanh.pop %v5179
  %v5196 = vtanh.pop %v5180
  %v5197 = vtanh.pop %v5181
  %v5198 = vtanh.pop %v5182
  %v5199 = vtanh.pop %v5183
  %v5200 = vtanh.pop %v5184
  %v5201 = vtanh.pop %v5185
  %v5202 = vtanh.pop %v5186
  %v5203 = vtanh.pop %v5187
  %v5204 = vtanh.pop %v5188
  %v5205 = vtanh.pop %v5189
  %v5206 = vtanh.pop %v5190
  %v5207 = vtanh.pop %v5191
  %v5208 = vrot.slane %v5001, 2
  %v5209 = vrot.slane %v5003, 2
  %v5210 = vrot.slane %v5005, 2
  %v5211 = vrot.slane %v5007, 2
  %v5212 = vrot.slane %v5009, 2
  %v5213 = vrot.slane %v5011, 2
  %v5214 = vrot.slane %v5013, 2
  %v5215 = vrot.slane %v5015, 2
  %v5216 = vrot.slane %v5017, 2
  %v5217 = vrot.slane %v5019, 2
  %v5218 = vrot.slane %v5021, 2
  %v5219 = vrot.slane %v5023, 2
  %v5220 = vrot.slane %v5025, 2
  %v5221 = vrot.slane %v5027, 2
  %v5222 = vrot.slane %v5029, 2
  %v5223 = vrot.slane %v5031, 2
  %v5240 = vmul.f32 %v5208, %v5192
  %v5241 = vmul.f32 %v5209, %v5193
  %v5242 = vmul.f32 %v5210, %v5194
  %v5243 = vmul.f32 %v5211, %v5195
  %v5244 = vmul.f32 %v5212, %v5196
  %v5245 = vmul.f32 %v5213, %v5197
  %v5246 = vmul.f32 %v5214, %v5198
  %v5247 = vmul.f32 %v5215, %v5199
  %v5248 = vmul.f32 %v5216, %v5200
  %v5249 = vmul.f32 %v5217, %v5201
  %v5250 = vmul.f32 %v5218, %v5202
  %v5251 = vmul.f32 %v5219, %v5203
  %v5252 = vmul.f32 %v5220, %v5204
  %v5253 = vmul.f32 %v5221, %v5205
  %v5254 = vmul.f32 %v5222, %v5206
  %v5255 = vmul.f32 %v5223, %v5207
  %s5256 = scalar_lea.vmem [#allocation2], 6
  %v5257 = vld [vmem:[%s5256] ss:$8 sm:$0xf]
  %s5258 = scalar_lea.vmem [#allocation2], 38
  %v5259 = vld [vmem:[%s5258] ss:$8 sm:$0xf]
  %s5260 = scalar_lea.vmem [#allocation2], 70
  %v5261 = vld [vmem:[%s5260] ss:$8 sm:$0xf]
  %s5262 = scalar_lea.vmem [#allocation2], 102
  %v5263 = vld [vmem:[%s5262] ss:$8 sm:$0xf]
  %s5264 = scalar_lea.vmem [#allocation2], 134
  %v5265 = vld [vmem:[%s5264] ss:$8 sm:$0xf]
  %s5266 = scalar_lea.vmem [#allocation2], 166
  %v5267 = vld [vmem:[%s5266] ss:$8 sm:$0xf]
  %s5268 = scalar_lea.vmem [#allocation2], 198
  %v5269 = vld [vmem:[%s5268] ss:$8 sm:$0xf]
  %s5270 = scalar_lea.vmem [#allocation2], 230
  %v5271 = vld [vmem:[%s5270] ss:$8 sm:$0xf]
  %s5272 = scalar_lea.vmem [#allocation2], 262
  %v5273 = vld [vmem:[%s5272] ss:$8 sm:$0xf]
  %s5274 = scalar_lea.vmem [#allocation2], 294
  %v5275 = vld [vmem:[%s5274] ss:$8 sm:$0xf]
  %s5276 = scalar_lea.vmem [#allocation2], 326
  %v5277 = vld [vmem:[%s5276] ss:$8 sm:$0xf]
  %s5278 = scalar_lea.vmem [#allocation2], 358
  %v5279 = vld [vmem:[%s5278] ss:$8 sm:$0xf]
  %s5280 = scalar_lea.vmem [#allocation2], 390
  %v5281 = vld [vmem:[%s5280] ss:$8 sm:$0xf]
  %s5282 = scalar_lea.vmem [#allocation2], 422
  %v5283 = vld [vmem:[%s5282] ss:$8 sm:$0xf]
  %s5284 = scalar_lea.vmem [#allocation2], 454
  %v5285 = vld [vmem:[%s5284] ss:$8 sm:$0xf]
  %s5286 = scalar_lea.vmem [#allocation2], 486
  %v5287 = vld [vmem:[%s5286] ss:$8 sm:$0xf]
  %v5304 = vcombine.low %v5240, %v5241
  %v5305 = vcombine.low %v5242, %v5243
  %v5306 = vcombine.low %v5244, %v5245
  %v5307 = vcombine.low %v5246, %v5247
  %v5309 = vunpack.c.l.s4 1966171168
  %v5310 = vunpack.c.0.s8 %v5309
  %v5311 = vlaneseq
  %v5312 = vshrl.u32 %v5311, 7
  %v5313 = vsub.s32 %v5310, %v5312
  %v5314 = vrot.slane %v5304, %v5313
  %v5316 = vunpack.c.l.s4 1966171168
  %v5317 = vunpack.c.0.s8 %v5316
  %v5318 = vlaneseq
  %v5319 = vshrl.u32 %v5318, 7
  %v5320 = vsub.s32 %v5317, %v5319
  %v5321 = vrot.slane %v5305, %v5320
  %v5323 = vunpack.c.l.s4 1966171168
  %v5324 = vunpack.c.0.s8 %v5323
  %v5325 = vlaneseq
  %v5326 = vshrl.u32 %v5325, 7
  %v5327 = vsub.s32 %v5324, %v5326
  %v5328 = vrot.slane %v5306, %v5327
  %v5330 = vunpack.c.l.s4 1966171168
  %v5331 = vunpack.c.0.s8 %v5330
  %v5332 = vlaneseq
  %v5333 = vshrl.u32 %v5332, 7
  %v5334 = vsub.s32 %v5331, %v5333
  %v5335 = vrot.slane %v5307, %v5334
  %v5336 = vcombine.low %v5314, %v5321
  %v5337 = vcombine.low %v5328, %v5335
  %v5339 = vunpack.c.l.s4 1966171168
  %v5340 = vunpack.c.0.s8 %v5339
  %v5341 = vlaneseq
  %v5342 = vshrl.u32 %v5341, 7
  %v5343 = vsub.s32 %v5340, %v5342
  %v5344 = vrot.slane %v5336, %v5343
  %v5346 = vunpack.c.l.s4 1966171168
  %v5347 = vunpack.c.0.s8 %v5346
  %v5348 = vlaneseq
  %v5349 = vshrl.u32 %v5348, 7
  %v5350 = vsub.s32 %v5347, %v5349
  %v5351 = vrot.slane %v5337, %v5350
  %v5352 = vcombine.low %v5344, %v5351
  %v5353 = vcombine.low %v5248, %v5249
  %v5354 = vcombine.low %v5250, %v5251
  %v5355 = vcombine.low %v5252, %v5253
  %v5356 = vcombine.low %v5254, %v5255
  %v5358 = vunpack.c.l.s4 1966171168
  %v5359 = vunpack.c.0.s8 %v5358
  %v5360 = vlaneseq
  %v5361 = vshrl.u32 %v5360, 7
  %v5362 = vsub.s32 %v5359, %v5361
  %v5363 = vrot.slane %v5353, %v5362
  %v5365 = vunpack.c.l.s4 1966171168
  %v5366 = vunpack.c.0.s8 %v5365
  %v5367 = vlaneseq
  %v5368 = vshrl.u32 %v5367, 7
  %v5369 = vsub.s32 %v5366, %v5368
  %v5370 = vrot.slane %v5354, %v5369
  %v5372 = vunpack.c.l.s4 1966171168
  %v5373 = vunpack.c.0.s8 %v5372
  %v5374 = vlaneseq
  %v5375 = vshrl.u32 %v5374, 7
  %v5376 = vsub.s32 %v5373, %v5375
  %v5377 = vrot.slane %v5355, %v5376
  %v5379 = vunpack.c.l.s4 1966171168
  %v5380 = vunpack.c.0.s8 %v5379
  %v5381 = vlaneseq
  %v5382 = vshrl.u32 %v5381, 7
  %v5383 = vsub.s32 %v5380, %v5382
  %v5384 = vrot.slane %v5356, %v5383
  %v5385 = vcombine.low %v5363, %v5370
  %v5386 = vcombine.low %v5377, %v5384
  %v5388 = vunpack.c.l.s4 1966171168
  %v5389 = vunpack.c.0.s8 %v5388
  %v5390 = vlaneseq
  %v5391 = vshrl.u32 %v5390, 7
  %v5392 = vsub.s32 %v5389, %v5391
  %v5393 = vrot.slane %v5385, %v5392
  %v5395 = vunpack.c.l.s4 1966171168
  %v5396 = vunpack.c.0.s8 %v5395
  %v5397 = vlaneseq
  %v5398 = vshrl.u32 %v5397, 7
  %v5399 = vsub.s32 %v5396, %v5398
  %v5400 = vrot.slane %v5386, %v5399
  %v5401 = vcombine.low %v5393, %v5400
  %5404 = vmatprep.subr.mxu0 %v613
  %5405 = vmatpush1.msra.mxu0 %v612
  %5406 = vmatprep.subr.mxu0 %v609
  %5407 = vmatpush1.msra.mxu0 %v608
  %5408 = vmatprep.subr.mxu0 %v605
  %5409 = vmatpush1.msra.mxu0 %v604
  %5410 = vmatprep.subr.mxu0 %v601
  %5411 = vmatpush1.msra.mxu0 %v600
  %5412 = vmatprep.subr.mxu0 %v597
  %5413 = vmatpush1.msra.mxu0 %v596
  %5414 = vmatprep.subr.mxu0 %v593
  %5415 = vmatpush1.msra.mxu0 %v592
  %5416 = vmatprep.subr.mxu0 %v589
  %5417 = vmatpush1.msra.mxu0 %v588
  %5418 = vmatprep.subr.mxu0 %v585
  %5419 = vmatpush1.msra.mxu0 %v584
  %5420 = vmatprep.subr.mxu0 %v581
  %5421 = vmatpush1.msra.mxu0 %v580
  %5422 = vmatprep.subr.mxu0 %v577
  %5423 = vmatpush1.msra.mxu0 %v576
  %5424 = vmatprep.subr.mxu0 %v573
  %5425 = vmatpush1.msra.mxu0 %v572
  %5426 = vmatprep.subr.mxu0 %v569
  %5427 = vmatpush1.msra.mxu0 %v568
  %5428 = vmatprep.subr.mxu0 %v565
  %5429 = vmatpush1.msra.mxu0 %v564
  %5430 = vmatprep.subr.mxu0 %v561
  %5431 = vmatpush1.msra.mxu0 %v560
  %5432 = vmatprep.subr.mxu0 %v557
  %5433 = vmatpush1.msra.mxu0 %v556
  %5434 = vmatprep.subr.mxu0 %v553
  %5435 = vmatpush1.msra.mxu0 %v552
  %5436 = vmatprep.subr.mxu0 0.0
  %5437 = vmatpush2.msra.mxu0 0.0
  %5438 = vmatprep.subr.mxu0 0.0
  %5439 = vmatpush2.msra.mxu0 0.0
  %5440 = vmatprep.subr.mxu0 0.0
  %5441 = vmatpush2.msra.mxu0 0.0
  %5442 = vmatprep.subr.mxu0 0.0
  %5443 = vmatpush2.msra.mxu0 0.0
  %5444 = vmatprep.subr.mxu0 0.0
  %5445 = vmatpush2.msra.mxu0 0.0
  %5446 = vmatprep.subr.mxu0 0.0
  %5447 = vmatpush2.msra.mxu0 0.0
  %5448 = vmatprep.subr.mxu0 0.0
  %5449 = vmatpush2.msra.mxu0 0.0
  %5450 = vmatprep.subr.mxu0 0.0
  %5451 = vmatpush2.msra.mxu0 0.0
  %5452 = vmatprep.subr.mxu0 0.0
  %5453 = vmatpush2.msra.mxu0 0.0
  %5454 = vmatprep.subr.mxu0 0.0
  %5455 = vmatpush2.msra.mxu0 0.0
  %5456 = vmatprep.subr.mxu0 0.0
  %5457 = vmatpush2.msra.mxu0 0.0
  %5458 = vmatprep.subr.mxu0 0.0
  %5459 = vmatpush2.msra.mxu0 0.0
  %5460 = vmatprep.subr.mxu0 0.0
  %5461 = vmatpush2.msra.mxu0 0.0
  %5462 = vmatprep.subr.mxu0 0.0
  %5463 = vmatpush2.msra.mxu0 0.0
  %5464 = vmatprep.subr.mxu0 0.0
  %5465 = vmatpush2.msra.mxu0 0.0
  %5466 = vmatprep.subr.mxu0 0.0
  %5467 = vmatpush2.msra.mxu0 0.0
  %5468 = vmatprep.mubr.f32.mxu0 0.0
  %5469 = vmatmul.mubr.f32.gmra.mxu0 %v5352
  %v5470 = vpop.f32.mrf.mxu0
  %v5471 = vadd.f32 0.0, %v5470
  %v5472 = vpop.f32.mrf.mxu0
  %v5473 = vadd.f32 0.0, %v5472
  %5474 = vmatprep.mubr.f32.mxu0 0.0
  %5475 = vmatmul.mubr.f32.gmra.mxu0 %v5401
  %v5476 = vpop.f32.mrf.mxu0
  %v5477 = vadd.f32 0.0, %v5476
  %v5478 = vpop.f32.mrf.mxu0
  %v5479 = vadd.f32 0.0, %v5478
  %5480 = vdwg.mxu0
  %5481 = vmatprep.subr.mxu0 %v615
  %5482 = vmatpush1.msra.mxu0 %v614
  %5483 = vmatprep.subr.mxu0 %v611
  %5484 = vmatpush1.msra.mxu0 %v610
  %5485 = vmatprep.subr.mxu0 %v607
  %5486 = vmatpush1.msra.mxu0 %v606
  %5487 = vmatprep.subr.mxu0 %v603
  %5488 = vmatpush1.msra.mxu0 %v602
  %5489 = vmatprep.subr.mxu0 %v599
  %5490 = vmatpush1.msra.mxu0 %v598
  %5491 = vmatprep.subr.mxu0 %v595
  %5492 = vmatpush1.msra.mxu0 %v594
  %5493 = vmatprep.subr.mxu0 %v591
  %5494 = vmatpush1.msra.mxu0 %v590
  %5495 = vmatprep.subr.mxu0 %v587
  %5496 = vmatpush1.msra.mxu0 %v586
  %5497 = vmatprep.subr.mxu0 %v583
  %5498 = vmatpush1.msra.mxu0 %v582
  %5499 = vmatprep.subr.mxu0 %v579
  %5500 = vmatpush1.msra.mxu0 %v578
  %5501 = vmatprep.subr.mxu0 %v575
  %5502 = vmatpush1.msra.mxu0 %v574
  %5503 = vmatprep.subr.mxu0 %v571
  %5504 = vmatpush1.msra.mxu0 %v570
  %5505 = vmatprep.subr.mxu0 %v567
  %5506 = vmatpush1.msra.mxu0 %v566
  %5507 = vmatprep.subr.mxu0 %v563
  %5508 = vmatpush1.msra.mxu0 %v562
  %5509 = vmatprep.subr.mxu0 %v559
  %5510 = vmatpush1.msra.mxu0 %v558
  %5511 = vmatprep.subr.mxu0 %v555
  %5512 = vmatpush1.msra.mxu0 %v554
  %5513 = vmatprep.subr.mxu0 0.0
  %5514 = vmatpush2.msra.mxu0 0.0
  %5515 = vmatprep.subr.mxu0 0.0
  %5516 = vmatpush2.msra.mxu0 0.0
  %5517 = vmatprep.subr.mxu0 0.0
  %5518 = vmatpush2.msra.mxu0 0.0
  %5519 = vmatprep.subr.mxu0 0.0
  %5520 = vmatpush2.msra.mxu0 0.0
  %5521 = vmatprep.subr.mxu0 0.0
  %5522 = vmatpush2.msra.mxu0 0.0
  %5523 = vmatprep.subr.mxu0 0.0
  %5524 = vmatpush2.msra.mxu0 0.0
  %5525 = vmatprep.subr.mxu0 0.0
  %5526 = vmatpush2.msra.mxu0 0.0
  %5527 = vmatprep.subr.mxu0 0.0
  %5528 = vmatpush2.msra.mxu0 0.0
  %5529 = vmatprep.subr.mxu0 0.0
  %5530 = vmatpush2.msra.mxu0 0.0
  %5531 = vmatprep.subr.mxu0 0.0
  %5532 = vmatpush2.msra.mxu0 0.0
  %5533 = vmatprep.subr.mxu0 0.0
  %5534 = vmatpush2.msra.mxu0 0.0
  %5535 = vmatprep.subr.mxu0 0.0
  %5536 = vmatpush2.msra.mxu0 0.0
  %5537 = vmatprep.subr.mxu0 0.0
  %5538 = vmatpush2.msra.mxu0 0.0
  %5539 = vmatprep.subr.mxu0 0.0
  %5540 = vmatpush2.msra.mxu0 0.0
  %5541 = vmatprep.subr.mxu0 0.0
  %5542 = vmatpush2.msra.mxu0 0.0
  %5543 = vmatprep.subr.mxu0 0.0
  %5544 = vmatpush2.msra.mxu0 0.0
  %5545 = vmatprep.mubr.f32.mxu0 0.0
  %5546 = vmatmul.mubr.f32.gmra.mxu0 %v5352
  %v5547 = vpop.f32.mrf.mxu0
  %v5548 = vadd.f32 0.0, %v5547
  %v5549 = vpop.f32.mrf.mxu0
  %v5550 = vadd.f32 0.0, %v5549
  %5551 = vmatprep.mubr.f32.mxu0 0.0
  %5552 = vmatmul.mubr.f32.gmra.mxu0 %v5401
  %v5553 = vpop.f32.mrf.mxu0
  %v5554 = vadd.f32 0.0, %v5553
  %v5555 = vpop.f32.mrf.mxu0
  %v5556 = vadd.f32 0.0, %v5555
  %5557 = vdwg.mxu0
  %v5566 = vcombine.low %v5471, %v5473
  %v5567 = vcombine.high %v5471, %v5473
  %v5568 = vcombine.low %v5548, %v5550
  %v5569 = vcombine.high %v5548, %v5550
  %v5571 = vunpack.c.l.s4 1966171168
  %v5572 = vunpack.c.0.s8 %v5571
  %v5573 = vlaneseq
  %v5574 = vshrl.u32 %v5573, 7
  %v5575 = vsub.s32 %v5572, %v5574
  %v5576 = vrot.slane %v5566, %v5575
  %v5578 = vunpack.c.l.s4 1966171168
  %v5579 = vunpack.c.0.s8 %v5578
  %v5580 = vlaneseq
  %v5581 = vshrl.u32 %v5580, 7
  %v5582 = vsub.s32 %v5579, %v5581
  %v5583 = vrot.slane %v5567, %v5582
  %v5585 = vunpack.c.l.s4 1966171168
  %v5586 = vunpack.c.0.s8 %v5585
  %v5587 = vlaneseq
  %v5588 = vshrl.u32 %v5587, 7
  %v5589 = vsub.s32 %v5586, %v5588
  %v5590 = vrot.slane %v5568, %v5589
  %v5592 = vunpack.c.l.s4 1966171168
  %v5593 = vunpack.c.0.s8 %v5592
  %v5594 = vlaneseq
  %v5595 = vshrl.u32 %v5594, 7
  %v5596 = vsub.s32 %v5593, %v5595
  %v5597 = vrot.slane %v5569, %v5596
  %v5598 = vcombine.low %v5576, %v5590
  %v5599 = vcombine.high %v5576, %v5590
  %v5600 = vcombine.low %v5583, %v5597
  %v5601 = vcombine.high %v5583, %v5597
  %v5603 = vunpack.c.l.s4 1966171168
  %v5604 = vunpack.c.0.s8 %v5603
  %v5605 = vlaneseq
  %v5606 = vshrl.u32 %v5605, 7
  %v5607 = vsub.s32 %v5604, %v5606
  %v5608 = vrot.slane %v5598, %v5607
  %v5610 = vunpack.c.l.s4 1966171168
  %v5611 = vunpack.c.0.s8 %v5610
  %v5612 = vlaneseq
  %v5613 = vshrl.u32 %v5612, 7
  %v5614 = vsub.s32 %v5611, %v5613
  %v5615 = vrot.slane %v5600, %v5614
  %v5617 = vunpack.c.l.s4 1966171168
  %v5618 = vunpack.c.0.s8 %v5617
  %v5619 = vlaneseq
  %v5620 = vshrl.u32 %v5619, 7
  %v5621 = vsub.s32 %v5618, %v5620
  %v5622 = vrot.slane %v5599, %v5621
  %v5624 = vunpack.c.l.s4 1966171168
  %v5625 = vunpack.c.0.s8 %v5624
  %v5626 = vlaneseq
  %v5627 = vshrl.u32 %v5626, 7
  %v5628 = vsub.s32 %v5625, %v5627
  %v5629 = vrot.slane %v5601, %v5628
  %v5630 = vcombine.high %v5608, %v5608
  %v5631 = vcombine.high %v5615, %v5615
  %v5632 = vcombine.high %v5622, %v5622
  %v5633 = vcombine.high %v5629, %v5629
  %v5634 = vcombine.low %v5477, %v5479
  %v5635 = vcombine.high %v5477, %v5479
  %v5636 = vcombine.low %v5554, %v5556
  %v5637 = vcombine.high %v5554, %v5556
  %v5639 = vunpack.c.l.s4 1966171168
  %v5640 = vunpack.c.0.s8 %v5639
  %v5641 = vlaneseq
  %v5642 = vshrl.u32 %v5641, 7
  %v5643 = vsub.s32 %v5640, %v5642
  %v5644 = vrot.slane %v5634, %v5643
  %v5646 = vunpack.c.l.s4 1966171168
  %v5647 = vunpack.c.0.s8 %v5646
  %v5648 = vlaneseq
  %v5649 = vshrl.u32 %v5648, 7
  %v5650 = vsub.s32 %v5647, %v5649
  %v5651 = vrot.slane %v5635, %v5650
  %v5653 = vunpack.c.l.s4 1966171168
  %v5654 = vunpack.c.0.s8 %v5653
  %v5655 = vlaneseq
  %v5656 = vshrl.u32 %v5655, 7
  %v5657 = vsub.s32 %v5654, %v5656
  %v5658 = vrot.slane %v5636, %v5657
  %v5660 = vunpack.c.l.s4 1966171168
  %v5661 = vunpack.c.0.s8 %v5660
  %v5662 = vlaneseq
  %v5663 = vshrl.u32 %v5662, 7
  %v5664 = vsub.s32 %v5661, %v5663
  %v5665 = vrot.slane %v5637, %v5664
  %v5666 = vcombine.low %v5644, %v5658
  %v5667 = vcombine.high %v5644, %v5658
  %v5668 = vcombine.low %v5651, %v5665
  %v5669 = vcombine.high %v5651, %v5665
  %v5671 = vunpack.c.l.s4 1966171168
  %v5672 = vunpack.c.0.s8 %v5671
  %v5673 = vlaneseq
  %v5674 = vshrl.u32 %v5673, 7
  %v5675 = vsub.s32 %v5672, %v5674
  %v5676 = vrot.slane %v5666, %v5675
  %v5678 = vunpack.c.l.s4 1966171168
  %v5679 = vunpack.c.0.s8 %v5678
  %v5680 = vlaneseq
  %v5681 = vshrl.u32 %v5680, 7
  %v5682 = vsub.s32 %v5679, %v5681
  %v5683 = vrot.slane %v5668, %v5682
  %v5685 = vunpack.c.l.s4 1966171168
  %v5686 = vunpack.c.0.s8 %v5685
  %v5687 = vlaneseq
  %v5688 = vshrl.u32 %v5687, 7
  %v5689 = vsub.s32 %v5686, %v5688
  %v5690 = vrot.slane %v5667, %v5689
  %v5692 = vunpack.c.l.s4 1966171168
  %v5693 = vunpack.c.0.s8 %v5692
  %v5694 = vlaneseq
  %v5695 = vshrl.u32 %v5694, 7
  %v5696 = vsub.s32 %v5693, %v5695
  %v5697 = vrot.slane %v5669, %v5696
  %v5698 = vcombine.high %v5676, %v5676
  %v5699 = vcombine.high %v5683, %v5683
  %v5700 = vcombine.high %v5690, %v5690
  %v5701 = vcombine.high %v5697, %v5697
  %v5718 = vadd.f32 %v5257, %v5608
  %v5719 = vadd.f32 %v5259, %v5622
  %v5720 = vadd.f32 %v5261, %v5630
  %v5721 = vadd.f32 %v5263, %v5632
  %v5722 = vadd.f32 %v5265, %v5615
  %v5723 = vadd.f32 %v5267, %v5629
  %v5724 = vadd.f32 %v5269, %v5631
  %v5725 = vadd.f32 %v5271, %v5633
  %v5726 = vadd.f32 %v5273, %v5676
  %v5727 = vadd.f32 %v5275, %v5690
  %v5728 = vadd.f32 %v5277, %v5698
  %v5729 = vadd.f32 %v5279, %v5700
  %v5730 = vadd.f32 %v5281, %v5683
  %v5731 = vadd.f32 %v5283, %v5697
  %v5732 = vadd.f32 %v5285, %v5699
  %v5733 = vadd.f32 %v5287, %v5701
  %v5734 = vxor.u32 %v5718, 2147483648
  %v5735 = vxor.u32 %v5719, 2147483648
  %v5736 = vxor.u32 %v5720, 2147483648
  %v5737 = vxor.u32 %v5721, 2147483648
  %v5738 = vxor.u32 %v5722, 2147483648
  %v5739 = vxor.u32 %v5723, 2147483648
  %v5740 = vxor.u32 %v5724, 2147483648
  %v5741 = vxor.u32 %v5725, 2147483648
  %v5742 = vxor.u32 %v5726, 2147483648
  %v5743 = vxor.u32 %v5727, 2147483648
  %v5744 = vxor.u32 %v5728, 2147483648
  %v5745 = vxor.u32 %v5729, 2147483648
  %v5746 = vxor.u32 %v5730, 2147483648
  %v5747 = vxor.u32 %v5731, 2147483648
  %v5748 = vxor.u32 %v5732, 2147483648
  %v5749 = vxor.u32 %v5733, 2147483648
  %v5750 = vmul.f32 %v5734, 1.442695
  %v5751 = vpow.pop %v5750
  %v5752 = vmul.f32 %v5735, 1.442695
  %v5753 = vpow.pop %v5752
  %v5754 = vmul.f32 %v5736, 1.442695
  %v5755 = vpow.pop %v5754
  %v5756 = vmul.f32 %v5737, 1.442695
  %v5757 = vpow.pop %v5756
  %v5758 = vmul.f32 %v5738, 1.442695
  %v5759 = vpow.pop %v5758
  %v5760 = vmul.f32 %v5739, 1.442695
  %v5761 = vpow.pop %v5760
  %v5762 = vmul.f32 %v5740, 1.442695
  %v5763 = vpow.pop %v5762
  %v5764 = vmul.f32 %v5741, 1.442695
  %v5765 = vpow.pop %v5764
  %v5766 = vmul.f32 %v5742, 1.442695
  %v5767 = vpow.pop %v5766
  %v5768 = vmul.f32 %v5743, 1.442695
  %v5769 = vpow.pop %v5768
  %v5770 = vmul.f32 %v5744, 1.442695
  %v5771 = vpow.pop %v5770
  %v5772 = vmul.f32 %v5745, 1.442695
  %v5773 = vpow.pop %v5772
  %v5774 = vmul.f32 %v5746, 1.442695
  %v5775 = vpow.pop %v5774
  %v5776 = vmul.f32 %v5747, 1.442695
  %v5777 = vpow.pop %v5776
  %v5778 = vmul.f32 %v5748, 1.442695
  %v5779 = vpow.pop %v5778
  %v5780 = vmul.f32 %v5749, 1.442695
  %v5781 = vpow.pop %v5780
  %v5782 = vadd.f32 %v5751, 1.0
  %v5783 = vadd.f32 %v5753, 1.0
  %v5784 = vadd.f32 %v5755, 1.0
  %v5785 = vadd.f32 %v5757, 1.0
  %v5786 = vadd.f32 %v5759, 1.0
  %v5787 = vadd.f32 %v5761, 1.0
  %v5788 = vadd.f32 %v5763, 1.0
  %v5789 = vadd.f32 %v5765, 1.0
  %v5790 = vadd.f32 %v5767, 1.0
  %v5791 = vadd.f32 %v5769, 1.0
  %v5792 = vadd.f32 %v5771, 1.0
  %v5793 = vadd.f32 %v5773, 1.0
  %v5794 = vadd.f32 %v5775, 1.0
  %v5795 = vadd.f32 %v5777, 1.0
  %v5796 = vadd.f32 %v5779, 1.0
  %v5797 = vadd.f32 %v5781, 1.0
  %v5798 = vrcp.pop %v5782
  %v5799 = vmul.f32 1.0, %v5798
  %v5800 = vrcp.pop %v5783
  %v5801 = vmul.f32 1.0, %v5800
  %v5802 = vrcp.pop %v5784
  %v5803 = vmul.f32 1.0, %v5802
  %v5804 = vrcp.pop %v5785
  %v5805 = vmul.f32 1.0, %v5804
  %v5806 = vrcp.pop %v5786
  %v5807 = vmul.f32 1.0, %v5806
  %v5808 = vrcp.pop %v5787
  %v5809 = vmul.f32 1.0, %v5808
  %v5810 = vrcp.pop %v5788
  %v5811 = vmul.f32 1.0, %v5810
  %v5812 = vrcp.pop %v5789
  %v5813 = vmul.f32 1.0, %v5812
  %v5814 = vrcp.pop %v5790
  %v5815 = vmul.f32 1.0, %v5814
  %v5816 = vrcp.pop %v5791
  %v5817 = vmul.f32 1.0, %v5816
  %v5818 = vrcp.pop %v5792
  %v5819 = vmul.f32 1.0, %v5818
  %v5820 = vrcp.pop %v5793
  %v5821 = vmul.f32 1.0, %v5820
  %v5822 = vrcp.pop %v5794
  %v5823 = vmul.f32 1.0, %v5822
  %v5824 = vrcp.pop %v5795
  %v5825 = vmul.f32 1.0, %v5824
  %v5826 = vrcp.pop %v5796
  %v5827 = vmul.f32 1.0, %v5826
  %v5828 = vrcp.pop %v5797
  %v5829 = vmul.f32 1.0, %v5828
  %v5846 = vrot.slane %v5718, 3
  %v5847 = vrot.slane %v5719, 3
  %v5848 = vrot.slane %v5720, 3
  %v5849 = vrot.slane %v5721, 3
  %v5850 = vrot.slane %v5722, 3
  %v5851 = vrot.slane %v5723, 3
  %v5852 = vrot.slane %v5724, 3
  %v5853 = vrot.slane %v5725, 3
  %v5854 = vrot.slane %v5726, 3
  %v5855 = vrot.slane %v5727, 3
  %v5856 = vrot.slane %v5728, 3
  %v5857 = vrot.slane %v5729, 3
  %v5858 = vrot.slane %v5730, 3
  %v5859 = vrot.slane %v5731, 3
  %v5860 = vrot.slane %v5732, 3
  %v5861 = vrot.slane %v5733, 3
  %v5878 = vtanh.pop %v5846
  %v5879 = vtanh.pop %v5847
  %v5880 = vtanh.pop %v5848
  %v5881 = vtanh.pop %v5849
  %v5882 = vtanh.pop %v5850
  %v5883 = vtanh.pop %v5851
  %v5884 = vtanh.pop %v5852
  %v5885 = vtanh.pop %v5853
  %v5886 = vtanh.pop %v5854
  %v5887 = vtanh.pop %v5855
  %v5888 = vtanh.pop %v5856
  %v5889 = vtanh.pop %v5857
  %v5890 = vtanh.pop %v5858
  %v5891 = vtanh.pop %v5859
  %v5892 = vtanh.pop %v5860
  %v5893 = vtanh.pop %v5861
  %v5910 = vrot.slane %v5799, 1
  %v5911 = vrot.slane %v5801, 1
  %v5912 = vrot.slane %v5803, 1
  %v5913 = vrot.slane %v5805, 1
  %v5914 = vrot.slane %v5807, 1
  %v5915 = vrot.slane %v5809, 1
  %v5916 = vrot.slane %v5811, 1
  %v5917 = vrot.slane %v5813, 1
  %v5918 = vrot.slane %v5815, 1
  %v5919 = vrot.slane %v5817, 1
  %v5920 = vrot.slane %v5819, 1
  %v5921 = vrot.slane %v5821, 1
  %v5922 = vrot.slane %v5823, 1
  %v5923 = vrot.slane %v5825, 1
  %v5924 = vrot.slane %v5827, 1
  %v5925 = vrot.slane %v5829, 1
  %v5942 = vmul.f32 %v5910, %v5176
  %v5943 = vmul.f32 %v5911, %v5177
  %v5944 = vmul.f32 %v5912, %v5178
  %v5945 = vmul.f32 %v5913, %v5179
  %v5946 = vmul.f32 %v5914, %v5180
  %v5947 = vmul.f32 %v5915, %v5181
  %v5948 = vmul.f32 %v5916, %v5182
  %v5949 = vmul.f32 %v5917, %v5183
  %v5950 = vmul.f32 %v5918, %v5184
  %v5951 = vmul.f32 %v5919, %v5185
  %v5952 = vmul.f32 %v5920, %v5186
  %v5953 = vmul.f32 %v5921, %v5187
  %v5954 = vmul.f32 %v5922, %v5188
  %v5955 = vmul.f32 %v5923, %v5189
  %v5956 = vmul.f32 %v5924, %v5190
  %v5957 = vmul.f32 %v5925, %v5191
  %v5958 = vmul.f32 %v5799, %v5878
  %v5959 = vmul.f32 %v5801, %v5879
  %v5960 = vmul.f32 %v5803, %v5880
  %v5961 = vmul.f32 %v5805, %v5881
  %v5962 = vmul.f32 %v5807, %v5882
  %v5963 = vmul.f32 %v5809, %v5883
  %v5964 = vmul.f32 %v5811, %v5884
  %v5965 = vmul.f32 %v5813, %v5885
  %v5966 = vmul.f32 %v5815, %v5886
  %v5967 = vmul.f32 %v5817, %v5887
  %v5968 = vmul.f32 %v5819, %v5888
  %v5969 = vmul.f32 %v5821, %v5889
  %v5970 = vmul.f32 %v5823, %v5890
  %v5971 = vmul.f32 %v5825, %v5891
  %v5972 = vmul.f32 %v5827, %v5892
  %v5973 = vmul.f32 %v5829, %v5893
  %v5974 = vadd.f32 %v5942, %v5958
  %v5975 = vadd.f32 %v5943, %v5959
  %v5976 = vadd.f32 %v5944, %v5960
  %v5977 = vadd.f32 %v5945, %v5961
  %v5978 = vadd.f32 %v5946, %v5962
  %v5979 = vadd.f32 %v5947, %v5963
  %v5980 = vadd.f32 %v5948, %v5964
  %v5981 = vadd.f32 %v5949, %v5965
  %v5982 = vadd.f32 %v5950, %v5966
  %v5983 = vadd.f32 %v5951, %v5967
  %v5984 = vadd.f32 %v5952, %v5968
  %v5985 = vadd.f32 %v5953, %v5969
  %v5986 = vadd.f32 %v5954, %v5970
  %v5987 = vadd.f32 %v5955, %v5971
  %v5988 = vadd.f32 %v5956, %v5972
  %v5989 = vadd.f32 %v5957, %v5973
  %v5990 = vtanh.pop %v5974
  %v5991 = vtanh.pop %v5975
  %v5992 = vtanh.pop %v5976
  %v5993 = vtanh.pop %v5977
  %v5994 = vtanh.pop %v5978
  %v5995 = vtanh.pop %v5979
  %v5996 = vtanh.pop %v5980
  %v5997 = vtanh.pop %v5981
  %v5998 = vtanh.pop %v5982
  %v5999 = vtanh.pop %v5983
  %v6000 = vtanh.pop %v5984
  %v6001 = vtanh.pop %v5985
  %v6002 = vtanh.pop %v5986
  %v6003 = vtanh.pop %v5987
  %v6004 = vtanh.pop %v5988
  %v6005 = vtanh.pop %v5989
  %v6006 = vrot.slane %v5799, 2
  %v6007 = vrot.slane %v5801, 2
  %v6008 = vrot.slane %v5803, 2
  %v6009 = vrot.slane %v5805, 2
  %v6010 = vrot.slane %v5807, 2
  %v6011 = vrot.slane %v5809, 2
  %v6012 = vrot.slane %v5811, 2
  %v6013 = vrot.slane %v5813, 2
  %v6014 = vrot.slane %v5815, 2
  %v6015 = vrot.slane %v5817, 2
  %v6016 = vrot.slane %v5819, 2
  %v6017 = vrot.slane %v5821, 2
  %v6018 = vrot.slane %v5823, 2
  %v6019 = vrot.slane %v5825, 2
  %v6020 = vrot.slane %v5827, 2
  %v6021 = vrot.slane %v5829, 2
  %v6038 = vmul.f32 %v6006, %v5990
  %v6039 = vmul.f32 %v6007, %v5991
  %v6040 = vmul.f32 %v6008, %v5992
  %v6041 = vmul.f32 %v6009, %v5993
  %v6042 = vmul.f32 %v6010, %v5994
  %v6043 = vmul.f32 %v6011, %v5995
  %v6044 = vmul.f32 %v6012, %v5996
  %v6045 = vmul.f32 %v6013, %v5997
  %v6046 = vmul.f32 %v6014, %v5998
  %v6047 = vmul.f32 %v6015, %v5999
  %v6048 = vmul.f32 %v6016, %v6000
  %v6049 = vmul.f32 %v6017, %v6001
  %v6050 = vmul.f32 %v6018, %v6002
  %v6051 = vmul.f32 %v6019, %v6003
  %v6052 = vmul.f32 %v6020, %v6004
  %v6053 = vmul.f32 %v6021, %v6005
  %s6054 = scalar_lea.vmem [#allocation2], 7
  %v6055 = vld [vmem:[%s6054] ss:$8 sm:$0xf]
  %s6056 = scalar_lea.vmem [#allocation2], 39
  %v6057 = vld [vmem:[%s6056] ss:$8 sm:$0xf]
  %s6058 = scalar_lea.vmem [#allocation2], 71
  %v6059 = vld [vmem:[%s6058] ss:$8 sm:$0xf]
  %s6060 = scalar_lea.vmem [#allocation2], 103
  %v6061 = vld [vmem:[%s6060] ss:$8 sm:$0xf]
  %s6062 = scalar_lea.vmem [#allocation2], 135
  %v6063 = vld [vmem:[%s6062] ss:$8 sm:$0xf]
  %s6064 = scalar_lea.vmem [#allocation2], 167
  %v6065 = vld [vmem:[%s6064] ss:$8 sm:$0xf]
  %s6066 = scalar_lea.vmem [#allocation2], 199
  %v6067 = vld [vmem:[%s6066] ss:$8 sm:$0xf]
  %s6068 = scalar_lea.vmem [#allocation2], 231
  %v6069 = vld [vmem:[%s6068] ss:$8 sm:$0xf]
  %s6070 = scalar_lea.vmem [#allocation2], 263
  %v6071 = vld [vmem:[%s6070] ss:$8 sm:$0xf]
  %s6072 = scalar_lea.vmem [#allocation2], 295
  %v6073 = vld [vmem:[%s6072] ss:$8 sm:$0xf]
  %s6074 = scalar_lea.vmem [#allocation2], 327
  %v6075 = vld [vmem:[%s6074] ss:$8 sm:$0xf]
  %s6076 = scalar_lea.vmem [#allocation2], 359
  %v6077 = vld [vmem:[%s6076] ss:$8 sm:$0xf]
  %s6078 = scalar_lea.vmem [#allocation2], 391
  %v6079 = vld [vmem:[%s6078] ss:$8 sm:$0xf]
  %s6080 = scalar_lea.vmem [#allocation2], 423
  %v6081 = vld [vmem:[%s6080] ss:$8 sm:$0xf]
  %s6082 = scalar_lea.vmem [#allocation2], 455
  %v6083 = vld [vmem:[%s6082] ss:$8 sm:$0xf]
  %s6084 = scalar_lea.vmem [#allocation2], 487
  %v6085 = vld [vmem:[%s6084] ss:$8 sm:$0xf]
  %v6102 = vcombine.low %v6038, %v6039
  %v6103 = vcombine.low %v6040, %v6041
  %v6104 = vcombine.low %v6042, %v6043
  %v6105 = vcombine.low %v6044, %v6045
  %v6107 = vunpack.c.l.s4 1966171168
  %v6108 = vunpack.c.0.s8 %v6107
  %v6109 = vlaneseq
  %v6110 = vshrl.u32 %v6109, 7
  %v6111 = vsub.s32 %v6108, %v6110
  %v6112 = vrot.slane %v6102, %v6111
  %v6114 = vunpack.c.l.s4 1966171168
  %v6115 = vunpack.c.0.s8 %v6114
  %v6116 = vlaneseq
  %v6117 = vshrl.u32 %v6116, 7
  %v6118 = vsub.s32 %v6115, %v6117
  %v6119 = vrot.slane %v6103, %v6118
  %v6121 = vunpack.c.l.s4 1966171168
  %v6122 = vunpack.c.0.s8 %v6121
  %v6123 = vlaneseq
  %v6124 = vshrl.u32 %v6123, 7
  %v6125 = vsub.s32 %v6122, %v6124
  %v6126 = vrot.slane %v6104, %v6125
  %v6128 = vunpack.c.l.s4 1966171168
  %v6129 = vunpack.c.0.s8 %v6128
  %v6130 = vlaneseq
  %v6131 = vshrl.u32 %v6130, 7
  %v6132 = vsub.s32 %v6129, %v6131
  %v6133 = vrot.slane %v6105, %v6132
  %v6134 = vcombine.low %v6112, %v6119
  %v6135 = vcombine.low %v6126, %v6133
  %v6137 = vunpack.c.l.s4 1966171168
  %v6138 = vunpack.c.0.s8 %v6137
  %v6139 = vlaneseq
  %v6140 = vshrl.u32 %v6139, 7
  %v6141 = vsub.s32 %v6138, %v6140
  %v6142 = vrot.slane %v6134, %v6141
  %v6144 = vunpack.c.l.s4 1966171168
  %v6145 = vunpack.c.0.s8 %v6144
  %v6146 = vlaneseq
  %v6147 = vshrl.u32 %v6146, 7
  %v6148 = vsub.s32 %v6145, %v6147
  %v6149 = vrot.slane %v6135, %v6148
  %v6150 = vcombine.low %v6142, %v6149
  %v6151 = vcombine.low %v6046, %v6047
  %v6152 = vcombine.low %v6048, %v6049
  %v6153 = vcombine.low %v6050, %v6051
  %v6154 = vcombine.low %v6052, %v6053
  %v6156 = vunpack.c.l.s4 1966171168
  %v6157 = vunpack.c.0.s8 %v6156
  %v6158 = vlaneseq
  %v6159 = vshrl.u32 %v6158, 7
  %v6160 = vsub.s32 %v6157, %v6159
  %v6161 = vrot.slane %v6151, %v6160
  %v6163 = vunpack.c.l.s4 1966171168
  %v6164 = vunpack.c.0.s8 %v6163
  %v6165 = vlaneseq
  %v6166 = vshrl.u32 %v6165, 7
  %v6167 = vsub.s32 %v6164, %v6166
  %v6168 = vrot.slane %v6152, %v6167
  %v6170 = vunpack.c.l.s4 1966171168
  %v6171 = vunpack.c.0.s8 %v6170
  %v6172 = vlaneseq
  %v6173 = vshrl.u32 %v6172, 7
  %v6174 = vsub.s32 %v6171, %v6173
  %v6175 = vrot.slane %v6153, %v6174
  %v6177 = vunpack.c.l.s4 1966171168
  %v6178 = vunpack.c.0.s8 %v6177
  %v6179 = vlaneseq
  %v6180 = vshrl.u32 %v6179, 7
  %v6181 = vsub.s32 %v6178, %v6180
  %v6182 = vrot.slane %v6154, %v6181
  %v6183 = vcombine.low %v6161, %v6168
  %v6184 = vcombine.low %v6175, %v6182
  %v6186 = vunpack.c.l.s4 1966171168
  %v6187 = vunpack.c.0.s8 %v6186
  %v6188 = vlaneseq
  %v6189 = vshrl.u32 %v6188, 7
  %v6190 = vsub.s32 %v6187, %v6189
  %v6191 = vrot.slane %v6183, %v6190
  %v6193 = vunpack.c.l.s4 1966171168
  %v6194 = vunpack.c.0.s8 %v6193
  %v6195 = vlaneseq
  %v6196 = vshrl.u32 %v6195, 7
  %v6197 = vsub.s32 %v6194, %v6196
  %v6198 = vrot.slane %v6184, %v6197
  %v6199 = vcombine.low %v6191, %v6198
  %6202 = vmatprep.subr.mxu0 %v613
  %6203 = vmatpush1.msra.mxu0 %v612
  %6204 = vmatprep.subr.mxu0 %v609
  %6205 = vmatpush1.msra.mxu0 %v608
  %6206 = vmatprep.subr.mxu0 %v605
  %6207 = vmatpush1.msra.mxu0 %v604
  %6208 = vmatprep.subr.mxu0 %v601
  %6209 = vmatpush1.msra.mxu0 %v600
  %6210 = vmatprep.subr.mxu0 %v597
  %6211 = vmatpush1.msra.mxu0 %v596
  %6212 = vmatprep.subr.mxu0 %v593
  %6213 = vmatpush1.msra.mxu0 %v592
  %6214 = vmatprep.subr.mxu0 %v589
  %6215 = vmatpush1.msra.mxu0 %v588
  %6216 = vmatprep.subr.mxu0 %v585
  %6217 = vmatpush1.msra.mxu0 %v584
  %6218 = vmatprep.subr.mxu0 %v581
  %6219 = vmatpush1.msra.mxu0 %v580
  %6220 = vmatprep.subr.mxu0 %v577
  %6221 = vmatpush1.msra.mxu0 %v576
  %6222 = vmatprep.subr.mxu0 %v573
  %6223 = vmatpush1.msra.mxu0 %v572
  %6224 = vmatprep.subr.mxu0 %v569
  %6225 = vmatpush1.msra.mxu0 %v568
  %6226 = vmatprep.subr.mxu0 %v565
  %6227 = vmatpush1.msra.mxu0 %v564
  %6228 = vmatprep.subr.mxu0 %v561
  %6229 = vmatpush1.msra.mxu0 %v560
  %6230 = vmatprep.subr.mxu0 %v557
  %6231 = vmatpush1.msra.mxu0 %v556
  %6232 = vmatprep.subr.mxu0 %v553
  %6233 = vmatpush1.msra.mxu0 %v552
  %6234 = vmatprep.subr.mxu0 0.0
  %6235 = vmatpush2.msra.mxu0 0.0
  %6236 = vmatprep.subr.mxu0 0.0
  %6237 = vmatpush2.msra.mxu0 0.0
  %6238 = vmatprep.subr.mxu0 0.0
  %6239 = vmatpush2.msra.mxu0 0.0
  %6240 = vmatprep.subr.mxu0 0.0
  %6241 = vmatpush2.msra.mxu0 0.0
  %6242 = vmatprep.subr.mxu0 0.0
  %6243 = vmatpush2.msra.mxu0 0.0
  %6244 = vmatprep.subr.mxu0 0.0
  %6245 = vmatpush2.msra.mxu0 0.0
  %6246 = vmatprep.subr.mxu0 0.0
  %6247 = vmatpush2.msra.mxu0 0.0
  %6248 = vmatprep.subr.mxu0 0.0
  %6249 = vmatpush2.msra.mxu0 0.0
  %6250 = vmatprep.subr.mxu0 0.0
  %6251 = vmatpush2.msra.mxu0 0.0
  %6252 = vmatprep.subr.mxu0 0.0
  %6253 = vmatpush2.msra.mxu0 0.0
  %6254 = vmatprep.subr.mxu0 0.0
  %6255 = vmatpush2.msra.mxu0 0.0
  %6256 = vmatprep.subr.mxu0 0.0
  %6257 = vmatpush2.msra.mxu0 0.0
  %6258 = vmatprep.subr.mxu0 0.0
  %6259 = vmatpush2.msra.mxu0 0.0
  %6260 = vmatprep.subr.mxu0 0.0
  %6261 = vmatpush2.msra.mxu0 0.0
  %6262 = vmatprep.subr.mxu0 0.0
  %6263 = vmatpush2.msra.mxu0 0.0
  %6264 = vmatprep.subr.mxu0 0.0
  %6265 = vmatpush2.msra.mxu0 0.0
  %6266 = vmatprep.mubr.f32.mxu0 0.0
  %6267 = vmatmul.mubr.f32.gmra.mxu0 %v6150
  %v6268 = vpop.f32.mrf.mxu0
  %v6269 = vadd.f32 0.0, %v6268
  %v6270 = vpop.f32.mrf.mxu0
  %v6271 = vadd.f32 0.0, %v6270
  %6272 = vmatprep.mubr.f32.mxu0 0.0
  %6273 = vmatmul.mubr.f32.gmra.mxu0 %v6199
  %v6274 = vpop.f32.mrf.mxu0
  %v6275 = vadd.f32 0.0, %v6274
  %v6276 = vpop.f32.mrf.mxu0
  %v6277 = vadd.f32 0.0, %v6276
  %6278 = vdwg.mxu0
  %6279 = vmatprep.subr.mxu0 %v615
  %6280 = vmatpush1.msra.mxu0 %v614
  %6281 = vmatprep.subr.mxu0 %v611
  %6282 = vmatpush1.msra.mxu0 %v610
  %6283 = vmatprep.subr.mxu0 %v607
  %6284 = vmatpush1.msra.mxu0 %v606
  %6285 = vmatprep.subr.mxu0 %v603
  %6286 = vmatpush1.msra.mxu0 %v602
  %6287 = vmatprep.subr.mxu0 %v599
  %6288 = vmatpush1.msra.mxu0 %v598
  %6289 = vmatprep.subr.mxu0 %v595
  %6290 = vmatpush1.msra.mxu0 %v594
  %6291 = vmatprep.subr.mxu0 %v591
  %6292 = vmatpush1.msra.mxu0 %v590
  %6293 = vmatprep.subr.mxu0 %v587
  %6294 = vmatpush1.msra.mxu0 %v586
  %6295 = vmatprep.subr.mxu0 %v583
  %6296 = vmatpush1.msra.mxu0 %v582
  %6297 = vmatprep.subr.mxu0 %v579
  %6298 = vmatpush1.msra.mxu0 %v578
  %6299 = vmatprep.subr.mxu0 %v575
  %6300 = vmatpush1.msra.mxu0 %v574
  %6301 = vmatprep.subr.mxu0 %v571
  %6302 = vmatpush1.msra.mxu0 %v570
  %6303 = vmatprep.subr.mxu0 %v567
  %6304 = vmatpush1.msra.mxu0 %v566
  %6305 = vmatprep.subr.mxu0 %v563
  %6306 = vmatpush1.msra.mxu0 %v562
  %6307 = vmatprep.subr.mxu0 %v559
  %6308 = vmatpush1.msra.mxu0 %v558
  %6309 = vmatprep.subr.mxu0 %v555
  %6310 = vmatpush1.msra.mxu0 %v554
  %6311 = vmatprep.subr.mxu0 0.0
  %6312 = vmatpush2.msra.mxu0 0.0
  %6313 = vmatprep.subr.mxu0 0.0
  %6314 = vmatpush2.msra.mxu0 0.0
  %6315 = vmatprep.subr.mxu0 0.0
  %6316 = vmatpush2.msra.mxu0 0.0
  %6317 = vmatprep.subr.mxu0 0.0
  %6318 = vmatpush2.msra.mxu0 0.0
  %6319 = vmatprep.subr.mxu0 0.0
  %6320 = vmatpush2.msra.mxu0 0.0
  %6321 = vmatprep.subr.mxu0 0.0
  %6322 = vmatpush2.msra.mxu0 0.0
  %6323 = vmatprep.subr.mxu0 0.0
  %6324 = vmatpush2.msra.mxu0 0.0
  %6325 = vmatprep.subr.mxu0 0.0
  %6326 = vmatpush2.msra.mxu0 0.0
  %6327 = vmatprep.subr.mxu0 0.0
  %6328 = vmatpush2.msra.mxu0 0.0
  %6329 = vmatprep.subr.mxu0 0.0
  %6330 = vmatpush2.msra.mxu0 0.0
  %6331 = vmatprep.subr.mxu0 0.0
  %6332 = vmatpush2.msra.mxu0 0.0
  %6333 = vmatprep.subr.mxu0 0.0
  %6334 = vmatpush2.msra.mxu0 0.0
  %6335 = vmatprep.subr.mxu0 0.0
  %6336 = vmatpush2.msra.mxu0 0.0
  %6337 = vmatprep.subr.mxu0 0.0
  %6338 = vmatpush2.msra.mxu0 0.0
  %6339 = vmatprep.subr.mxu0 0.0
  %6340 = vmatpush2.msra.mxu0 0.0
  %6341 = vmatprep.subr.mxu0 0.0
  %6342 = vmatpush2.msra.mxu0 0.0
  %6343 = vmatprep.mubr.f32.mxu0 0.0
  %6344 = vmatmul.mubr.f32.gmra.mxu0 %v6150
  %v6345 = vpop.f32.mrf.mxu0
  %v6346 = vadd.f32 0.0, %v6345
  %v6347 = vpop.f32.mrf.mxu0
  %v6348 = vadd.f32 0.0, %v6347
  %6349 = vmatprep.mubr.f32.mxu0 0.0
  %6350 = vmatmul.mubr.f32.gmra.mxu0 %v6199
  %v6351 = vpop.f32.mrf.mxu0
  %v6352 = vadd.f32 0.0, %v6351
  %v6353 = vpop.f32.mrf.mxu0
  %v6354 = vadd.f32 0.0, %v6353
  %6355 = vdwg.mxu0
  %v6364 = vcombine.low %v6269, %v6271
  %v6365 = vcombine.high %v6269, %v6271
  %v6366 = vcombine.low %v6346, %v6348
  %v6367 = vcombine.high %v6346, %v6348
  %v6369 = vunpack.c.l.s4 1966171168
  %v6370 = vunpack.c.0.s8 %v6369
  %v6371 = vlaneseq
  %v6372 = vshrl.u32 %v6371, 7
  %v6373 = vsub.s32 %v6370, %v6372
  %v6374 = vrot.slane %v6364, %v6373
  %v6376 = vunpack.c.l.s4 1966171168
  %v6377 = vunpack.c.0.s8 %v6376
  %v6378 = vlaneseq
  %v6379 = vshrl.u32 %v6378, 7
  %v6380 = vsub.s32 %v6377, %v6379
  %v6381 = vrot.slane %v6365, %v6380
  %v6383 = vunpack.c.l.s4 1966171168
  %v6384 = vunpack.c.0.s8 %v6383
  %v6385 = vlaneseq
  %v6386 = vshrl.u32 %v6385, 7
  %v6387 = vsub.s32 %v6384, %v6386
  %v6388 = vrot.slane %v6366, %v6387
  %v6390 = vunpack.c.l.s4 1966171168
  %v6391 = vunpack.c.0.s8 %v6390
  %v6392 = vlaneseq
  %v6393 = vshrl.u32 %v6392, 7
  %v6394 = vsub.s32 %v6391, %v6393
  %v6395 = vrot.slane %v6367, %v6394
  %v6396 = vcombine.low %v6374, %v6388
  %v6397 = vcombine.high %v6374, %v6388
  %v6398 = vcombine.low %v6381, %v6395
  %v6399 = vcombine.high %v6381, %v6395
  %v6401 = vunpack.c.l.s4 1966171168
  %v6402 = vunpack.c.0.s8 %v6401
  %v6403 = vlaneseq
  %v6404 = vshrl.u32 %v6403, 7
  %v6405 = vsub.s32 %v6402, %v6404
  %v6406 = vrot.slane %v6396, %v6405
  %v6408 = vunpack.c.l.s4 1966171168
  %v6409 = vunpack.c.0.s8 %v6408
  %v6410 = vlaneseq
  %v6411 = vshrl.u32 %v6410, 7
  %v6412 = vsub.s32 %v6409, %v6411
  %v6413 = vrot.slane %v6398, %v6412
  %v6415 = vunpack.c.l.s4 1966171168
  %v6416 = vunpack.c.0.s8 %v6415
  %v6417 = vlaneseq
  %v6418 = vshrl.u32 %v6417, 7
  %v6419 = vsub.s32 %v6416, %v6418
  %v6420 = vrot.slane %v6397, %v6419
  %v6422 = vunpack.c.l.s4 1966171168
  %v6423 = vunpack.c.0.s8 %v6422
  %v6424 = vlaneseq
  %v6425 = vshrl.u32 %v6424, 7
  %v6426 = vsub.s32 %v6423, %v6425
  %v6427 = vrot.slane %v6399, %v6426
  %v6428 = vcombine.high %v6406, %v6406
  %v6429 = vcombine.high %v6413, %v6413
  %v6430 = vcombine.high %v6420, %v6420
  %v6431 = vcombine.high %v6427, %v6427
  %v6432 = vcombine.low %v6275, %v6277
  %v6433 = vcombine.high %v6275, %v6277
  %v6434 = vcombine.low %v6352, %v6354
  %v6435 = vcombine.high %v6352, %v6354
  %v6437 = vunpack.c.l.s4 1966171168
  %v6438 = vunpack.c.0.s8 %v6437
  %v6439 = vlaneseq
  %v6440 = vshrl.u32 %v6439, 7
  %v6441 = vsub.s32 %v6438, %v6440
  %v6442 = vrot.slane %v6432, %v6441
  %v6444 = vunpack.c.l.s4 1966171168
  %v6445 = vunpack.c.0.s8 %v6444
  %v6446 = vlaneseq
  %v6447 = vshrl.u32 %v6446, 7
  %v6448 = vsub.s32 %v6445, %v6447
  %v6449 = vrot.slane %v6433, %v6448
  %v6451 = vunpack.c.l.s4 1966171168
  %v6452 = vunpack.c.0.s8 %v6451
  %v6453 = vlaneseq
  %v6454 = vshrl.u32 %v6453, 7
  %v6455 = vsub.s32 %v6452, %v6454
  %v6456 = vrot.slane %v6434, %v6455
  %v6458 = vunpack.c.l.s4 1966171168
  %v6459 = vunpack.c.0.s8 %v6458
  %v6460 = vlaneseq
  %v6461 = vshrl.u32 %v6460, 7
  %v6462 = vsub.s32 %v6459, %v6461
  %v6463 = vrot.slane %v6435, %v6462
  %v6464 = vcombine.low %v6442, %v6456
  %v6465 = vcombine.high %v6442, %v6456
  %v6466 = vcombine.low %v6449, %v6463
  %v6467 = vcombine.high %v6449, %v6463
  %v6469 = vunpack.c.l.s4 1966171168
  %v6470 = vunpack.c.0.s8 %v6469
  %v6471 = vlaneseq
  %v6472 = vshrl.u32 %v6471, 7
  %v6473 = vsub.s32 %v6470, %v6472
  %v6474 = vrot.slane %v6464, %v6473
  %v6476 = vunpack.c.l.s4 1966171168
  %v6477 = vunpack.c.0.s8 %v6476
  %v6478 = vlaneseq
  %v6479 = vshrl.u32 %v6478, 7
  %v6480 = vsub.s32 %v6477, %v6479
  %v6481 = vrot.slane %v6466, %v6480
  %v6483 = vunpack.c.l.s4 1966171168
  %v6484 = vunpack.c.0.s8 %v6483
  %v6485 = vlaneseq
  %v6486 = vshrl.u32 %v6485, 7
  %v6487 = vsub.s32 %v6484, %v6486
  %v6488 = vrot.slane %v6465, %v6487
  %v6490 = vunpack.c.l.s4 1966171168
  %v6491 = vunpack.c.0.s8 %v6490
  %v6492 = vlaneseq
  %v6493 = vshrl.u32 %v6492, 7
  %v6494 = vsub.s32 %v6491, %v6493
  %v6495 = vrot.slane %v6467, %v6494
  %v6496 = vcombine.high %v6474, %v6474
  %v6497 = vcombine.high %v6481, %v6481
  %v6498 = vcombine.high %v6488, %v6488
  %v6499 = vcombine.high %v6495, %v6495
  %v6516 = vadd.f32 %v6055, %v6406
  %v6517 = vadd.f32 %v6057, %v6420
  %v6518 = vadd.f32 %v6059, %v6428
  %v6519 = vadd.f32 %v6061, %v6430
  %v6520 = vadd.f32 %v6063, %v6413
  %v6521 = vadd.f32 %v6065, %v6427
  %v6522 = vadd.f32 %v6067, %v6429
  %v6523 = vadd.f32 %v6069, %v6431
  %v6524 = vadd.f32 %v6071, %v6474
  %v6525 = vadd.f32 %v6073, %v6488
  %v6526 = vadd.f32 %v6075, %v6496
  %v6527 = vadd.f32 %v6077, %v6498
  %v6528 = vadd.f32 %v6079, %v6481
  %v6529 = vadd.f32 %v6081, %v6495
  %v6530 = vadd.f32 %v6083, %v6497
  %v6531 = vadd.f32 %v6085, %v6499
  %v6532 = vxor.u32 %v6516, 2147483648
  %v6533 = vxor.u32 %v6517, 2147483648
  %v6534 = vxor.u32 %v6518, 2147483648
  %v6535 = vxor.u32 %v6519, 2147483648
  %v6536 = vxor.u32 %v6520, 2147483648
  %v6537 = vxor.u32 %v6521, 2147483648
  %v6538 = vxor.u32 %v6522, 2147483648
  %v6539 = vxor.u32 %v6523, 2147483648
  %v6540 = vxor.u32 %v6524, 2147483648
  %v6541 = vxor.u32 %v6525, 2147483648
  %v6542 = vxor.u32 %v6526, 2147483648
  %v6543 = vxor.u32 %v6527, 2147483648
  %v6544 = vxor.u32 %v6528, 2147483648
  %v6545 = vxor.u32 %v6529, 2147483648
  %v6546 = vxor.u32 %v6530, 2147483648
  %v6547 = vxor.u32 %v6531, 2147483648
  %v6548 = vmul.f32 %v6532, 1.442695
  %v6549 = vpow.pop %v6548
  %v6550 = vmul.f32 %v6533, 1.442695
  %v6551 = vpow.pop %v6550
  %v6552 = vmul.f32 %v6534, 1.442695
  %v6553 = vpow.pop %v6552
  %v6554 = vmul.f32 %v6535, 1.442695
  %v6555 = vpow.pop %v6554
  %v6556 = vmul.f32 %v6536, 1.442695
  %v6557 = vpow.pop %v6556
  %v6558 = vmul.f32 %v6537, 1.442695
  %v6559 = vpow.pop %v6558
  %v6560 = vmul.f32 %v6538, 1.442695
  %v6561 = vpow.pop %v6560
  %v6562 = vmul.f32 %v6539, 1.442695
  %v6563 = vpow.pop %v6562
  %v6564 = vmul.f32 %v6540, 1.442695
  %v6565 = vpow.pop %v6564
  %v6566 = vmul.f32 %v6541, 1.442695
  %v6567 = vpow.pop %v6566
  %v6568 = vmul.f32 %v6542, 1.442695
  %v6569 = vpow.pop %v6568
  %v6570 = vmul.f32 %v6543, 1.442695
  %v6571 = vpow.pop %v6570
  %v6572 = vmul.f32 %v6544, 1.442695
  %v6573 = vpow.pop %v6572
  %v6574 = vmul.f32 %v6545, 1.442695
  %v6575 = vpow.pop %v6574
  %v6576 = vmul.f32 %v6546, 1.442695
  %v6577 = vpow.pop %v6576
  %v6578 = vmul.f32 %v6547, 1.442695
  %v6579 = vpow.pop %v6578
  %v6580 = vadd.f32 %v6549, 1.0
  %v6581 = vadd.f32 %v6551, 1.0
  %v6582 = vadd.f32 %v6553, 1.0
  %v6583 = vadd.f32 %v6555, 1.0
  %v6584 = vadd.f32 %v6557, 1.0
  %v6585 = vadd.f32 %v6559, 1.0
  %v6586 = vadd.f32 %v6561, 1.0
  %v6587 = vadd.f32 %v6563, 1.0
  %v6588 = vadd.f32 %v6565, 1.0
  %v6589 = vadd.f32 %v6567, 1.0
  %v6590 = vadd.f32 %v6569, 1.0
  %v6591 = vadd.f32 %v6571, 1.0
  %v6592 = vadd.f32 %v6573, 1.0
  %v6593 = vadd.f32 %v6575, 1.0
  %v6594 = vadd.f32 %v6577, 1.0
  %v6595 = vadd.f32 %v6579, 1.0
  %v6596 = vrcp.pop %v6580
  %v6597 = vmul.f32 1.0, %v6596
  %v6598 = vrcp.pop %v6581
  %v6599 = vmul.f32 1.0, %v6598
  %v6600 = vrcp.pop %v6582
  %v6601 = vmul.f32 1.0, %v6600
  %v6602 = vrcp.pop %v6583
  %v6603 = vmul.f32 1.0, %v6602
  %v6604 = vrcp.pop %v6584
  %v6605 = vmul.f32 1.0, %v6604
  %v6606 = vrcp.pop %v6585
  %v6607 = vmul.f32 1.0, %v6606
  %v6608 = vrcp.pop %v6586
  %v6609 = vmul.f32 1.0, %v6608
  %v6610 = vrcp.pop %v6587
  %v6611 = vmul.f32 1.0, %v6610
  %v6612 = vrcp.pop %v6588
  %v6613 = vmul.f32 1.0, %v6612
  %v6614 = vrcp.pop %v6589
  %v6615 = vmul.f32 1.0, %v6614
  %v6616 = vrcp.pop %v6590
  %v6617 = vmul.f32 1.0, %v6616
  %v6618 = vrcp.pop %v6591
  %v6619 = vmul.f32 1.0, %v6618
  %v6620 = vrcp.pop %v6592
  %v6621 = vmul.f32 1.0, %v6620
  %v6622 = vrcp.pop %v6593
  %v6623 = vmul.f32 1.0, %v6622
  %v6624 = vrcp.pop %v6594
  %v6625 = vmul.f32 1.0, %v6624
  %v6626 = vrcp.pop %v6595
  %v6627 = vmul.f32 1.0, %v6626
  %v6644 = vrot.slane %v6516, 3
  %v6645 = vrot.slane %v6517, 3
  %v6646 = vrot.slane %v6518, 3
  %v6647 = vrot.slane %v6519, 3
  %v6648 = vrot.slane %v6520, 3
  %v6649 = vrot.slane %v6521, 3
  %v6650 = vrot.slane %v6522, 3
  %v6651 = vrot.slane %v6523, 3
  %v6652 = vrot.slane %v6524, 3
  %v6653 = vrot.slane %v6525, 3
  %v6654 = vrot.slane %v6526, 3
  %v6655 = vrot.slane %v6527, 3
  %v6656 = vrot.slane %v6528, 3
  %v6657 = vrot.slane %v6529, 3
  %v6658 = vrot.slane %v6530, 3
  %v6659 = vrot.slane %v6531, 3
  %v6676 = vtanh.pop %v6644
  %v6677 = vtanh.pop %v6645
  %v6678 = vtanh.pop %v6646
  %v6679 = vtanh.pop %v6647
  %v6680 = vtanh.pop %v6648
  %v6681 = vtanh.pop %v6649
  %v6682 = vtanh.pop %v6650
  %v6683 = vtanh.pop %v6651
  %v6684 = vtanh.pop %v6652
  %v6685 = vtanh.pop %v6653
  %v6686 = vtanh.pop %v6654
  %v6687 = vtanh.pop %v6655
  %v6688 = vtanh.pop %v6656
  %v6689 = vtanh.pop %v6657
  %v6690 = vtanh.pop %v6658
  %v6691 = vtanh.pop %v6659
  %v6708 = vrot.slane %v6597, 1
  %v6709 = vrot.slane %v6599, 1
  %v6710 = vrot.slane %v6601, 1
  %v6711 = vrot.slane %v6603, 1
  %v6712 = vrot.slane %v6605, 1
  %v6713 = vrot.slane %v6607, 1
  %v6714 = vrot.slane %v6609, 1
  %v6715 = vrot.slane %v6611, 1
  %v6716 = vrot.slane %v6613, 1
  %v6717 = vrot.slane %v6615, 1
  %v6718 = vrot.slane %v6617, 1
  %v6719 = vrot.slane %v6619, 1
  %v6720 = vrot.slane %v6621, 1
  %v6721 = vrot.slane %v6623, 1
  %v6722 = vrot.slane %v6625, 1
  %v6723 = vrot.slane %v6627, 1
  %v6740 = vmul.f32 %v6708, %v5974
  %v6741 = vmul.f32 %v6709, %v5975
  %v6742 = vmul.f32 %v6710, %v5976
  %v6743 = vmul.f32 %v6711, %v5977
  %v6744 = vmul.f32 %v6712, %v5978
  %v6745 = vmul.f32 %v6713, %v5979
  %v6746 = vmul.f32 %v6714, %v5980
  %v6747 = vmul.f32 %v6715, %v5981
  %v6748 = vmul.f32 %v6716, %v5982
  %v6749 = vmul.f32 %v6717, %v5983
  %v6750 = vmul.f32 %v6718, %v5984
  %v6751 = vmul.f32 %v6719, %v5985
  %v6752 = vmul.f32 %v6720, %v5986
  %v6753 = vmul.f32 %v6721, %v5987
  %v6754 = vmul.f32 %v6722, %v5988
  %v6755 = vmul.f32 %v6723, %v5989
  %v6756 = vmul.f32 %v6597, %v6676
  %v6757 = vmul.f32 %v6599, %v6677
  %v6758 = vmul.f32 %v6601, %v6678
  %v6759 = vmul.f32 %v6603, %v6679
  %v6760 = vmul.f32 %v6605, %v6680
  %v6761 = vmul.f32 %v6607, %v6681
  %v6762 = vmul.f32 %v6609, %v6682
  %v6763 = vmul.f32 %v6611, %v6683
  %v6764 = vmul.f32 %v6613, %v6684
  %v6765 = vmul.f32 %v6615, %v6685
  %v6766 = vmul.f32 %v6617, %v6686
  %v6767 = vmul.f32 %v6619, %v6687
  %v6768 = vmul.f32 %v6621, %v6688
  %v6769 = vmul.f32 %v6623, %v6689
  %v6770 = vmul.f32 %v6625, %v6690
  %v6771 = vmul.f32 %v6627, %v6691
  %v6772 = vadd.f32 %v6740, %v6756
  %v6773 = vadd.f32 %v6741, %v6757
  %v6774 = vadd.f32 %v6742, %v6758
  %v6775 = vadd.f32 %v6743, %v6759
  %v6776 = vadd.f32 %v6744, %v6760
  %v6777 = vadd.f32 %v6745, %v6761
  %v6778 = vadd.f32 %v6746, %v6762
  %v6779 = vadd.f32 %v6747, %v6763
  %v6780 = vadd.f32 %v6748, %v6764
  %v6781 = vadd.f32 %v6749, %v6765
  %v6782 = vadd.f32 %v6750, %v6766
  %v6783 = vadd.f32 %v6751, %v6767
  %v6784 = vadd.f32 %v6752, %v6768
  %v6785 = vadd.f32 %v6753, %v6769
  %v6786 = vadd.f32 %v6754, %v6770
  %v6787 = vadd.f32 %v6755, %v6771
  %v6788 = vtanh.pop %v6772
  %v6789 = vtanh.pop %v6773
  %v6790 = vtanh.pop %v6774
  %v6791 = vtanh.pop %v6775
  %v6792 = vtanh.pop %v6776
  %v6793 = vtanh.pop %v6777
  %v6794 = vtanh.pop %v6778
  %v6795 = vtanh.pop %v6779
  %v6796 = vtanh.pop %v6780
  %v6797 = vtanh.pop %v6781
  %v6798 = vtanh.pop %v6782
  %v6799 = vtanh.pop %v6783
  %v6800 = vtanh.pop %v6784
  %v6801 = vtanh.pop %v6785
  %v6802 = vtanh.pop %v6786
  %v6803 = vtanh.pop %v6787
  %v6804 = vrot.slane %v6597, 2
  %v6805 = vrot.slane %v6599, 2
  %v6806 = vrot.slane %v6601, 2
  %v6807 = vrot.slane %v6603, 2
  %v6808 = vrot.slane %v6605, 2
  %v6809 = vrot.slane %v6607, 2
  %v6810 = vrot.slane %v6609, 2
  %v6811 = vrot.slane %v6611, 2
  %v6812 = vrot.slane %v6613, 2
  %v6813 = vrot.slane %v6615, 2
  %v6814 = vrot.slane %v6617, 2
  %v6815 = vrot.slane %v6619, 2
  %v6816 = vrot.slane %v6621, 2
  %v6817 = vrot.slane %v6623, 2
  %v6818 = vrot.slane %v6625, 2
  %v6819 = vrot.slane %v6627, 2
  %v6836 = vmul.f32 %v6804, %v6788
  %v6837 = vmul.f32 %v6805, %v6789
  %v6838 = vmul.f32 %v6806, %v6790
  %v6839 = vmul.f32 %v6807, %v6791
  %v6840 = vmul.f32 %v6808, %v6792
  %v6841 = vmul.f32 %v6809, %v6793
  %v6842 = vmul.f32 %v6810, %v6794
  %v6843 = vmul.f32 %v6811, %v6795
  %v6844 = vmul.f32 %v6812, %v6796
  %v6845 = vmul.f32 %v6813, %v6797
  %v6846 = vmul.f32 %v6814, %v6798
  %v6847 = vmul.f32 %v6815, %v6799
  %v6848 = vmul.f32 %v6816, %v6800
  %v6849 = vmul.f32 %v6817, %v6801
  %v6850 = vmul.f32 %v6818, %v6802
  %v6851 = vmul.f32 %v6819, %v6803
  %v6852 = vld [vmem:[%s4] sm:$0xff]
  %v6853 = vld [vmem:[%s4 + $0x8] sm:$0xff]
  %v6854 = vld [vmem:[%s4 + $0x10] sm:$0xff]
  %v6855 = vld [vmem:[%s4 + $0x18] sm:$0xff]
  %v6856 = vld [vmem:[%s4 + $0x20] sm:$0xff]
  %v6857 = vld [vmem:[%s4 + $0x28] sm:$0xff]
  %v6858 = vld [vmem:[%s4 + $0x30] sm:$0xff]
  %v6859 = vld [vmem:[%s4 + $0x38] sm:$0xff]
  %v6860 = vld [vmem:[%s4 + $0x40] sm:$0xff]
  %v6861 = vld [vmem:[%s4 + $0x48] sm:$0xff]
  %v6862 = vld [vmem:[%s4 + $0x50] sm:$0xff]
  %v6863 = vld [vmem:[%s4 + $0x58] sm:$0xff]
  %v6864 = vld [vmem:[%s4 + $0x60] sm:$0xff]
  %v6865 = vld [vmem:[%s4 + $0x68] sm:$0xff]
  %v6866 = vld [vmem:[%s4 + $0x70] sm:$0xff]
  %v6867 = vld [vmem:[%s4 + $0x78] sm:$0xff]
  %v6868 = vld [vmem:[%s5] sm:$0x1]
  %v6870 = vlaneseq
  %v6871 = vshrl.u32 %v6870, 7
  %v6872 = vsub.s32 0, %v6871
  %v6873 = vrot.slane %v6868, %v6872
  %v6891 = vcombine.low %v6836, %v6837
  %v6892 = vcombine.low %v6838, %v6839
  %v6893 = vcombine.low %v6840, %v6841
  %v6894 = vcombine.low %v6842, %v6843
  %v6896 = vunpack.c.l.s4 1966171168
  %v6897 = vunpack.c.0.s8 %v6896
  %v6898 = vlaneseq
  %v6899 = vshrl.u32 %v6898, 7
  %v6900 = vsub.s32 %v6897, %v6899
  %v6901 = vrot.slane %v6891, %v6900
  %v6903 = vunpack.c.l.s4 1966171168
  %v6904 = vunpack.c.0.s8 %v6903
  %v6905 = vlaneseq
  %v6906 = vshrl.u32 %v6905, 7
  %v6907 = vsub.s32 %v6904, %v6906
  %v6908 = vrot.slane %v6892, %v6907
  %v6910 = vunpack.c.l.s4 1966171168
  %v6911 = vunpack.c.0.s8 %v6910
  %v6912 = vlaneseq
  %v6913 = vshrl.u32 %v6912, 7
  %v6914 = vsub.s32 %v6911, %v6913
  %v6915 = vrot.slane %v6893, %v6914
  %v6917 = vunpack.c.l.s4 1966171168
  %v6918 = vunpack.c.0.s8 %v6917
  %v6919 = vlaneseq
  %v6920 = vshrl.u32 %v6919, 7
  %v6921 = vsub.s32 %v6918, %v6920
  %v6922 = vrot.slane %v6894, %v6921
  %v6923 = vcombine.low %v6901, %v6908
  %v6924 = vcombine.low %v6915, %v6922
  %v6926 = vunpack.c.l.s4 1966171168
  %v6927 = vunpack.c.0.s8 %v6926
  %v6928 = vlaneseq
  %v6929 = vshrl.u32 %v6928, 7
  %v6930 = vsub.s32 %v6927, %v6929
  %v6931 = vrot.slane %v6923, %v6930
  %v6933 = vunpack.c.l.s4 1966171168
  %v6934 = vunpack.c.0.s8 %v6933
  %v6935 = vlaneseq
  %v6936 = vshrl.u32 %v6935, 7
  %v6937 = vsub.s32 %v6934, %v6936
  %v6938 = vrot.slane %v6924, %v6937
  %v6939 = vcombine.low %v6931, %v6938
  %v6940 = vcombine.low %v6844, %v6845
  %v6941 = vcombine.low %v6846, %v6847
  %v6942 = vcombine.low %v6848, %v6849
  %v6943 = vcombine.low %v6850, %v6851
  %v6945 = vunpack.c.l.s4 1966171168
  %v6946 = vunpack.c.0.s8 %v6945
  %v6947 = vlaneseq
  %v6948 = vshrl.u32 %v6947, 7
  %v6949 = vsub.s32 %v6946, %v6948
  %v6950 = vrot.slane %v6940, %v6949
  %v6952 = vunpack.c.l.s4 1966171168
  %v6953 = vunpack.c.0.s8 %v6952
  %v6954 = vlaneseq
  %v6955 = vshrl.u32 %v6954, 7
  %v6956 = vsub.s32 %v6953, %v6955
  %v6957 = vrot.slane %v6941, %v6956
  %v6959 = vunpack.c.l.s4 1966171168
  %v6960 = vunpack.c.0.s8 %v6959
  %v6961 = vlaneseq
  %v6962 = vshrl.u32 %v6961, 7
  %v6963 = vsub.s32 %v6960, %v6962
  %v6964 = vrot.slane %v6942, %v6963
  %v6966 = vunpack.c.l.s4 1966171168
  %v6967 = vunpack.c.0.s8 %v6966
  %v6968 = vlaneseq
  %v6969 = vshrl.u32 %v6968, 7
  %v6970 = vsub.s32 %v6967, %v6969
  %v6971 = vrot.slane %v6943, %v6970
  %v6972 = vcombine.low %v6950, %v6957
  %v6973 = vcombine.low %v6964, %v6971
  %v6975 = vunpack.c.l.s4 1966171168
  %v6976 = vunpack.c.0.s8 %v6975
  %v6977 = vlaneseq
  %v6978 = vshrl.u32 %v6977, 7
  %v6979 = vsub.s32 %v6976, %v6978
  %v6980 = vrot.slane %v6972, %v6979
  %v6982 = vunpack.c.l.s4 1966171168
  %v6983 = vunpack.c.0.s8 %v6982
  %v6984 = vlaneseq
  %v6985 = vshrl.u32 %v6984, 7
  %v6986 = vsub.s32 %v6983, %v6985
  %v6987 = vrot.slane %v6973, %v6986
  %v6988 = vcombine.low %v6980, %v6987
  %6991 = vmatprep.subr.mxu0 0.0
  %6992 = vmatpush1.msra.mxu0 %v6867
  %6993 = vmatprep.subr.mxu0 0.0
  %6994 = vmatpush1.msra.mxu0 %v6866
  %6995 = vmatprep.subr.mxu0 0.0
  %6996 = vmatpush1.msra.mxu0 %v6865
  %6997 = vmatprep.subr.mxu0 0.0
  %6998 = vmatpush1.msra.mxu0 %v6864
  %6999 = vmatprep.subr.mxu0 0.0
  %7000 = vmatpush1.msra.mxu0 %v6863
  %7001 = vmatprep.subr.mxu0 0.0
  %7002 = vmatpush1.msra.mxu0 %v6862
  %7003 = vmatprep.subr.mxu0 0.0
  %7004 = vmatpush1.msra.mxu0 %v6861
  %7005 = vmatprep.subr.mxu0 0.0
  %7006 = vmatpush1.msra.mxu0 %v6860
  %7007 = vmatprep.subr.mxu0 0.0
  %7008 = vmatpush1.msra.mxu0 %v6859
  %7009 = vmatprep.subr.mxu0 0.0
  %7010 = vmatpush1.msra.mxu0 %v6858
  %7011 = vmatprep.subr.mxu0 0.0
  %7012 = vmatpush1.msra.mxu0 %v6857
  %7013 = vmatprep.subr.mxu0 0.0
  %7014 = vmatpush1.msra.mxu0 %v6856
  %7015 = vmatprep.subr.mxu0 0.0
  %7016 = vmatpush1.msra.mxu0 %v6855
  %7017 = vmatprep.subr.mxu0 0.0
  %7018 = vmatpush1.msra.mxu0 %v6854
  %7019 = vmatprep.subr.mxu0 0.0
  %7020 = vmatpush1.msra.mxu0 %v6853
  %7021 = vmatprep.subr.mxu0 0.0
  %7022 = vmatpush1.msra.mxu0 %v6852
  %7023 = vmatprep.subr.mxu0 0.0
  %7024 = vmatpush2.msra.mxu0 0.0
  %7025 = vmatprep.subr.mxu0 0.0
  %7026 = vmatpush2.msra.mxu0 0.0
  %7027 = vmatprep.subr.mxu0 0.0
  %7028 = vmatpush2.msra.mxu0 0.0
  %7029 = vmatprep.subr.mxu0 0.0
  %7030 = vmatpush2.msra.mxu0 0.0
  %7031 = vmatprep.subr.mxu0 0.0
  %7032 = vmatpush2.msra.mxu0 0.0
  %7033 = vmatprep.subr.mxu0 0.0
  %7034 = vmatpush2.msra.mxu0 0.0
  %7035 = vmatprep.subr.mxu0 0.0
  %7036 = vmatpush2.msra.mxu0 0.0
  %7037 = vmatprep.subr.mxu0 0.0
  %7038 = vmatpush2.msra.mxu0 0.0
  %7039 = vmatprep.subr.mxu0 0.0
  %7040 = vmatpush2.msra.mxu0 0.0
  %7041 = vmatprep.subr.mxu0 0.0
  %7042 = vmatpush2.msra.mxu0 0.0
  %7043 = vmatprep.subr.mxu0 0.0
  %7044 = vmatpush2.msra.mxu0 0.0
  %7045 = vmatprep.subr.mxu0 0.0
  %7046 = vmatpush2.msra.mxu0 0.0
  %7047 = vmatprep.subr.mxu0 0.0
  %7048 = vmatpush2.msra.mxu0 0.0
  %7049 = vmatprep.subr.mxu0 0.0
  %7050 = vmatpush2.msra.mxu0 0.0
  %7051 = vmatprep.subr.mxu0 0.0
  %7052 = vmatpush2.msra.mxu0 0.0
  %7053 = vmatprep.subr.mxu0 0.0
  %7054 = vmatpush2.msra.mxu0 0.0
  %7055 = vmatprep.mubr.f32.mxu0 0.0
  %7056 = vmatmul.mubr.f32.gmra.mxu0 %v6939
  %v7057 = vpop.f32.mrf.mxu0
  %v7058 = vadd.f32 %v6873, %v7057
  %v7059 = vpop.f32.mrf.mxu0
  %7060 = vmatprep.mubr.f32.mxu0 0.0
  %7061 = vmatmul.mubr.f32.gmra.mxu0 %v6988
  %v7062 = vpop.f32.mrf.mxu0
  %v7063 = vadd.f32 %v6873, %v7062
  %v7064 = vpop.f32.mrf.mxu0
  %7065 = vdwg.mxu0
  %v7066 = vxor.u32 %v7058, 2147483648
  %v7067 = vxor.u32 %v7063, 2147483648
  %v7068 = vmul.f32 %v7066, 1.442695
  %v7069 = vpow.pop %v7068
  %v7070 = vmul.f32 %v7067, 1.442695
  %v7071 = vpow.pop %v7070
  %v7072 = vadd.f32 %v7069, 1.0
  %v7073 = vadd.f32 %v7071, 1.0
  %v7074 = vrcp.pop %v7072
  %v7075 = vmul.f32 1.0, %v7074
  %v7076 = vrcp.pop %v7073
  %v7077 = vmul.f32 1.0, %v7076
  %7078 = vst [vmem:[%s6] sm:$0xff] %v7075
  %7079 = vst [vmem:[%s6 + $0x8] sm:$0xff] %v7077
  // Predicated region
  $region26: #{technical_indicator_lstm.1} parent=0 // pred_check
    _
  $region27: #{technical_indicator_lstm.1} parent=0 // pred_check_branch
    %7081 = sbr.rel (0) target = $region29
  $region28: #{technical_indicator_lstm.1} parent=0 // pred_region
    _
  $region29: #{technical_indicator_lstm.1} parent=0 // pred_fallthru
    _
  // Predicated region
  $region30: #{technical_indicator_lstm.1} parent=0 // pred_check
    _
  $region31: #{technical_indicator_lstm.1} parent=0 // pred_check_branch
    %7083 = sbr.rel (0) target = $region33
  $region32: #{technical_indicator_lstm.1} parent=0 // pred_region
    _
  $region33: #{technical_indicator_lstm.1} parent=0 // pred_fallthru
    _

</llo_original>
